<compile_context>
chip_gen: v6e
topology: v6e:2x2x1
jax: 0.10.0
libtpu: 0.0.40
codegen_flags: <defaults>
</compile_context>

<pallas_src>
import functools
import math

import jax
import jax.numpy as jnp
from jax import lax
from jax.experimental import pallas as pl
from jax.experimental.pallas import tpu as pltpu


# ----------------------------- tile-size selection -----------------------------

def _pick_row_tile(H, W, max_pixels):
    """Largest TH with TH | H, (TH*W) % 128 == 0 and TH*W <= max_pixels (else H)."""
    th0 = 128 // math.gcd(W, 128)         # smallest row count giving lane-aligned tiles
    best = None
    th = th0
    while th <= H and th * W <= max_pixels:
        if H % th == 0:
            best = th
        th += th0
    return best if best is not None else H


def _pick_col_tile(N, max_pixels):
    """Largest TN with TN | N, TN % 128 == 0 and TN <= max_pixels (else N)."""
    best = None
    t = 128
    while t <= N and t <= max_pixels:
        if N % t == 0:
            best = t
        t += 128
    return best if best is not None else N


# ------------- Kernel A: fused pw+dw convs + attention statistics -------------

def _conv_attn_kernel(x_ref, y_ref, qw_ref, kvw_ref, b_ref, dww_ref, dwb_ref,
                      trow_ref, wp_ref,
                      v_ref, m_ref,
                      tprev_ref, carry_ref, s_ref, qn2_ref, kn2_ref,
                      *, W, n_tiles, num_head):
    i = pl.program_id(1)
    C3, TR = tprev_ref.shape
    C = qw_ref.shape[0]
    ch = C // num_head

    @pl.when(i == 0)
    def _init():
        s_ref[...] = jnp.zeros_like(s_ref)
        qn2_ref[...] = jnp.zeros_like(qn2_ref)
        kn2_ref[...] = jnp.zeros_like(kn2_ref)

    # ---- fused 1x1 convs for the CURRENT row tile (bf16 MXU operands, f32 acc) ----
    xb = x_ref[...].astype(jnp.bfloat16)
    yb = y_ref[...].astype(jnp.bfloat16)
    t_q = jnp.dot(qw_ref[...].astype(jnp.bfloat16), xb,
                  preferred_element_type=jnp.float32)
    t_kv = jnp.dot(kvw_ref[...].astype(jnp.bfloat16), yb,
                   preferred_element_type=jnp.float32)
    t_cur = jnp.concatenate([t_q, t_kv], axis=0) + b_ref[...]          # [3C, TR] f32

    # ---- emit depthwise 3x3 output of the PREVIOUS row tile (delay-by-one) ----
    @pl.when(i > 0)
    def _emit():
        j = i - 1                                        # row tile being produced
        t = tprev_ref[...]                               # [3C, TR]
        h_top = jnp.where(j > 0, carry_ref[...], 0.0)                  # [3C, W]
        h_bot = jnp.where(j < n_tiles - 1, t_cur[:, :W], 0.0)          # [3C, W]

        rows_up = jnp.concatenate([h_top, t[:, :TR - W]], axis=1)      # T(row-1, col)
        rows_dn = jnp.concatenate([t[:, W:], h_bot], axis=1)           # T(row+1, col)

        col = lax.broadcasted_iota(jnp.int32, (1, TR), 1) % W
        not_left = col >= 1
        not_right = col <= W - 2

        wdw = dww_ref[...]                               # [3C, 9], taps ky*3 + kx
        acc = jnp.zeros((C3, TR), jnp.float32)
        for ky, base in enumerate((rows_up, t, rows_dn)):
            acc = acc + base * wdw[:, 3 * ky + 1:3 * ky + 2]
            # col-1 tap: roll forward by 1 (XLU), wrap lanes masked by not_left
            left = jnp.where(not_left, pltpu.roll(base, shift=1, axis=1), 0.0)
            acc = acc + left * wdw[:, 3 * ky:3 * ky + 1]
            # col+1 tap: roll by TR-1 (== -1), wrap lanes masked by not_right
            right = jnp.where(not_right, pltpu.roll(base, shift=TR - 1, axis=1), 0.0)
            acc = acc + right * wdw[:, 3 * ky + 2:3 * ky + 3]
        acc = acc + dwb_ref[...]

        # v row tile -> HBM (bf16); q / k never leave VMEM
        v_ref[...] = acc[2 * C:].astype(v_ref.dtype)

        # attention statistics (diag-scaling factorization of F.normalize)
        qh = acc[:C]
        kh = acc[C:2 * C]
        s_ref[...] += lax.dot_general(
            qh.astype(jnp.bfloat16), kh.astype(jnp.bfloat16),
            (((1,), (1,)), ((), ())), preferred_element_type=jnp.float32)
        qn2_ref[...] += jnp.sum(qh * qh, axis=1, keepdims=True)
        kn2_ref[...] += jnp.sum(kh * kh, axis=1, keepdims=True)

    # ---- finalize: normalize + temperature + softmax, fold project_out -> M ----
    @pl.when(i == pl.num_programs(1) - 1)
    def _finalize():
        # F.normalize eps=1e-12:  1/max(||.||, 1e-12) == rsqrt(max(||.||^2, 1e-24))
        inv_q = lax.rsqrt(jnp.maximum(qn2_ref[...], 1e-24)) * trow_ref[...]  # [C,1]
        inv_k = lax.rsqrt(jnp.maximum(kn2_ref[...], 1e-24))                  # [C,1]
        rid = lax.broadcasted_iota(jnp.int32, (C, C), 0)
        cid = lax.broadcasted_iota(jnp.int32, (C, C), 1)
        diag_k = jnp.where(rid == cid, inv_k, 0.0)       # diag(1/||k||)  [C,C]
        g = jnp.dot(s_ref[...] * inv_q, diag_k,
                    preferred_element_type=jnp.float32)   # scaled Gram (temp folded)
        wp = wp_ref[...].astype(jnp.bfloat16)
        cols = []
        for h in range(num_head):
            lo, hi = h * ch, (h + 1) * ch
            a = g[lo:hi, lo:hi]
            a = jnp.exp(a - jnp.max(a, axis=-1, keepdims=True))
            a = a * pl.reciprocal(jnp.sum(a, axis=-1, keepdims=True), approx=True)
            # column block of M = W_proj @ blockdiag(attn):  M[:, lo:hi] = wp[:, lo:hi] @ a
            cols.append(jnp.dot(wp[:, lo:hi], a.astype(jnp.bfloat16),
                                preferred_element_type=jnp.float32))
        m_ref[...] = jnp.concatenate(cols, axis=1).astype(m_ref.dtype)

    # ---- carry updates for the next grid step (order matters) ----
    carry_ref[...] = tprev_ref[:, TR - W:]
    tprev_ref[...] = t_cur


def _fused_conv_attn(x_cm, y_cm, q_w, kv_w, b_all, dw_w, dw_b, temp_rows, proj_w,
                     *, img_w, row_tile, num_head):
    B, C, N = x_cm.shape
    C3 = 3 * C
    TR = row_tile * img_w
    NT = N // TR
    kernel = functools.partial(_conv_attn_kernel, W=img_w, n_tiles=NT,
                               num_head=num_head)
    return pl.pallas_call(
        kernel,
        out_shape=(jax.ShapeDtypeStruct((B, C, N), jnp.bfloat16),    # v
                   jax.ShapeDtypeStruct((B, C, C), jnp.float32)),    # M
        grid_spec=pltpu.PrefetchScalarGridSpec(
            num_scalar_prefetch=0,
            grid=(B, NT + 1),
            in_specs=[
                pl.BlockSpec((None, C, TR), lambda b, i: (b, 0, jnp.minimum(i, NT - 1))),
                pl.BlockSpec((None, C, TR), lambda b, i: (b, 0, jnp.minimum(i, NT - 1))),
                pl.BlockSpec((C, C), lambda b, i: (0, 0)),        # q 1x1 weight
                pl.BlockSpec((2 * C, C), lambda b, i: (0, 0)),    # kv 1x1 weight
                pl.BlockSpec((C3, 1), lambda b, i: (0, 0)),       # 1x1 biases (stacked)
                pl.BlockSpec((C3, 9), lambda b, i: (0, 0)),       # dw weights (stacked)
                pl.BlockSpec((C3, 1), lambda b, i: (0, 0)),       # dw biases (stacked)
                pl.BlockSpec((C, 1), lambda b, i: (0, 0)),        # per-row temperature
                pl.BlockSpec((C, C), lambda b, i: (0, 0)),        # project_out weight
            ],
            out_specs=(
                pl.BlockSpec((None, C, TR), lambda b, i: (b, 0, jnp.maximum(i - 1, 0))),
                pl.BlockSpec((None, C, C), lambda b, i: (b, 0, 0)),
            ),
            scratch_shapes=[
                pltpu.VMEM((C3, TR), jnp.float32),      # pointwise output of prev tile
                pltpu.VMEM((C3, img_w), jnp.float32),   # last row of the tile before it
                pltpu.VMEM((C, C), jnp.float32),        # Gram accumulator
                pltpu.VMEM((C, 1), jnp.float32),        # sum q^2
                pltpu.VMEM((C, 1), jnp.float32),        # sum k^2
            ]),
        compiler_params=pltpu.CompilerParams(
            dimension_semantics=("parallel", "arbitrary"),
            vmem_limit_bytes=32 * 1024 * 1024),
    )(x_cm, y_cm, q_w, kv_w, b_all, dw_w, dw_b, temp_rows, proj_w)


# ---------------- Kernel B: out[:, tile] = M @ v[:, tile] + bias ----------------

def _apply_attn_kernel(m_ref, v_ref, bp_ref, o_ref):
    out = jnp.dot(m_ref[...].astype(jnp.bfloat16), v_ref[...],
                  preferred_element_type=jnp.float32)
    o_ref[...] = (out + bp_ref[...]).astype(o_ref.dtype)


def _apply_attention(m, v_cm, proj_b, *, col_tile, out_dtype):
    B, C, N = v_cm.shape
    TN = col_tile
    return pl.pallas_call(
        _apply_attn_kernel,
        out_shape=jax.ShapeDtypeStruct((B, C, N), out_dtype),
        grid_spec=pltpu.PrefetchScalarGridSpec(
            num_scalar_prefetch=0,
            grid=(B, N // TN),
            in_specs=[
                pl.BlockSpec((None, C, C), lambda b, n: (b, 0, 0)),
                pl.BlockSpec((None, C, TN), lambda b, n: (b, 0, n)),
                pl.BlockSpec((C, 1), lambda b, n: (0, 0)),
            ],
            out_specs=pl.BlockSpec((None, C, TN), lambda b, n: (b, 0, n)),
        ),
        compiler_params=pltpu.CompilerParams(
            dimension_semantics=("parallel", "parallel"),
            vmem_limit_bytes=32 * 1024 * 1024),
    )(m, v_cm, proj_b)


# ------------------------------- module wrapper -------------------------------

def init_params(key, dim, num_head, dtype=jnp.float32):
    ks = jax.random.split(key, 10)

    def u(k, shape, scale=0.1):
        return jax.random.uniform(k, shape, dtype, minval=-scale, maxval=scale)

    return {
        'temperature': jnp.ones((num_head,), dtype),         # nn.Parameter(ones(h,1,1))
        'q_w': u(ks[0], (dim, dim)), 'q_b': u(ks[1], (dim, 1)),
        'q_dw_w': u(ks[2], (dim, 9)), 'q_dw_b': u(ks[3], (dim, 1)),
        'kv_w': u(ks[4], (2 * dim, dim)), 'kv_b': u(ks[5], (2 * dim, 1)),
        'kv_dw_w': u(ks[6], (2 * dim, 9)), 'kv_dw_b': u(ks[7], (2 * dim, 1)),
        'proj_w': u(ks[8], (dim, dim)), 'proj_b': u(ks[9], (dim, 1)),
    }


def cross_attention_forward(params, x, y, num_head, *, max_tile_pixels=4096):
    assert x.shape == y.shape, \
        'The shape of feature maps from image and features are not equal!'
    B, C, H, W = x.shape
    assert C % num_head == 0
    N = H * W
    ch = C // num_head

    x_cm = x.reshape(B, C, N)     # NCHW is already channel-major: free reshape
    y_cm = y.reshape(B, C, N)

    row_tile = _pick_row_tile(H, W, max_tile_pixels)
    col_tile = _pick_col_tile(N, max_tile_pixels)

    b_all = jnp.concatenate([params['q_b'], params['kv_b']], axis=0).astype(jnp.float32)
    dw_w = jnp.concatenate([params['q_dw_w'], params['kv_dw_w']], axis=0).astype(jnp.float32)
    dw_b = jnp.concatenate([params['q_dw_b'], params['kv_dw_b']], axis=0).astype(jnp.float32)
    # temperature folded into the per-row q scaling (head h -> rows h*ch:(h+1)*ch)
    temp_rows = jnp.repeat(params['temperature'].astype(jnp.float32), ch).reshape(C, 1)

    v_cm, m = _fused_conv_attn(
        x_cm, y_cm,
        params['q_w'].astype(jnp.float32), params['kv_w'].astype(jnp.float32),
        b_all, dw_w, dw_b, temp_rows, params['proj_w'].astype(jnp.float32),
        img_w=W, row_tile=row_tile, num_head=num_head)

    out_cm = _apply_attention(m, v_cm, params['proj_b'].astype(jnp.float32),
                              col_tile=col_tile, out_dtype=x.dtype)
    return out_cm.reshape(B, C, H, W)


# --------------------------- pure-JAX reference check ---------------------------

def _reference(params, x, y, num_head):
    B, C, H, W = x.shape
    ch = C // num_head

    def conv1x1(inp, w, b):
        return jnp.einsum('oi,bihw->bohw', w, inp) + b.reshape(1, -1, 1, 1)

    def dwconv3(inp, w, b):
        Cd = inp.shape[1]
        wk = w.reshape(Cd, 1, 3, 3)
        out = lax.conv_general_dilated(
            inp, wk, window_strides=(1, 1), padding=((1, 1), (1, 1)),
            dimension_numbers=('NCHW', 'OIHW', 'NCHW'), feature_group_count=Cd)
        return out + b.reshape(1, -1, 1, 1)

    q = dwconv3(conv1x1(x, params['q_w'], params['q_b']),
                params['q_dw_w'], params['q_dw_b'])
    kv = dwconv3(conv1x1(y, params['kv_w'], params['kv_b']),
                 params['kv_dw_w'], params['kv_dw_b'])
    k, v = kv[:, :C], kv[:, C:]

    def heads(t):
        return t.reshape(B, num_head, ch, H * W)

    qh, kh, vh = heads(q), heads(k), heads(v)
    qn = qh / jnp.maximum(jnp.linalg.norm(qh, axis=-1, keepdims=True), 1e-12)
    kn = kh / jnp.maximum(jnp.linalg.norm(kh, axis=-1, keepdims=True), 1e-12)
    attn = jnp.einsum('bhcn,bhdn->bhcd', qn, kn) \
        * params['temperature'].reshape(1, num_head, 1, 1)
    attn = jax.nn.softmax(attn, axis=-1)
    out = jnp.einsum('bhcd,bhdn->bhcn', attn, vh).reshape(B, C, H * W)
    out = jnp.einsum('oi,bin->bon', params['proj_w'], out) + params['proj_b'].reshape(1, C, 1)
    return out.reshape(B, C, H, W)


if __name__ == "__main__":
    key = jax.random.PRNGKey(0)
    kx, ky, kp = jax.random.split(key, 3)

    B, dim, num_head, H, W = 2, 32, 4, 16, 16
    x = jax.random.normal(kx, (B, dim, H, W), jnp.float32)
    y = jax.random.normal(ky, (B, dim, H, W), jnp.float32)
    params = init_params(kp, dim, num_head)

    # small tile cap so the test exercises the multi-tile carry / reduction paths
    out = cross_attention_forward(params, x, y, num_head, max_tile_pixels=128)
    jax.block_until_ready(out)

    assert out.shape == (B, dim, H, W), out.shape
    assert bool(jnp.all(jnp.isfinite(out)))

    ref = _reference(params, x, y, num_head)
    err = float(jnp.max(jnp.abs(out - ref)))
    assert err < 5e-2, f"max abs error vs reference: {err}"
    print("KERNEL_OK")
</pallas_src>

<mosaic_0001>
module attributes {stable_mosaic.version = 11 : i64} {
  func.func @_conv_attn_kernel(%arg0: i32, %arg1: i32, %arg2: memref<1x32x128xf32, #tpu.memory_space<vmem>>, %arg3: memref<1x32x128xf32, #tpu.memory_space<vmem>>, %arg4: memref<32x32xf32, #tpu.memory_space<vmem>>, %arg5: memref<64x32xf32, #tpu.memory_space<vmem>>, %arg6: memref<96x1xf32, #tpu.memory_space<vmem>>, %arg7: memref<96x9xf32, #tpu.memory_space<vmem>>, %arg8: memref<96x1xf32, #tpu.memory_space<vmem>>, %arg9: memref<32x1xf32, #tpu.memory_space<vmem>>, %arg10: memref<32x32xf32, #tpu.memory_space<vmem>>, %arg11: memref<1x32x128xbf16, #tpu.memory_space<vmem>>, %arg12: memref<1x32x32xf32, #tpu.memory_space<vmem>>, %arg13: memref<96x128xf32, #tpu.memory_space<vmem>>, %arg14: memref<96x16xf32, #tpu.memory_space<vmem>>, %arg15: memref<32x32xf32, #tpu.memory_space<vmem>>, %arg16: memref<32x1xf32, #tpu.memory_space<vmem>>, %arg17: memref<32x1xf32, #tpu.memory_space<vmem>>) attributes {dimension_semantics = [#tpu.dimension_semantics<parallel>, #tpu.dimension_semantics<arbitrary>], iteration_bounds = array<i64: 2, 3>, scalar_prefetch = 0 : i64, scratch_operands = 5 : i64, tpu.core_type = #tpu.core_type<tc>, window_params = [{transform_indices = @transform_0, window_bounds = array<i64: 1, 32, 128>}, {transform_indices = @transform_1, window_bounds = array<i64: 1, 32, 128>}, {pipeline_mode = #tpu.pipeline_mode<synchronous>, transform_indices = @transform_2, window_bounds = array<i64: 32, 32>}, {pipeline_mode = #tpu.pipeline_mode<synchronous>, transform_indices = @transform_3, window_bounds = array<i64: 64, 32>}, {pipeline_mode = #tpu.pipeline_mode<synchronous>, transform_indices = @transform_4, window_bounds = array<i64: 96, 1>}, {pipeline_mode = #tpu.pipeline_mode<synchronous>, transform_indices = @transform_5, window_bounds = array<i64: 96, 9>}, {pipeline_mode = #tpu.pipeline_mode<synchronous>, transform_indices = @transform_6, window_bounds = array<i64: 96, 1>}, {pipeline_mode = #tpu.pipeline_mode<synchronous>, transform_indices = @transform_7, window_bounds = array<i64: 32, 1>}, {pipeline_mode = #tpu.pipeline_mode<synchronous>, transform_indices = @transform_8, window_bounds = array<i64: 32, 32>}, {transform_indices = @transform_9, window_bounds = array<i64: 1, 32, 128>}, {transform_indices = @transform_10, window_bounds = array<i64: 1, 32, 32>}]} {
    %c0_i32 = arith.constant 0 : i32
    %0 = arith.cmpi eq, %arg1, %c0_i32 : i32
    %1 = arith.extui %0 : i1 to i32
    %c0_i32_0 = arith.constant 0 : i32
    %2 = arith.cmpi ne, %1, %c0_i32_0 : i32
    scf.if %2 {
      %cst_21 = arith.constant 0.000000e+00 : f32
      %28 = vector.broadcast %cst_21 : f32 to vector<32x32xf32>
      %c0_22 = arith.constant 0 : index
      %c0_23 = arith.constant 0 : index
      %29 = vector.load %arg15[%c0_22, %c0_23] : memref<32x32xf32, #tpu.memory_space<vmem>>, vector<32x32xf32>
      tpu.vector_store %arg15[%c0_22, %c0_23], %28 {strides = array<i32>} : memref<32x32xf32, #tpu.memory_space<vmem>>, vector<32x32xf32>,
      %cst_24 = arith.constant 0.000000e+00 : f32
      %30 = vector.broadcast %cst_24 : f32 to vector<32x1xf32>
      %c0_25 = arith.constant 0 : index
      %c0_26 = arith.constant 0 : index
      %31 = vector.load %arg16[%c0_25, %c0_26] : memref<32x1xf32, #tpu.memory_space<vmem>>, vector<32x1xf32>
      tpu.vector_store %arg16[%c0_25, %c0_26], %30 {strides = array<i32>} : memref<32x1xf32, #tpu.memory_space<vmem>>, vector<32x1xf32>,
      %cst_27 = arith.constant 0.000000e+00 : f32
      %32 = vector.broadcast %cst_27 : f32 to vector<32x1xf32>
      %c0_28 = arith.constant 0 : index
      %c0_29 = arith.constant 0 : index
      %33 = vector.load %arg17[%c0_28, %c0_29] : memref<32x1xf32, #tpu.memory_space<vmem>>, vector<32x1xf32>
      tpu.vector_store %arg17[%c0_28, %c0_29], %32 {strides = array<i32>} : memref<32x1xf32, #tpu.memory_space<vmem>>, vector<32x1xf32>,
    } else {
    }
    %c0 = arith.constant 0 : index
    %c0_1 = arith.constant 0 : index
    %c0_2 = arith.constant 0 : index
    %3 = vector.load %arg2[%c0, %c0_1, %c0_2] : memref<1x32x128xf32, #tpu.memory_space<vmem>>, vector<1x32x128xf32>
    %4 = vector.shape_cast %3 : vector<1x32x128xf32> to vector<32x128xf32>
    %5 = arith.truncf %4 : vector<32x128xf32> to vector<32x128xbf16>
    %c0_3 = arith.constant 0 : index
    %c0_4 = arith.constant 0 : index
    %c0_5 = arith.constant 0 : index
    %6 = vector.load %arg3[%c0_3, %c0_4, %c0_5] : memref<1x32x128xf32, #tpu.memory_space<vmem>>, vector<1x32x128xf32>
    %7 = vector.shape_cast %6 : vector<1x32x128xf32> to vector<32x128xf32>
    %8 = arith.truncf %7 : vector<32x128xf32> to vector<32x128xbf16>
    %c0_6 = arith.constant 0 : index
    %c0_7 = arith.constant 0 : index
    %9 = vector.load %arg4[%c0_6, %c0_7] : memref<32x32xf32, #tpu.memory_space<vmem>>, vector<32x32xf32>
    %10 = arith.truncf %9 : vector<32x32xf32> to vector<32x32xbf16>
    %cst = arith.constant dense<0.000000e+00> : vector<32x128xf32>
    %11 = tpu.matmul %10, %5, %cst {dimension_numbers = #tpu.dot_dimension_numbers<[1], [0], [0], [1], [0, 0, 1, 1], [], []>} : vector<32x32xbf16>, vector<32x128xbf16>, vector<32x128xf32> -> vector<32x128xf32>
    %c0_8 = arith.constant 0 : index
    %c0_9 = arith.constant 0 : index
    %12 = vector.load %arg5[%c0_8, %c0_9] : memref<64x32xf32, #tpu.memory_space<vmem>>, vector<64x32xf32>
    %13 = arith.truncf %12 : vector<64x32xf32> to vector<64x32xbf16>
    %cst_10 = arith.constant dense<0.000000e+00> : vector<64x128xf32>
    %14 = tpu.matmul %13, %8, %cst_10 {dimension_numbers = #tpu.dot_dimension_numbers<[1], [0], [0], [1], [0, 0, 1, 1], [], []>} : vector<64x32xbf16>, vector<32x128xbf16>, vector<64x128xf32> -> vector<64x128xf32>
    %15 = tpu.concatenate %11, %14 in 0 : vector<32x128xf32>, vector<64x128xf32> -> vector<96x128xf32>
    %c0_11 = arith.constant 0 : index
    %c0_12 = arith.constant 0 : index
    %16 = vector.load %arg6[%c0_11, %c0_12] : memref<96x1xf32, #tpu.memory_space<vmem>>, vector<96x1xf32>
    %17 = vector.broadcast %16 : vector<96x1xf32> to vector<96x128xf32>
    %18 = arith.addf %15, %17 : vector<96x128xf32>
    %c0_i32_13 = arith.constant 0 : i32
    %19 = arith.cmpi sgt, %arg1, %c0_i32_13 : i32
    %20 = arith.extui %19 : i1 to i32
    %c0_i32_14 = arith.constant 0 : i32
    %21 = arith.cmpi ne, %20, %c0_i32_14 : i32
    scf.if %21 {
      %c1_i32 = arith.constant 1 : i32
      %28 = arith.subi %arg1, %c1_i32 : i32
      %c0_21 = arith.constant 0 : index
      %c0_22 = arith.constant 0 : index
      %29 = vector.load %arg13[%c0_21, %c0_22] : memref<96x128xf32, #tpu.memory_space<vmem>>, vector<96x128xf32>
      %c0_i32_23 = arith.constant 0 : i32
      %30 = arith.cmpi sgt, %28, %c0_i32_23 : i32
      %c0_24 = arith.constant 0 : index
      %c0_25 = arith.constant 0 : index
      %31 = vector.load %arg14[%c0_24, %c0_25] : memref<96x16xf32, #tpu.memory_space<vmem>>, vector<96x16xf32>
      %cst_26 = arith.constant 0.000000e+00 : f32
      %32 = vector.broadcast %cst_26 : f32 to vector<96x16xf32>
      %33 = arith.select %30, %31, %32 : vector<96x16xf32>
      %c1_i32_27 = arith.constant 1 : i32
      %34 = arith.cmpi slt, %28, %c1_i32_27 : i32
      %35 = vector.extract_strided_slice %18 {offsets = [0, 0], sizes = [96, 16], strides = [1, 1]} : vector<96x128xf32> to vector<96x16xf32>
      %cst_28 = arith.constant 0.000000e+00 : f32
      %36 = vector.broadcast %cst_28 : f32 to vector<96x16xf32>
      %37 = arith.select %34, %35, %36 : vector<96x16xf32>
      %38 = vector.extract_strided_slice %29 {offsets = [0, 0], sizes = [96, 112], strides = [1, 1]} : vector<96x128xf32> to vector<96x112xf32>
      %39 = tpu.concatenate %33, %38 in 1 : vector<96x16xf32>, vector<96x112xf32> -> vector<96x128xf32>
      %40 = vector.extract_strided_slice %29 {offsets = [0, 16], sizes = [96, 112], strides = [1, 1]} : vector<96x128xf32> to vector<96x112xf32>
      %41 = tpu.concatenate %40, %37 in 1 : vector<96x112xf32>, vector<96x16xf32> -> vector<96x128xf32>
      %42 = tpu.iota {dimensions = array<i32: 1>} : vector<1x128xi32>
      %c16_i32 = arith.constant 16 : i32
      %c0_i32_29 = arith.constant 0 : i32
      %43 = arith.cmpi eq, %c16_i32, %c0_i32_29 : i32
      %c1_i32_30 = arith.constant 1 : i32
      %44 = arith.select %43, %c1_i32_30, %c16_i32 : i32
      %45 = vector.broadcast %44 : i32 to vector<1x128xi32>
      %46 = arith.remsi %42, %45 : vector<1x128xi32>
      %c0_i32_31 = arith.constant 0 : i32
      %47 = vector.broadcast %c0_i32_31 : i32 to vector<1x128xi32>
      %48 = arith.cmpi ne, %46, %47 : vector<1x128xi32>
      %c0_i32_32 = arith.constant 0 : i32
      %49 = vector.broadcast %c0_i32_32 : i32 to vector<1x128xi32>
      %50 = arith.cmpi slt, %46, %49 : vector<1x128xi32>
      %c0_i32_33 = arith.constant 0 : i32
      %51 = arith.cmpi slt, %44, %c0_i32_33 : i32
      %52 = vector.broadcast %51 : i1 to vector<1x128xi1>
      %53 = vector.broadcast %52 : vector<1x128xi1> to vector<1x128xi1>
      %54 = arith.xori %50, %53 : vector<1x128xi1>
      %55 = arith.andi %54, %48 : vector<1x128xi1>
      %56 = vector.broadcast %44 : i32 to vector<1x128xi32>
      %57 = arith.addi %46, %56 : vector<1x128xi32>
      %58 = arith.select %55, %57, %46 : vector<1x128xi1>, vector<1x128xi32>
      %c1_i32_34 = arith.constant 1 : i32
      %59 = vector.broadcast %c1_i32_34 : i32 to vector<1x128xi32>
      %60 = arith.cmpi sge, %58, %59 : vector<1x128xi32>
      %c14_i32 = arith.constant 14 : i32
      %61 = vector.broadcast %c14_i32 : i32 to vector<1x128xi32>
      %62 = arith.cmpi sle, %58, %61 : vector<1x128xi32>
      %c0_35 = arith.constant 0 : index
      %c0_36 = arith.constant 0 : index
      %63 = vector.load %arg7[%c0_35, %c0_36] : memref<96x9xf32, #tpu.memory_space<vmem>>, vector<96x9xf32>
      %cst_37 = arith.constant 0.000000e+00 : f32
      %64 = vector.broadcast %cst_37 : f32 to vector<96x128xf32>
      %65 = vector.extract_strided_slice %63 {offsets = [0, 1], sizes = [96, 1], strides = [1, 1]} : vector<96x9xf32> to vector<96x1xf32>
      %66 = vector.broadcast %65 : vector<96x1xf32> to vector<96x128xf32>
      %67 = arith.mulf %39, %66 : vector<96x128xf32>
      %68 = arith.addf %64, %67 : vector<96x128xf32>
      %c1_i32_38 = arith.constant 1 : i32
      %69 = tpu.dynamic_rotate %39 by %c1_i32_38 dim 1 : vector<96x128xf32>, i32 -> vector<96x128xf32>
      %cst_39 = arith.constant 0.000000e+00 : f32
      %70 = vector.shape_cast %60 : vector<1x128xi1> to vector<1x128xi1>
      %71 = vector.broadcast %70 : vector<1x128xi1> to vector<96x128xi1>
      %72 = vector.broadcast %cst_39 : f32 to vector<96x128xf32>
      %73 = arith.select %71, %69, %72 : vector<96x128xi1>, vector<96x128xf32>
      %74 = vector.extract_strided_slice %63 {offsets = [0, 0], sizes = [96, 1], strides = [1, 1]} : vector<96x9xf32> to vector<96x1xf32>
      %75 = vector.broadcast %74 : vector<96x1xf32> to vector<96x128xf32>
      %76 = arith.mulf %73, %75 : vector<96x128xf32>
      %77 = arith.addf %68, %76 : vector<96x128xf32>
      %c127_i32 = arith.constant 127 : i32
      %78 = tpu.dynamic_rotate %39 by %c127_i32 dim 1 : vector<96x128xf32>, i32 -> vector<96x128xf32>
      %cst_40 = arith.constant 0.000000e+00 : f32
      %79 = vector.shape_cast %62 : vector<1x128xi1> to vector<1x128xi1>
      %80 = vector.broadcast %79 : vector<1x128xi1> to vector<96x128xi1>
      %81 = vector.broadcast %cst_40 : f32 to vector<96x128xf32>
      %82 = arith.select %80, %78, %81 : vector<96x128xi1>, vector<96x128xf32>
      %83 = vector.extract_strided_slice %63 {offsets = [0, 2], sizes = [96, 1], strides = [1, 1]} : vector<96x9xf32> to vector<96x1xf32>
      %84 = vector.broadcast %83 : vector<96x1xf32> to vector<96x128xf32>
      %85 = arith.mulf %82, %84 : vector<96x128xf32>
      %86 = arith.addf %77, %85 : vector<96x128xf32>
      %87 = vector.extract_strided_slice %63 {offsets = [0, 4], sizes = [96, 1], strides = [1, 1]} : vector<96x9xf32> to vector<96x1xf32>
      %88 = vector.broadcast %87 : vector<96x1xf32> to vector<96x128xf32>
      %89 = arith.mulf %29, %88 : vector<96x128xf32>
      %90 = arith.addf %86, %89 : vector<96x128xf32>
      %c1_i32_41 = arith.constant 1 : i32
      %91 = tpu.dynamic_rotate %29 by %c1_i32_41 dim 1 : vector<96x128xf32>, i32 -> vector<96x128xf32>
      %cst_42 = arith.constant 0.000000e+00 : f32
      %92 = vector.shape_cast %60 : vector<1x128xi1> to vector<1x128xi1>
      %93 = vector.broadcast %92 : vector<1x128xi1> to vector<96x128xi1>
      %94 = vector.broadcast %cst_42 : f32 to vector<96x128xf32>
      %95 = arith.select %93, %91, %94 : vector<96x128xi1>, vector<96x128xf32>
      %96 = vector.extract_strided_slice %63 {offsets = [0, 3], sizes = [96, 1], strides = [1, 1]} : vector<96x9xf32> to vector<96x1xf32>
      %97 = vector.broadcast %96 : vector<96x1xf32> to vector<96x128xf32>
      %98 = arith.mulf %95, %97 : vector<96x128xf32>
      %99 = arith.addf %90, %98 : vector<96x128xf32>
      %c127_i32_43 = arith.constant 127 : i32
      %100 = tpu.dynamic_rotate %29 by %c127_i32_43 dim 1 : vector<96x128xf32>, i32 -> vector<96x128xf32>
      %cst_44 = arith.constant 0.000000e+00 : f32
      %101 = vector.shape_cast %62 : vector<1x128xi1> to vector<1x128xi1>
      %102 = vector.broadcast %101 : vector<1x128xi1> to vector<96x128xi1>
      %103 = vector.broadcast %cst_44 : f32 to vector<96x128xf32>
      %104 = arith.select %102, %100, %103 : vector<96x128xi1>, vector<96x128xf32>
      %105 = vector.extract_strided_slice %63 {offsets = [0, 5], sizes = [96, 1], strides = [1, 1]} : vector<96x9xf32> to vector<96x1xf32>
      %106 = vector.broadcast %105 : vector<96x1xf32> to vector<96x128xf32>
      %107 = arith.mulf %104, %106 : vector<96x128xf32>
      %108 = arith.addf %99, %107 : vector<96x128xf32>
      %109 = vector.extract_strided_slice %63 {offsets = [0, 7], sizes = [96, 1], strides = [1, 1]} : vector<96x9xf32> to vector<96x1xf32>
      %110 = vector.broadcast %109 : vector<96x1xf32> to vector<96x128xf32>
      %111 = arith.mulf %41, %110 : vector<96x128xf32>
      %112 = arith.addf %108, %111 : vector<96x128xf32>
      %c1_i32_45 = arith.constant 1 : i32
      %113 = tpu.dynamic_rotate %41 by %c1_i32_45 dim 1 : vector<96x128xf32>, i32 -> vector<96x128xf32>
      %cst_46 = arith.constant 0.000000e+00 : f32
      %114 = vector.shape_cast %60 : vector<1x128xi1> to vector<1x128xi1>
      %115 = vector.broadcast %114 : vector<1x128xi1> to vector<96x128xi1>
      %116 = vector.broadcast %cst_46 : f32 to vector<96x128xf32>
      %117 = arith.select %115, %113, %116 : vector<96x128xi1>, vector<96x128xf32>
      %118 = vector.extract_strided_slice %63 {offsets = [0, 6], sizes = [96, 1], strides = [1, 1]} : vector<96x9xf32> to vector<96x1xf32>
      %119 = vector.broadcast %118 : vector<96x1xf32> to vector<96x128xf32>
      %120 = arith.mulf %117, %119 : vector<96x128xf32>
      %121 = arith.addf %112, %120 : vector<96x128xf32>
      %c127_i32_47 = arith.constant 127 : i32
      %122 = tpu.dynamic_rotate %41 by %c127_i32_47 dim 1 : vector<96x128xf32>, i32 -> vector<96x128xf32>
      %cst_48 = arith.constant 0.000000e+00 : f32
      %123 = vector.shape_cast %62 : vector<1x128xi1> to vector<1x128xi1>
      %124 = vector.broadcast %123 : vector<1x128xi1> to vector<96x128xi1>
      %125 = vector.broadcast %cst_48 : f32 to vector<96x128xf32>
      %126 = arith.select %124, %122, %125 : vector<96x128xi1>, vector<96x128xf32>
      %127 = vector.extract_strided_slice %63 {offsets = [0, 8], sizes = [96, 1], strides = [1, 1]} : vector<96x9xf32> to vector<96x1xf32>
      %128 = vector.broadcast %127 : vector<96x1xf32> to vector<96x128xf32>
      %129 = arith.mulf %126, %128 : vector<96x128xf32>
      %130 = arith.addf %121, %129 : vector<96x128xf32>
      %c0_49 = arith.constant 0 : index
      %c0_50 = arith.constant 0 : index
      %131 = vector.load %arg8[%c0_49, %c0_50] : memref<96x1xf32, #tpu.memory_space<vmem>>, vector<96x1xf32>
      %132 = vector.broadcast %131 : vector<96x1xf32> to vector<96x128xf32>
      %133 = arith.addf %130, %132 : vector<96x128xf32>
      %134 = vector.extract_strided_slice %133 {offsets = [64, 0], sizes = [32, 128], strides = [1, 1]} : vector<96x128xf32> to vector<32x128xf32>
      %135 = arith.truncf %134 : vector<32x128xf32> to vector<32x128xbf16>
      %c0_51 = arith.constant 0 : index
      %c0_52 = arith.constant 0 : index
      %c0_53 = arith.constant 0 : index
      %136 = vector.load %arg11[%c0_51, %c0_52, %c0_53] : memref<1x32x128xbf16, #tpu.memory_space<vmem>>, vector<1x32x128xbf16>
      %137 = vector.shape_cast %136 : vector<1x32x128xbf16> to vector<32x128xbf16>
      %138 = vector.shape_cast %135 : vector<32x128xbf16> to vector<1x32x128xbf16>
      tpu.vector_store %arg11[%c0_51, %c0_52, %c0_53], %138 {strides = array<i32>} : memref<1x32x128xbf16, #tpu.memory_space<vmem>>, vector<1x32x128xbf16>,
      %139 = vector.extract_strided_slice %133 {offsets = [0, 0], sizes = [32, 128], strides = [1, 1]} : vector<96x128xf32> to vector<32x128xf32>
      %140 = vector.extract_strided_slice %133 {offsets = [32, 0], sizes = [32, 128], strides = [1, 1]} : vector<96x128xf32> to vector<32x128xf32>
      %c0_54 = arith.constant 0 : index
      %c0_55 = arith.constant 0 : index
      %141 = vector.load %arg15[%c0_54, %c0_55] : memref<32x32xf32, #tpu.memory_space<vmem>>, vector<32x32xf32>
      %142 = arith.truncf %139 : vector<32x128xf32> to vector<32x128xbf16>
      %143 = arith.truncf %140 : vector<32x128xf32> to vector<32x128xbf16>
      %cst_56 = arith.constant dense<0.000000e+00> : vector<32x32xf32>
      %144 = tpu.matmul %142, %143, %cst_56 {dimension_numbers = #tpu.dot_dimension_numbers<[1], [1], [0], [0], [0, 0, 1, 0], [], []>} : vector<32x128xbf16>, vector<32x128xbf16>, vector<32x32xf32> -> vector<32x32xf32>
      %145 = arith.addf %141, %144 : vector<32x32xf32>
      %c0_57 = arith.constant 0 : index
      %c0_58 = arith.constant 0 : index
      %146 = vector.load %arg15[%c0_57, %c0_58] : memref<32x32xf32, #tpu.memory_space<vmem>>, vector<32x32xf32>
      tpu.vector_store %arg15[%c0_57, %c0_58], %145 {strides = array<i32>} : memref<32x32xf32, #tpu.memory_space<vmem>>, vector<32x32xf32>,
      %c0_59 = arith.constant 0 : index
      %c0_60 = arith.constant 0 : index
      %147 = vector.load %arg16[%c0_59, %c0_60] : memref<32x1xf32, #tpu.memory_space<vmem>>, vector<32x1xf32>
      %148 = arith.mulf %139, %139 : vector<32x128xf32>
      %cst_61 = arith.constant dense<0.000000e+00> : vector<32xf32>
      %149 = vector.multi_reduction <add>, %148, %cst_61 [1] : vector<32x128xf32> to vector<32xf32>
      %150 = vector.shape_cast %149 : vector<32xf32> to vector<32x1xf32>
      %151 = arith.addf %147, %150 : vector<32x1xf32>
      %c0_62 = arith.constant 0 : index
      %c0_63 = arith.constant 0 : index
      %152 = vector.load %arg16[%c0_62, %c0_63] : memref<32x1xf32, #tpu.memory_space<vmem>>, vector<32x1xf32>
      tpu.vector_store %arg16[%c0_62, %c0_63], %151 {strides = array<i32>} : memref<32x1xf32, #tpu.memory_space<vmem>>, vector<32x1xf32>,
      %c0_64 = arith.constant 0 : index
      %c0_65 = arith.constant 0 : index
      %153 = vector.load %arg17[%c0_64, %c0_65] : memref<32x1xf32, #tpu.memory_space<vmem>>, vector<32x1xf32>
      %154 = arith.mulf %140, %140 : vector<32x128xf32>
      %cst_66 = arith.constant dense<0.000000e+00> : vector<32xf32>
      %155 = vector.multi_reduction <add>, %154, %cst_66 [1] : vector<32x128xf32> to vector<32xf32>
      %156 = vector.shape_cast %155 : vector<32xf32> to vector<32x1xf32>
      %157 = arith.addf %153, %156 : vector<32x1xf32>
      %c0_67 = arith.constant 0 : index
      %c0_68 = arith.constant 0 : index
      %158 = vector.load %arg17[%c0_67, %c0_68] : memref<32x1xf32, #tpu.memory_space<vmem>>, vector<32x1xf32>
      tpu.vector_store %arg17[%c0_67, %c0_68], %157 {strides = array<i32>} : memref<32x1xf32, #tpu.memory_space<vmem>>, vector<32x1xf32>,
    } else {
    }
    %c2_i32 = arith.constant 2 : i32
    %22 = arith.cmpi eq, %arg1, %c2_i32 : i32
    %23 = arith.extui %22 : i1 to i32
    %c0_i32_15 = arith.constant 0 : i32
    %24 = arith.cmpi ne, %23, %c0_i32_15 : i32
    scf.if %24 {
      %c0_21 = arith.constant 0 : index
      %c0_22 = arith.constant 0 : index
      %28 = vector.load %arg16[%c0_21, %c0_22] : memref<32x1xf32, #tpu.memory_space<vmem>>, vector<32x1xf32>
      %cst_23 = arith.constant 1.000000e-24 : f32
      %29 = vector.broadcast %cst_23 : f32 to vector<32x1xf32>
      %30 = arith.maximumf %28, %29 : vector<32x1xf32>
      %31 = math.rsqrt %30 : vector<32x1xf32>
      %c0_24 = arith.constant 0 : index
      %c0_25 = arith.constant 0 : index
      %32 = vector.load %arg9[%c0_24, %c0_25] : memref<32x1xf32, #tpu.memory_space<vmem>>, vector<32x1xf32>
      %33 = arith.mulf %31, %32 : vector<32x1xf32>
      %c0_26 = arith.constant 0 : index
      %c0_27 = arith.constant 0 : index
      %34 = vector.load %arg17[%c0_26, %c0_27] : memref<32x1xf32, #tpu.memory_space<vmem>>, vector<32x1xf32>
      %cst_28 = arith.constant 1.000000e-24 : f32
      %35 = vector.broadcast %cst_28 : f32 to vector<32x1xf32>
      %36 = arith.maximumf %34, %35 : vector<32x1xf32>
      %37 = math.rsqrt %36 : vector<32x1xf32>
      %38 = tpu.iota {dimensions = array<i32: 0>} : vector<32x32xi32>
      %39 = tpu.iota {dimensions = array<i32: 1>} : vector<32x32xi32>
      %40 = arith.cmpi eq, %38, %39 : vector<32x32xi32>
      %cst_29 = arith.constant 0.000000e+00 : f32
      %41 = vector.shape_cast %37 : vector<32x1xf32> to vector<32x1xf32>
      %42 = vector.broadcast %41 : vector<32x1xf32> to vector<32x32xf32>
      %43 = vector.broadcast %cst_29 : f32 to vector<32x32xf32>
      %44 = arith.select %40, %42, %43 : vector<32x32xi1>, vector<32x32xf32>
      %c0_30 = arith.constant 0 : index
      %c0_31 = arith.constant 0 : index
      %45 = vector.load %arg15[%c0_30, %c0_31] : memref<32x32xf32, #tpu.memory_space<vmem>>, vector<32x32xf32>
      %46 = vector.broadcast %33 : vector<32x1xf32> to vector<32x32xf32>
      %47 = arith.mulf %45, %46 : vector<32x32xf32>
      %cst_32 = arith.constant dense<0.000000e+00> : vector<32x32xf32>
      %48 = tpu.matmul %47, %44, %cst_32 {dimension_numbers = #tpu.dot_dimension_numbers<[1], [0], [0], [1], [0, 0, 1, 1], [], []>} : vector<32x32xf32>, vector<32x32xf32>, vector<32x32xf32> -> vector<32x32xf32>
      %c0_33 = arith.constant 0 : index
      %c0_34 = arith.constant 0 : index
      %49 = vector.load %arg10[%c0_33, %c0_34] : memref<32x32xf32, #tpu.memory_space<vmem>>, vector<32x32xf32>
      %50 = arith.truncf %49 : vector<32x32xf32> to vector<32x32xbf16>
      %51 = vector.extract_strided_slice %48 {offsets = [0, 0], sizes = [8, 8], strides = [1, 1]} : vector<32x32xf32> to vector<8x8xf32>
      %cst_35 = arith.constant dense<0xFF800000> : vector<8xf32>
      %52 = vector.multi_reduction <maximumf>, %51, %cst_35 [1] : vector<8x8xf32> to vector<8xf32>
      %53 = vector.shape_cast %52 : vector<8xf32> to vector<8x1xf32>
      %54 = vector.broadcast %53 : vector<8x1xf32> to vector<8x8xf32>
      %55 = arith.subf %51, %54 : vector<8x8xf32>
      %56 = math.exp %55 : vector<8x8xf32>
      %cst_36 = arith.constant dense<0.000000e+00> : vector<8xf32>
      %57 = vector.multi_reduction <add>, %56, %cst_36 [1] : vector<8x8xf32> to vector<8xf32>
      %58 = vector.shape_cast %57 : vector<8xf32> to vector<8x1xf32>
      %59 = tpu.reciprocal %58 {approx = true} : vector<8x1xf32> -> vector<8x1xf32>
      %60 = vector.broadcast %59 : vector<8x1xf32> to vector<8x8xf32>
      %61 = arith.mulf %56, %60 : vector<8x8xf32>
      %62 = vector.extract_strided_slice %50 {offsets = [0, 0], sizes = [32, 8], strides = [1, 1]} : vector<32x32xbf16> to vector<32x8xbf16>
      %63 = arith.truncf %61 : vector<8x8xf32> to vector<8x8xbf16>
      %cst_37 = arith.constant dense<0.000000e+00> : vector<32x8xf32>
      %64 = tpu.matmul %62, %63, %cst_37 {dimension_numbers = #tpu.dot_dimension_numbers<[1], [0], [0], [1], [0, 0, 1, 1], [], []>} : vector<32x8xbf16>, vector<8x8xbf16>, vector<32x8xf32> -> vector<32x8xf32>
      %65 = vector.extract_strided_slice %48 {offsets = [8, 8], sizes = [8, 8], strides = [1, 1]} : vector<32x32xf32> to vector<8x8xf32>
      %cst_38 = arith.constant dense<0xFF800000> : vector<8xf32>
      %66 = vector.multi_reduction <maximumf>, %65, %cst_38 [1] : vector<8x8xf32> to vector<8xf32>
      %67 = vector.shape_cast %66 : vector<8xf32> to vector<8x1xf32>
      %68 = vector.broadcast %67 : vector<8x1xf32> to vector<8x8xf32>
      %69 = arith.subf %65, %68 : vector<8x8xf32>
      %70 = math.exp %69 : vector<8x8xf32>
      %cst_39 = arith.constant dense<0.000000e+00> : vector<8xf32>
      %71 = vector.multi_reduction <add>, %70, %cst_39 [1] : vector<8x8xf32> to vector<8xf32>
      %72 = vector.shape_cast %71 : vector<8xf32> to vector<8x1xf32>
      %73 = tpu.reciprocal %72 {approx = true} : vector<8x1xf32> -> vector<8x1xf32>
      %74 = vector.broadcast %73 : vector<8x1xf32> to vector<8x8xf32>
      %75 = arith.mulf %70, %74 : vector<8x8xf32>
      %76 = vector.extract_strided_slice %50 {offsets = [0, 8], sizes = [32, 8], strides = [1, 1]} : vector<32x32xbf16> to vector<32x8xbf16>
      %77 = arith.truncf %75 : vector<8x8xf32> to vector<8x8xbf16>
      %cst_40 = arith.constant dense<0.000000e+00> : vector<32x8xf32>
      %78 = tpu.matmul %76, %77, %cst_40 {dimension_numbers = #tpu.dot_dimension_numbers<[1], [0], [0], [1], [0, 0, 1, 1], [], []>} : vector<32x8xbf16>, vector<8x8xbf16>, vector<32x8xf32> -> vector<32x8xf32>
      %79 = vector.extract_strided_slice %48 {offsets = [16, 16], sizes = [8, 8], strides = [1, 1]} : vector<32x32xf32> to vector<8x8xf32>
      %cst_41 = arith.constant dense<0xFF800000> : vector<8xf32>
      %80 = vector.multi_reduction <maximumf>, %79, %cst_41 [1] : vector<8x8xf32> to vector<8xf32>
      %81 = vector.shape_cast %80 : vector<8xf32> to vector<8x1xf32>
      %82 = vector.broadcast %81 : vector<8x1xf32> to vector<8x8xf32>
      %83 = arith.subf %79, %82 : vector<8x8xf32>
      %84 = math.exp %83 : vector<8x8xf32>
      %cst_42 = arith.constant dense<0.000000e+00> : vector<8xf32>
      %85 = vector.multi_reduction <add>, %84, %cst_42 [1] : vector<8x8xf32> to vector<8xf32>
      %86 = vector.shape_cast %85 : vector<8xf32> to vector<8x1xf32>
      %87 = tpu.reciprocal %86 {approx = true} : vector<8x1xf32> -> vector<8x1xf32>
      %88 = vector.broadcast %87 : vector<8x1xf32> to vector<8x8xf32>
      %89 = arith.mulf %84, %88 : vector<8x8xf32>
      %90 = vector.extract_strided_slice %50 {offsets = [0, 16], sizes = [32, 8], strides = [1, 1]} : vector<32x32xbf16> to vector<32x8xbf16>
      %91 = arith.truncf %89 : vector<8x8xf32> to vector<8x8xbf16>
      %cst_43 = arith.constant dense<0.000000e+00> : vector<32x8xf32>
      %92 = tpu.matmul %90, %91, %cst_43 {dimension_numbers = #tpu.dot_dimension_numbers<[1], [0], [0], [1], [0, 0, 1, 1], [], []>} : vector<32x8xbf16>, vector<8x8xbf16>, vector<32x8xf32> -> vector<32x8xf32>
      %93 = vector.extract_strided_slice %48 {offsets = [24, 24], sizes = [8, 8], strides = [1, 1]} : vector<32x32xf32> to vector<8x8xf32>
      %cst_44 = arith.constant dense<0xFF800000> : vector<8xf32>
      %94 = vector.multi_reduction <maximumf>, %93, %cst_44 [1] : vector<8x8xf32> to vector<8xf32>
      %95 = vector.shape_cast %94 : vector<8xf32> to vector<8x1xf32>
      %96 = vector.broadcast %95 : vector<8x1xf32> to vector<8x8xf32>
      %97 = arith.subf %93, %96 : vector<8x8xf32>
      %98 = math.exp %97 : vector<8x8xf32>
      %cst_45 = arith.constant dense<0.000000e+00> : vector<8xf32>
      %99 = vector.multi_reduction <add>, %98, %cst_45 [1] : vector<8x8xf32> to vector<8xf32>
      %100 = vector.shape_cast %99 : vector<8xf32> to vector<8x1xf32>
      %101 = tpu.reciprocal %100 {approx = true} : vector<8x1xf32> -> vector<8x1xf32>
      %102 = vector.broadcast %101 : vector<8x1xf32> to vector<8x8xf32>
      %103 = arith.mulf %98, %102 : vector<8x8xf32>
      %104 = vector.extract_strided_slice %50 {offsets = [0, 24], sizes = [32, 8], strides = [1, 1]} : vector<32x32xbf16> to vector<32x8xbf16>
      %105 = arith.truncf %103 : vector<8x8xf32> to vector<8x8xbf16>
      %cst_46 = arith.constant dense<0.000000e+00> : vector<32x8xf32>
      %106 = tpu.matmul %104, %105, %cst_46 {dimension_numbers = #tpu.dot_dimension_numbers<[1], [0], [0], [1], [0, 0, 1, 1], [], []>} : vector<32x8xbf16>, vector<8x8xbf16>, vector<32x8xf32> -> vector<32x8xf32>
      %107 = tpu.concatenate %64, %78, %92, %106 in 1 : vector<32x8xf32>, vector<32x8xf32>, vector<32x8xf32>, vector<32x8xf32> -> vector<32x32xf32>
      %c0_47 = arith.constant 0 : index
      %c0_48 = arith.constant 0 : index
      %c0_49 = arith.constant 0 : index
      %108 = vector.load %arg12[%c0_47, %c0_48, %c0_49] : memref<1x32x32xf32, #tpu.memory_space<vmem>>, vector<1x32x32xf32>
      %109 = vector.shape_cast %108 : vector<1x32x32xf32> to vector<32x32xf32>
      %110 = vector.shape_cast %107 : vector<32x32xf32> to vector<1x32x32xf32>
      tpu.vector_store %arg12[%c0_47, %c0_48, %c0_49], %110 {strides = array<i32>} : memref<1x32x32xf32, #tpu.memory_space<vmem>>, vector<1x32x32xf32>,
    } else {
    }
    %c0_16 = arith.constant 0 : index
    %c112 = arith.constant 112 : index
    %25 = vector.load %arg13[%c0_16, %c112] : memref<96x128xf32, #tpu.memory_space<vmem>>, vector<96x16xf32>
    %c0_17 = arith.constant 0 : index
    %c0_18 = arith.constant 0 : index
    %26 = vector.load %arg14[%c0_17, %c0_18] : memref<96x16xf32, #tpu.memory_space<vmem>>, vector<96x16xf32>
    tpu.vector_store %arg14[%c0_17, %c0_18], %25 {strides = array<i32>} : memref<96x16xf32, #tpu.memory_space<vmem>>, vector<96x16xf32>,
    %c0_19 = arith.constant 0 : index
    %c0_20 = arith.constant 0 : index
    %27 = vector.load %arg13[%c0_19, %c0_20] : memref<96x128xf32, #tpu.memory_space<vmem>>, vector<96x128xf32>
    tpu.vector_store %arg13[%c0_19, %c0_20], %18 {strides = array<i32>} : memref<96x128xf32, #tpu.memory_space<vmem>>, vector<96x128xf32>,
    return
  }
  func.func @transform_0(%arg0: i32, %arg1: i32) -> (i32, i32, i32) {
    %c1_i32 = arith.constant 1 : i32
    %0 = arith.minsi %arg1, %c1_i32 : i32
    %c0_i32 = arith.constant 0 : i32
    %c0_i32_0 = arith.constant 0 : i32
    return %arg0, %c0_i32, %0 : i32, i32, i32
  }
  func.func @transform_1(%arg0: i32, %arg1: i32) -> (i32, i32, i32) {
    %c1_i32 = arith.constant 1 : i32
    %0 = arith.minsi %arg1, %c1_i32 : i32
    %c0_i32 = arith.constant 0 : i32
    %c0_i32_0 = arith.constant 0 : i32
    return %arg0, %c0_i32, %0 : i32, i32, i32
  }
  func.func @transform_2(%arg0: i32, %arg1: i32) -> (i32, i32) {
    %c0_i32 = arith.constant 0 : i32
    %c0_i32_0 = arith.constant 0 : i32
    %c0_i32_1 = arith.constant 0 : i32
    return %c0_i32, %c0_i32_0 : i32, i32
  }
  func.func @transform_3(%arg0: i32, %arg1: i32) -> (i32, i32) {
    %c0_i32 = arith.constant 0 : i32
    %c0_i32_0 = arith.constant 0 : i32
    %c0_i32_1 = arith.constant 0 : i32
    return %c0_i32, %c0_i32_0 : i32, i32
  }
  func.func @transform_4(%arg0: i32, %arg1: i32) -> (i32, i32) {
    %c0_i32 = arith.constant 0 : i32
    %c0_i32_0 = arith.constant 0 : i32
    %c0_i32_1 = arith.constant 0 : i32
    return %c0_i32, %c0_i32_0 : i32, i32
  }
  func.func @transform_5(%arg0: i32, %arg1: i32) -> (i32, i32) {
    %c0_i32 = arith.constant 0 : i32
    %c0_i32_0 = arith.constant 0 : i32
    %c0_i32_1 = arith.constant 0 : i32
    return %c0_i32, %c0_i32_0 : i32, i32
  }
  func.func @transform_6(%arg0: i32, %arg1: i32) -> (i32, i32) {
    %c0_i32 = arith.constant 0 : i32
    %c0_i32_0 = arith.constant 0 : i32
    %c0_i32_1 = arith.constant 0 : i32
    return %c0_i32, %c0_i32_0 : i32, i32
  }
  func.func @transform_7(%arg0: i32, %arg1: i32) -> (i32, i32) {
    %c0_i32 = arith.constant 0 : i32
    %c0_i32_0 = arith.constant 0 : i32
    %c0_i32_1 = arith.constant 0 : i32
    return %c0_i32, %c0_i32_0 : i32, i32
  }
  func.func @transform_8(%arg0: i32, %arg1: i32) -> (i32, i32) {
    %c0_i32 = arith.constant 0 : i32
    %c0_i32_0 = arith.constant 0 : i32
    %c0_i32_1 = arith.constant 0 : i32
    return %c0_i32, %c0_i32_0 : i32, i32
  }
  func.func @transform_9(%arg0: i32, %arg1: i32) -> (i32, i32, i32) {
    %c1_i32 = arith.constant 1 : i32
    %0 = arith.subi %arg1, %c1_i32 : i32
    %c0_i32 = arith.constant 0 : i32
    %1 = arith.maxsi %0, %c0_i32 : i32
    %c0_i32_0 = arith.constant 0 : i32
    %c0_i32_1 = arith.constant 0 : i32
    return %arg0, %c0_i32_0, %1 : i32, i32, i32
  }
  func.func @transform_10(%arg0: i32, %arg1: i32) -> (i32, i32, i32) {
    %c0_i32 = arith.constant 0 : i32
    %c0_i32_0 = arith.constant 0 : i32
    %c0_i32_1 = arith.constant 0 : i32
    return %arg0, %c0_i32, %c0_i32_0 : i32, i32, i32
  }
}

</mosaic_0001>

<llo_original>
// kernel: tpu_custom_call.1
$region0: #{tpu_custom_call.1}
  #allocation0 [shape = 'u32[]', space=smem, size = 0x4, offset = 0x4, fixed_abs, tag = 'smem constant byte address 0x4 - core index']
  #allocation1 [shape = 'u32[144,128]{1,0:T(1,128)}', space=vmem, size = 0x12000, scoped, tag = 'internal scratch']
  #allocation2 [shape = 'f32[96,128]{1,0:T(8,128)}', space=vmem, size = 0xc000, scoped, tag = 'scratch operand']
  #allocation3 [shape = 'f32[96,16]{1,0:T(8,128)}', space=vmem, size = 0xc000, scoped, tag = 'scratch operand']
  #allocation4 [shape = 'f32[32,32]{1,0:T(8,128)}', space=vmem, size = 0x4000, scoped, tag = 'scratch operand']
  #allocation5 [shape = 'f32[32,1]{1,0:T(8,128)}', space=vmem, size = 0x4000, scoped, tag = 'scratch operand']
  #allocation6 [shape = 'f32[32,1]{1,0:T(8,128)}', space=vmem, size = 0x4000, scoped, tag = 'scratch operand']
  %s0 = inlined_call_operand.vmem [shape: f32[2,32,256], index: 0, kind: input, shape index: {}]
  %s1 = inlined_call_operand.vmem [shape: f32[2,32,256], index: 1, kind: input, shape index: {}]
  %s2 = inlined_call_operand.vmem [shape: f32[32,32], index: 2, kind: input, shape index: {}]
  %s3 = inlined_call_operand.vmem [shape: f32[64,32], index: 3, kind: input, shape index: {}]
  %s4 = inlined_call_operand.vmem [shape: f32[96,1], index: 4, kind: input, shape index: {}]
  %s5 = inlined_call_operand.vmem [shape: f32[96,9], index: 5, kind: input, shape index: {}]
  %s6 = inlined_call_operand.vmem [shape: f32[96,1], index: 6, kind: input, shape index: {}]
  %s7 = inlined_call_operand.vmem [shape: f32[32,1], index: 7, kind: input, shape index: {}]
  %s8 = inlined_call_operand.vmem [shape: f32[32,32], index: 8, kind: input, shape index: {}]
  %s9 = inlined_call_operand.hbm [shape: bf16[2,32,256], index: 9, kind: output, shape index: {0}]
  %s10 = inlined_call_operand.hbm [shape: f32[2,32,32], index: 10, kind: output, shape index: {1}]
  %11 = xla_tuple %s9, %s10
  %s12 = sld [smem:[#allocation0]]
  $region165: #{tpu_custom_call.1} parent=0
    _
  %s14 = ssub.s32 1, %s12
  %s15 = scalar_select 0, %s14, %s12
  $region1: #{tpu_custom_call.1} parent=0
    #allocation7 [shape = 'u8[32768]{0}', space=vmem, size = 0x8000, scoped, tag = 'input window, operand 0']
    #allocation8 [shape = 'u8[32768]{0}', space=vmem, size = 0x8000, scoped, tag = 'input window, operand 1']
    #allocation9 [shape = 'u8[16384]{0}', space=vmem, size = 0x4000, scoped, tag = 'output window, operand 0']
    #allocation10 [shape = 's32[2]{0}', space=sflag, size = 0x8, scoped, tag = 'scoped memory for tpu_custom_call.1']
    #allocation11 [shape = 'u8[32768]{0}', space=vmem, size = 0x8000, scoped, tag = 'output window, operand 1']
    #allocation12 [shape = 's32[2]{0}', space=sflag, size = 0x8, scoped, tag = 'scoped memory for tpu_custom_call.1']
    %16 = vsyncpa [#allocation10], 0
    %s17 = scalar_lea.sflag [#allocation10], 1
    %18 = vsyncpa %s17, 0
    %19 = vsyncpa [#allocation12], 0
    %s20 = scalar_lea.sflag [#allocation12], 1
    %21 = vsyncpa %s20, 0
    loop: start=0, step=1, limit=8
    $region2: #{tpu_custom_call.1} parent=1 // loop_pre_header
      _
    $region3: #{tpu_custom_call.1} parent=1 // loop_header
      %s23 = sphi 0, %s27
      %p24 = scmp.ge.s32.totalorder %s23, 8
      %s30 = sphi 0, %s42
      %s31 = sphi 0, %s38
      %s32 = sphi 0, %s30
      %s33 = sphi 0, %s31
      %s34 = sphi 0, %s32
      %s35 = sphi 0, %s33
      %s51 = sphi 0, %s53
      %s54 = sphi 0, %s51
      %s55 = sphi 0, %s54
      %s71 = sphi 0, %s55
      %s83 = sphi 0, %s85
      %s86 = sphi 0, %s83
      %s87 = sphi 0, %s86
      %s103 = sphi 0, %s87
      %s107 = sphi 0, %s107
      %s109 = sphi 0, %s107
      %s110 = sphi 0, %s109
      %s124 = sphi 0, %s110
      %s128 = sphi 0, %s128
      %s130 = sphi 0, %s128
      %s131 = sphi 0, %s130
      %s145 = sphi 0, %s131
      %s149 = sphi 0, %s149
      %s151 = sphi 0, %s149
      %s152 = sphi 0, %s151
      %s166 = sphi 0, %s152
      %s170 = sphi 0, %s170
      %s172 = sphi 0, %s170
      %s173 = sphi 0, %s172
      %s187 = sphi 0, %s173
      %s191 = sphi 0, %s191
      %s193 = sphi 0, %s191
      %s194 = sphi 0, %s193
      %s208 = sphi 0, %s194
      %s212 = sphi 0, %s212
      %s214 = sphi 0, %s212
      %s215 = sphi 0, %s214
      %s229 = sphi 0, %s215
      %s233 = sphi 0, %s233
      %s235 = sphi 0, %s233
      %s236 = sphi 0, %s235
      %s250 = sphi 0, %s236
      %s264 = sphi 0, %s266
      %s267 = sphi 0, %s264
      %s268 = sphi 0, %s267
      %s284 = sphi 0, %s268
      %s290 = sphi 0, %s292
      %s293 = sphi 0, %s290
      %s294 = sphi 0, %s293
      %s310 = sphi 0, %s294
    $region4: #{tpu_custom_call.1} parent=1 // loop_header_branch
      %26 = sbr.rel (%p24) target = $region8
    $region5: #{tpu_custom_call.1} parent=1 // loop_body
      %s28 = ssub.s32 %s23, 1
      %s29 = ssub.s32 %s23, 2
      %s36 = sadd.s32 1, %s31
      %p37 = scmp.ge.s32.totalorder %s36, 3
      %s38 = scalar_select %p37, 0, %s36
      %s39 = sadd.s32 1, %s30
      %s40 = scalar_select %p37, %s39, %s30
      %p41 = scmp.ge.s32.totalorder %s40, 2
      %s42 = scalar_select %p41, 0, %s40
      %p43 = scmp.lt.s32.totalorder %s31, 1
      %s44 = scalar_select %p43, %s31, 1
      %p45 = scmp.lt.s32.totalorder %s38, 1
      %s46 = scalar_select %p45, %s38, 1
      %s47 = ssub.s32 %s30, %s42
      %s48 = ssub.s32 %s44, %s46
      %s49 = sor.u32 %s47, %s48
      %p50 = scmp.eq.s32.totalorder %s49, 0
      %s52 = sadd.s32 %s51, 1
      %s53 = scalar_select %p50, %s51, %s52
      %p56 = pneg %p50
      %p57 = scmp.eq.s32.totalorder %s23, 5
      %p58 = por %p56, %p57
      %p59 = scmp.ne.s32.totalorder %s51, %s54
      %p60 = scmp.eq.s32.totalorder %s23, 0
      %p61 = por %p59, %p60
      %p62 = scmp.ne.s32.totalorder %s51, %s54
      %p63 = scmp.eq.s32.totalorder %s28, 5
      %p64 = por %p62, %p63
      %p65 = scmp.ne.s32.totalorder %s54, %s55
      %p66 = scmp.eq.s32.totalorder %s28, 0
      %p67 = por %p65, %p66
      %p68 = scmp.ne.s32.totalorder %s54, %s55
      %p69 = scmp.eq.s32.totalorder %s29, 5
      %p70 = por %p68, %p69
      %p72 = scmp.ne.s32.totalorder %s55, %s71
      %p73 = scmp.eq.s32.totalorder %s29, 0
      %p74 = por %p72, %p73
      %p75 = scmp.lt.s32.totalorder %s31, 1
      %s76 = scalar_select %p75, %s31, 1
      %p77 = scmp.lt.s32.totalorder %s38, 1
      %s78 = scalar_select %p77, %s38, 1
      %s79 = ssub.s32 %s30, %s42
      %s80 = ssub.s32 %s76, %s78
      %s81 = sor.u32 %s79, %s80
      %p82 = scmp.eq.s32.totalorder %s81, 0
      %s84 = sadd.s32 %s83, 1
      %s85 = scalar_select %p82, %s83, %s84
      %p88 = pneg %p82
      %p89 = scmp.eq.s32.totalorder %s23, 5
      %p90 = por %p88, %p89
      %p91 = scmp.ne.s32.totalorder %s83, %s86
      %p92 = scmp.eq.s32.totalorder %s23, 0
      %p93 = por %p91, %p92
      %p94 = scmp.ne.s32.totalorder %s83, %s86
      %p95 = scmp.eq.s32.totalorder %s28, 5
      %p96 = por %p94, %p95
      %p97 = scmp.ne.s32.totalorder %s86, %s87
      %p98 = scmp.eq.s32.totalorder %s28, 0
      %p99 = por %p97, %p98
      %p100 = scmp.ne.s32.totalorder %s86, %s87
      %p101 = scmp.eq.s32.totalorder %s29, 5
      %p102 = por %p100, %p101
      %p104 = scmp.ne.s32.totalorder %s87, %s103
      %p105 = scmp.eq.s32.totalorder %s29, 0
      %p106 = por %p104, %p105
      %s108 = sadd.s32 %s107, 1
      %p111 = scmp.eq.s32.totalorder %s23, 5
      %p112 = scmp.ne.s32.totalorder %s107, %s109
      %p113 = scmp.eq.s32.totalorder %s23, 0
      %p114 = por %p112, %p113
      %p115 = scmp.ne.s32.totalorder %s107, %s109
      %p116 = scmp.eq.s32.totalorder %s28, 5
      %p117 = por %p115, %p116
      %p118 = scmp.ne.s32.totalorder %s109, %s110
      %p119 = scmp.eq.s32.totalorder %s28, 0
      %p120 = por %p118, %p119
      %p121 = scmp.ne.s32.totalorder %s109, %s110
      %p122 = scmp.eq.s32.totalorder %s29, 5
      %p123 = por %p121, %p122
      %p125 = scmp.ne.s32.totalorder %s110, %s124
      %p126 = scmp.eq.s32.totalorder %s29, 0
      %p127 = por %p125, %p126
      %s129 = sadd.s32 %s128, 1
      %p132 = scmp.eq.s32.totalorder %s23, 5
      %p133 = scmp.ne.s32.totalorder %s128, %s130
      %p134 = scmp.eq.s32.totalorder %s23, 0
      %p135 = por %p133, %p134
      %p136 = scmp.ne.s32.totalorder %s128, %s130
      %p137 = scmp.eq.s32.totalorder %s28, 5
      %p138 = por %p136, %p137
      %p139 = scmp.ne.s32.totalorder %s130, %s131
      %p140 = scmp.eq.s32.totalorder %s28, 0
      %p141 = por %p139, %p140
      %p142 = scmp.ne.s32.totalorder %s130, %s131
      %p143 = scmp.eq.s32.totalorder %s29, 5
      %p144 = por %p142, %p143
      %p146 = scmp.ne.s32.totalorder %s131, %s145
      %p147 = scmp.eq.s32.totalorder %s29, 0
      %p148 = por %p146, %p147
      %s150 = sadd.s32 %s149, 1
      %p153 = scmp.eq.s32.totalorder %s23, 5
      %p154 = scmp.ne.s32.totalorder %s149, %s151
      %p155 = scmp.eq.s32.totalorder %s23, 0
      %p156 = por %p154, %p155
      %p157 = scmp.ne.s32.totalorder %s149, %s151
      %p158 = scmp.eq.s32.totalorder %s28, 5
      %p159 = por %p157, %p158
      %p160 = scmp.ne.s32.totalorder %s151, %s152
      %p161 = scmp.eq.s32.totalorder %s28, 0
      %p162 = por %p160, %p161
      %p163 = scmp.ne.s32.totalorder %s151, %s152
      %p164 = scmp.eq.s32.totalorder %s29, 5
      %p165 = por %p163, %p164
      %p167 = scmp.ne.s32.totalorder %s152, %s166
      %p168 = scmp.eq.s32.totalorder %s29, 0
      %p169 = por %p167, %p168
      %s171 = sadd.s32 %s170, 1
      %p174 = scmp.eq.s32.totalorder %s23, 5
      %p175 = scmp.ne.s32.totalorder %s170, %s172
      %p176 = scmp.eq.s32.totalorder %s23, 0
      %p177 = por %p175, %p176
      %p178 = scmp.ne.s32.totalorder %s170, %s172
      %p179 = scmp.eq.s32.totalorder %s28, 5
      %p180 = por %p178, %p179
      %p181 = scmp.ne.s32.totalorder %s172, %s173
      %p182 = scmp.eq.s32.totalorder %s28, 0
      %p183 = por %p181, %p182
      %p184 = scmp.ne.s32.totalorder %s172, %s173
      %p185 = scmp.eq.s32.totalorder %s29, 5
      %p186 = por %p184, %p185
      %p188 = scmp.ne.s32.totalorder %s173, %s187
      %p189 = scmp.eq.s32.totalorder %s29, 0
      %p190 = por %p188, %p189
      %s192 = sadd.s32 %s191, 1
      %p195 = scmp.eq.s32.totalorder %s23, 5
      %p196 = scmp.ne.s32.totalorder %s191, %s193
      %p197 = scmp.eq.s32.totalorder %s23, 0
      %p198 = por %p196, %p197
      %p199 = scmp.ne.s32.totalorder %s191, %s193
      %p200 = scmp.eq.s32.totalorder %s28, 5
      %p201 = por %p199, %p200
      %p202 = scmp.ne.s32.totalorder %s193, %s194
      %p203 = scmp.eq.s32.totalorder %s28, 0
      %p204 = por %p202, %p203
      %p205 = scmp.ne.s32.totalorder %s193, %s194
      %p206 = scmp.eq.s32.totalorder %s29, 5
      %p207 = por %p205, %p206
      %p209 = scmp.ne.s32.totalorder %s194, %s208
      %p210 = scmp.eq.s32.totalorder %s29, 0
      %p211 = por %p209, %p210
      %s213 = sadd.s32 %s212, 1
      %p216 = scmp.eq.s32.totalorder %s23, 5
      %p217 = scmp.ne.s32.totalorder %s212, %s214
      %p218 = scmp.eq.s32.totalorder %s23, 0
      %p219 = por %p217, %p218
      %p220 = scmp.ne.s32.totalorder %s212, %s214
      %p221 = scmp.eq.s32.totalorder %s28, 5
      %p222 = por %p220, %p221
      %p223 = scmp.ne.s32.totalorder %s214, %s215
      %p224 = scmp.eq.s32.totalorder %s28, 0
      %p225 = por %p223, %p224
      %p226 = scmp.ne.s32.totalorder %s214, %s215
      %p227 = scmp.eq.s32.totalorder %s29, 5
      %p228 = por %p226, %p227
      %p230 = scmp.ne.s32.totalorder %s215, %s229
      %p231 = scmp.eq.s32.totalorder %s29, 0
      %p232 = por %p230, %p231
      %s234 = sadd.s32 %s233, 1
      %p237 = scmp.eq.s32.totalorder %s23, 5
      %p238 = scmp.ne.s32.totalorder %s233, %s235
      %p239 = scmp.eq.s32.totalorder %s23, 0
      %p240 = por %p238, %p239
      %p241 = scmp.ne.s32.totalorder %s233, %s235
      %p242 = scmp.eq.s32.totalorder %s28, 5
      %p243 = por %p241, %p242
      %p244 = scmp.ne.s32.totalorder %s235, %s236
      %p245 = scmp.eq.s32.totalorder %s28, 0
      %p246 = por %p244, %p245
      %p247 = scmp.ne.s32.totalorder %s235, %s236
      %p248 = scmp.eq.s32.totalorder %s29, 5
      %p249 = por %p247, %p248
      %p251 = scmp.ne.s32.totalorder %s236, %s250
      %p252 = scmp.eq.s32.totalorder %s29, 0
      %p253 = por %p251, %p252
      %s254 = ssub.s32 %s31, 1
      %p255 = scmp.gt.s32.totalorder %s254, 0
      %s256 = scalar_select %p255, %s254, 0
      %s257 = ssub.s32 %s38, 1
      %p258 = scmp.gt.s32.totalorder %s257, 0
      %s259 = scalar_select %p258, %s257, 0
      %s260 = ssub.s32 %s30, %s42
      %s261 = ssub.s32 %s256, %s259
      %s262 = sor.u32 %s260, %s261
      %p263 = scmp.eq.s32.totalorder %s262, 0
      %s265 = sadd.s32 %s264, 1
      %s266 = scalar_select %p263, %s264, %s265
      %p269 = pneg %p263
      %p270 = scmp.eq.s32.totalorder %s23, 5
      %p271 = por %p269, %p270
      %p272 = scmp.ne.s32.totalorder %s264, %s267
      %p273 = scmp.eq.s32.totalorder %s23, 0
      %p274 = por %p272, %p273
      %p275 = scmp.ne.s32.totalorder %s264, %s267
      %p276 = scmp.eq.s32.totalorder %s28, 5
      %p277 = por %p275, %p276
      %p278 = scmp.ne.s32.totalorder %s267, %s268
      %p279 = scmp.eq.s32.totalorder %s28, 0
      %p280 = por %p278, %p279
      %p281 = scmp.ne.s32.totalorder %s267, %s268
      %p282 = scmp.eq.s32.totalorder %s29, 5
      %p283 = por %p281, %p282
      %p285 = scmp.ne.s32.totalorder %s268, %s284
      %p286 = scmp.eq.s32.totalorder %s29, 0
      %p287 = por %p285, %p286
      %s288 = ssub.s32 %s30, %s42
      %p289 = scmp.eq.s32.totalorder %s288, 0
      %s291 = sadd.s32 %s290, 1
      %s292 = scalar_select %p289, %s290, %s291
      %p295 = pneg %p289
      %p296 = scmp.eq.s32.totalorder %s23, 5
      %p297 = por %p295, %p296
      %p298 = scmp.ne.s32.totalorder %s290, %s293
      %p299 = scmp.eq.s32.totalorder %s23, 0
      %p300 = por %p298, %p299
      %p301 = scmp.ne.s32.totalorder %s290, %s293
      %p302 = scmp.eq.s32.totalorder %s28, 5
      %p303 = por %p301, %p302
      %p304 = scmp.ne.s32.totalorder %s293, %s294
      %p305 = scmp.eq.s32.totalorder %s28, 0
      %p306 = por %p304, %p305
      %p307 = scmp.ne.s32.totalorder %s293, %s294
      %p308 = scmp.eq.s32.totalorder %s29, 5
      %p309 = por %p307, %p308
      %p311 = scmp.ne.s32.totalorder %s294, %s310
      %p312 = scmp.eq.s32.totalorder %s29, 0
      %p313 = por %p311, %p312
      %p314 = scmp.le.s32.totalorder 1, %s23
      %p315 = scmp.lt.s32.totalorder %s23, 7
      %p316 = pnand %p314, %p315
      %p317 = pneg %p316
      // Predicated region
      $region9: #{tpu_custom_call.1} parent=5 // pred_check
        _
      $region10: #{tpu_custom_call.1} parent=5 // pred_check_branch
        %319 = sbr.rel (%p316) target = $region12
      $region11: #{tpu_custom_call.1} parent=5 // pred_region
        %s320 = ssub.s32 %s23, 1
        // Predicated region
        $region13: #{tpu_custom_call.1} parent=11 // pred_check
          %p321 = pneg %p120
        $region14: #{tpu_custom_call.1} parent=11 // pred_check_branch
          %323 = sbr.rel (%p321) target = $region16
        $region15: #{tpu_custom_call.1} parent=11 // pred_region
          _
        $region16: #{tpu_custom_call.1} parent=11 // pred_fallthru
          _
        // Predicated region
        $region17: #{tpu_custom_call.1} parent=11 // pred_check
          %p324 = pneg %p141
        $region18: #{tpu_custom_call.1} parent=11 // pred_check_branch
          %326 = sbr.rel (%p324) target = $region20
        $region19: #{tpu_custom_call.1} parent=11 // pred_region
          _
        $region20: #{tpu_custom_call.1} parent=11 // pred_fallthru
          _
        // Predicated region
        $region21: #{tpu_custom_call.1} parent=11 // pred_check
          %p327 = pneg %p162
        $region22: #{tpu_custom_call.1} parent=11 // pred_check_branch
          %329 = sbr.rel (%p327) target = $region24
        $region23: #{tpu_custom_call.1} parent=11 // pred_region
          _
        $region24: #{tpu_custom_call.1} parent=11 // pred_fallthru
          _
        // Predicated region
        $region25: #{tpu_custom_call.1} parent=11 // pred_check
          %p330 = pneg %p183
        $region26: #{tpu_custom_call.1} parent=11 // pred_check_branch
          %332 = sbr.rel (%p330) target = $region28
        $region27: #{tpu_custom_call.1} parent=11 // pred_region
          _
        $region28: #{tpu_custom_call.1} parent=11 // pred_fallthru
          _
        // Predicated region
        $region29: #{tpu_custom_call.1} parent=11 // pred_check
          %p333 = pneg %p204
        $region30: #{tpu_custom_call.1} parent=11 // pred_check_branch
          %335 = sbr.rel (%p333) target = $region32
        $region31: #{tpu_custom_call.1} parent=11 // pred_region
          _
        $region32: #{tpu_custom_call.1} parent=11 // pred_fallthru
          _
        // Predicated region
        $region33: #{tpu_custom_call.1} parent=11 // pred_check
          %p336 = pneg %p225
        $region34: #{tpu_custom_call.1} parent=11 // pred_check_branch
          %338 = sbr.rel (%p336) target = $region36
        $region35: #{tpu_custom_call.1} parent=11 // pred_region
          _
        $region36: #{tpu_custom_call.1} parent=11 // pred_fallthru
          _
        // Predicated region
        $region37: #{tpu_custom_call.1} parent=11 // pred_check
          %p339 = pneg %p246
        $region38: #{tpu_custom_call.1} parent=11 // pred_check_branch
          %341 = sbr.rel (%p339) target = $region40
        $region39: #{tpu_custom_call.1} parent=11 // pred_region
          _
        $region40: #{tpu_custom_call.1} parent=11 // pred_fallthru
          _
      $region12: #{tpu_custom_call.1} parent=5 // pred_fallthru
        _
      %p342 = scmp.lt.s32.totalorder %s23, 6
      // Predicated region
      $region41: #{tpu_custom_call.1} parent=5 // pred_check
        %p343 = pneg %p342
      $region42: #{tpu_custom_call.1} parent=5 // pred_check_branch
        %345 = sbr.rel (%p343) target = $region44
      $region43: #{tpu_custom_call.1} parent=5 // pred_region
        // Predicated region
        $region45: #{tpu_custom_call.1} parent=43 // pred_check
          %p346 = pneg %p61
        $region46: #{tpu_custom_call.1} parent=43 // pred_check_branch
          %348 = sbr.rel (%p346) target = $region48
        $region47: #{tpu_custom_call.1} parent=43 // pred_region
          %s349 = sand.u32 %s51, 1
          %s350 = sand.u32 %s51, 1
          %s351 = smul.addr %s350, 32
          %s352 = scalar_lea.vmem [#allocation7], %s351
          %p353 = scmp.lt.s32.totalorder %s31, 1
          %s354 = scalar_select %p353, %s31, 1
          %s355 = smul.addr %s30, 8
          %s356 = sadd.s32 %s354, %s355
          %s357 = smul.addr %s356, 8
          %s358 = scalar_lea.vmem %s0, %s357
          // Predicated region
          $region49: #{tpu_custom_call.1} parent=47 // pred_check
            _
          $region50: #{tpu_custom_call.1} parent=47 // pred_check_branch
            %360 = sbr.rel (0) target = $region52
          $region51: #{tpu_custom_call.1} parent=47 // pred_region
            // Predicated region
            $region53: #{tpu_custom_call.1} parent=51 // pred_check
              _
            $region54: #{tpu_custom_call.1} parent=51 // pred_check_branch
              %362 = sbr.rel (0) target = $region56
            $region55: #{tpu_custom_call.1} parent=51 // pred_region
              // Predicated region
              $region68: #{tpu_custom_call.1} parent=55 // pred_check
                _
              $region69: #{tpu_custom_call.1} parent=55 // pred_check_branch
                %384 = sbr.rel (0) target = $region71
              $region70: #{tpu_custom_call.1} parent=55 // pred_region
                loop: start=0, step=1, limit=1
                $region72: #{tpu_custom_call.1} parent=70 // loop_pre_header
                  _
                $region73: #{tpu_custom_call.1} parent=70 // loop_header
                  %s386 = sphi 0, %s390
                  %p387 = scmp.ge.s32.totalorder %s386, 1
                  %s391 = sphi %s358, %s358
                  %s392 = sphi %s352, %s352
                $region74: #{tpu_custom_call.1} parent=70 // loop_header_branch
                  %389 = sbr.rel (%p387) target = $region78
                $region75: #{tpu_custom_call.1} parent=70 // loop_body
                  %v393 = vld [vmem:[%s391] sm:$0xff]
                  %394 = vst [vmem:[%s392] sm:$0xff] %v393
                  %v395 = vld [vmem:[%s391 + $0x10] sm:$0xff]
                  %396 = vst [vmem:[%s392 + $0x8] sm:$0xff] %v395
                  %v397 = vld [vmem:[%s391 + $0x20] sm:$0xff]
                  %398 = vst [vmem:[%s392 + $0x10] sm:$0xff] %v397
                  %v399 = vld [vmem:[%s391 + $0x30] sm:$0xff]
                  %400 = vst [vmem:[%s392 + $0x18] sm:$0xff] %v399
                $region76: #{tpu_custom_call.1} parent=70 // loop_footer
                  %s390 = sadd.s32 1, %s386
                $region77: #{tpu_custom_call.1} parent=70 // loop_footer_branch
                  %385 = sbr.rel target = $region73
                $region78: #{tpu_custom_call.1} parent=70 // loop_exit
                  _
              $region71: #{tpu_custom_call.1} parent=55 // pred_fallthru
                _
              // Predicated region
              $region79: #{tpu_custom_call.1} parent=55 // pred_check
                _
              $region80: #{tpu_custom_call.1} parent=55 // pred_check_branch
                %402 = sbr.rel target = $region82
              $region81: #{tpu_custom_call.1} parent=55 // pred_region
                _
              $region82: #{tpu_custom_call.1} parent=55 // pred_fallthru
                _
            $region56: #{tpu_custom_call.1} parent=51 // pred_fallthru
              _
            // Predicated region
            $region57: #{tpu_custom_call.1} parent=51 // pred_check
              _
            $region58: #{tpu_custom_call.1} parent=51 // pred_check_branch
              %364 = sbr.rel target = $region60
            $region59: #{tpu_custom_call.1} parent=51 // pred_region
              %s366 = ssub.s32 256, 1
              loop: start=0, step=1, limit=1
              $region61: #{tpu_custom_call.1} parent=59 // loop_pre_header
                _
              $region62: #{tpu_custom_call.1} parent=59 // loop_header
                %s368 = sphi 0, %s372
                %p369 = scmp.ge.s32.totalorder %s368, 1
                %s373 = sphi %s358, %s358
                %s374 = sphi %s352, %s352
              $region63: #{tpu_custom_call.1} parent=59 // loop_header_branch
                %371 = sbr.rel (%p369) target = $region67
              $region64: #{tpu_custom_call.1} parent=59 // loop_body
                %v375 = vld [vmem:[%s373] sm:%s366]
                %376 = vst [vmem:[%s374] sm:%s366] %v375
                %v377 = vld [vmem:[%s373 + $0x10] sm:%s366]
                %378 = vst [vmem:[%s374 + $0x8] sm:%s366] %v377
                %v379 = vld [vmem:[%s373 + $0x20] sm:%s366]
                %380 = vst [vmem:[%s374 + $0x10] sm:%s366] %v379
                %v381 = vld [vmem:[%s373 + $0x30] sm:%s366]
                %382 = vst [vmem:[%s374 + $0x18] sm:%s366] %v381
              $region65: #{tpu_custom_call.1} parent=59 // loop_footer
                %s372 = sadd.s32 1, %s368
              $region66: #{tpu_custom_call.1} parent=59 // loop_footer_branch
                %367 = sbr.rel target = $region62
              $region67: #{tpu_custom_call.1} parent=59 // loop_exit
                _
            $region60: #{tpu_custom_call.1} parent=51 // pred_fallthru
              _
          $region52: #{tpu_custom_call.1} parent=47 // pred_fallthru
            _
          %403 = vnop
        $region48: #{tpu_custom_call.1} parent=43 // pred_fallthru
          _
        // Predicated region
        $region83: #{tpu_custom_call.1} parent=43 // pred_check
          %p404 = pneg %p93
        $region84: #{tpu_custom_call.1} parent=43 // pred_check_branch
          %406 = sbr.rel (%p404) target = $region86
        $region85: #{tpu_custom_call.1} parent=43 // pred_region
          %s407 = sand.u32 %s83, 1
          %s408 = sand.u32 %s83, 1
          %s409 = smul.addr %s408, 32
          %s410 = scalar_lea.vmem [#allocation8], %s409
          %p411 = scmp.lt.s32.totalorder %s31, 1
          %s412 = scalar_select %p411, %s31, 1
          %s413 = smul.addr %s30, 8
          %s414 = sadd.s32 %s412, %s413
          %s415 = smul.addr %s414, 8
          %s416 = scalar_lea.vmem %s1, %s415
          // Predicated region
          $region87: #{tpu_custom_call.1} parent=85 // pred_check
            _
          $region88: #{tpu_custom_call.1} parent=85 // pred_check_branch
            %418 = sbr.rel (0) target = $region90
          $region89: #{tpu_custom_call.1} parent=85 // pred_region
            // Predicated region
            $region91: #{tpu_custom_call.1} parent=89 // pred_check
              _
            $region92: #{tpu_custom_call.1} parent=89 // pred_check_branch
              %420 = sbr.rel (0) target = $region94
            $region93: #{tpu_custom_call.1} parent=89 // pred_region
              // Predicated region
              $region106: #{tpu_custom_call.1} parent=93 // pred_check
                _
              $region107: #{tpu_custom_call.1} parent=93 // pred_check_branch
                %442 = sbr.rel (0) target = $region109
              $region108: #{tpu_custom_call.1} parent=93 // pred_region
                loop: start=0, step=1, limit=1
                $region110: #{tpu_custom_call.1} parent=108 // loop_pre_header
                  _
                $region111: #{tpu_custom_call.1} parent=108 // loop_header
                  %s444 = sphi 0, %s448
                  %p445 = scmp.ge.s32.totalorder %s444, 1
                  %s449 = sphi %s416, %s416
                  %s450 = sphi %s410, %s410
                $region112: #{tpu_custom_call.1} parent=108 // loop_header_branch
                  %447 = sbr.rel (%p445) target = $region116
                $region113: #{tpu_custom_call.1} parent=108 // loop_body
                  %v451 = vld [vmem:[%s449] sm:$0xff]
                  %452 = vst [vmem:[%s450] sm:$0xff] %v451
                  %v453 = vld [vmem:[%s449 + $0x10] sm:$0xff]
                  %454 = vst [vmem:[%s450 + $0x8] sm:$0xff] %v453
                  %v455 = vld [vmem:[%s449 + $0x20] sm:$0xff]
                  %456 = vst [vmem:[%s450 + $0x10] sm:$0xff] %v455
                  %v457 = vld [vmem:[%s449 + $0x30] sm:$0xff]
                  %458 = vst [vmem:[%s450 + $0x18] sm:$0xff] %v457
                $region114: #{tpu_custom_call.1} parent=108 // loop_footer
                  %s448 = sadd.s32 1, %s444
                $region115: #{tpu_custom_call.1} parent=108 // loop_footer_branch
                  %443 = sbr.rel target = $region111
                $region116: #{tpu_custom_call.1} parent=108 // loop_exit
                  _
              $region109: #{tpu_custom_call.1} parent=93 // pred_fallthru
                _
              // Predicated region
              $region117: #{tpu_custom_call.1} parent=93 // pred_check
                _
              $region118: #{tpu_custom_call.1} parent=93 // pred_check_branch
                %460 = sbr.rel target = $region120
              $region119: #{tpu_custom_call.1} parent=93 // pred_region
                _
              $region120: #{tpu_custom_call.1} parent=93 // pred_fallthru
                _
            $region94: #{tpu_custom_call.1} parent=89 // pred_fallthru
              _
            // Predicated region
            $region95: #{tpu_custom_call.1} parent=89 // pred_check
              _
            $region96: #{tpu_custom_call.1} parent=89 // pred_check_branch
              %422 = sbr.rel target = $region98
            $region97: #{tpu_custom_call.1} parent=89 // pred_region
              %s424 = ssub.s32 256, 1
              loop: start=0, step=1, limit=1
              $region99: #{tpu_custom_call.1} parent=97 // loop_pre_header
                _
              $region100: #{tpu_custom_call.1} parent=97 // loop_header
                %s426 = sphi 0, %s430
                %p427 = scmp.ge.s32.totalorder %s426, 1
                %s431 = sphi %s416, %s416
                %s432 = sphi %s410, %s410
              $region101: #{tpu_custom_call.1} parent=97 // loop_header_branch
                %429 = sbr.rel (%p427) target = $region105
              $region102: #{tpu_custom_call.1} parent=97 // loop_body
                %v433 = vld [vmem:[%s431] sm:%s424]
                %434 = vst [vmem:[%s432] sm:%s424] %v433
                %v435 = vld [vmem:[%s431 + $0x10] sm:%s424]
                %436 = vst [vmem:[%s432 + $0x8] sm:%s424] %v435
                %v437 = vld [vmem:[%s431 + $0x20] sm:%s424]
                %438 = vst [vmem:[%s432 + $0x10] sm:%s424] %v437
                %v439 = vld [vmem:[%s431 + $0x30] sm:%s424]
                %440 = vst [vmem:[%s432 + $0x18] sm:%s424] %v439
              $region103: #{tpu_custom_call.1} parent=97 // loop_footer
                %s430 = sadd.s32 1, %s426
              $region104: #{tpu_custom_call.1} parent=97 // loop_footer_branch
                %425 = sbr.rel target = $region100
              $region105: #{tpu_custom_call.1} parent=97 // loop_exit
                _
            $region98: #{tpu_custom_call.1} parent=89 // pred_fallthru
              _
          $region90: #{tpu_custom_call.1} parent=85 // pred_fallthru
            _
          %461 = vnop
        $region86: #{tpu_custom_call.1} parent=43 // pred_fallthru
          _
      $region44: #{tpu_custom_call.1} parent=5 // pred_fallthru
        _
      %p462 = scmp.le.s32.totalorder 1, %s23
      %p463 = scmp.lt.s32.totalorder %s23, 7
      %p464 = pnand %p462, %p463
      %p465 = pneg %p464
      // Predicated region
      $region121: #{tpu_custom_call.1} parent=5 // pred_check
        _
      $region122: #{tpu_custom_call.1} parent=5 // pred_check_branch
        %467 = sbr.rel (%p464) target = $region124
      $region123: #{tpu_custom_call.1} parent=5 // pred_region
        %s468 = ssub.s32 %s23, 1
        %s469 = sand.u32 %s54, 1
        %s470 = sand.u32 %s54, 1
        %s471 = smul.addr %s470, 32
        %s472 = scalar_lea.vmem [#allocation7], %s471
        // Predicated region
        $region125: #{tpu_custom_call.1} parent=123 // pred_check
          %p473 = pneg %p67
        $region126: #{tpu_custom_call.1} parent=123 // pred_check_branch
          %475 = sbr.rel (%p473) target = $region128
        $region127: #{tpu_custom_call.1} parent=123 // pred_region
          _
        $region128: #{tpu_custom_call.1} parent=123 // pred_fallthru
          _
        %s476 = sand.u32 %s86, 1
        %s477 = sand.u32 %s86, 1
        %s478 = smul.addr %s477, 32
        %s479 = scalar_lea.vmem [#allocation8], %s478
        // Predicated region
        $region129: #{tpu_custom_call.1} parent=123 // pred_check
          %p480 = pneg %p99
        $region130: #{tpu_custom_call.1} parent=123 // pred_check_branch
          %482 = sbr.rel (%p480) target = $region132
        $region131: #{tpu_custom_call.1} parent=123 // pred_region
          _
        $region132: #{tpu_custom_call.1} parent=123 // pred_fallthru
          _
        %s483 = sand.u32 %s54, 1
        %s484 = sand.u32 %s54, 1
        %s485 = smul.addr %s484, 32
        %s486 = scalar_lea.vmem [#allocation7], %s485
        %p487 = pneg %p67
        %p488 = pneg %p64
        %s489 = sand.u32 %s86, 1
        %s490 = sand.u32 %s86, 1
        %s491 = smul.addr %s490, 32
        %s492 = scalar_lea.vmem [#allocation8], %s491
        %p493 = pneg %p99
        %p494 = pneg %p96
        %p495 = pneg %p120
        %p496 = pneg %p117
        %p497 = pneg %p141
        %p498 = pneg %p138
        %p499 = pneg %p162
        %p500 = pneg %p159
        %p501 = pneg %p183
        %p502 = pneg %p180
        %p503 = pneg %p204
        %p504 = pneg %p201
        %p505 = pneg %p225
        %p506 = pneg %p222
        %p507 = pneg %p246
        %p508 = pneg %p243
        %p509 = pneg %p280
        %p510 = pneg %p277
        %s511 = sand.u32 %s267, 1
        %s512 = scalar_lea.sflag [#allocation10], %s511
        %s513 = sand.u32 %s267, 1
        %s514 = smul.addr %s513, 16
        %s515 = scalar_lea.vmem [#allocation9], %s514
        %p516 = pneg %p306
        %p517 = pneg %p303
        %s518 = sand.u32 %s293, 1
        %s519 = scalar_lea.sflag [#allocation12], %s518
        %s520 = sand.u32 %s293, 1
        %s521 = smul.addr %s520, 32
        %s522 = scalar_lea.vmem [#allocation11], %s521
        %p523 = scmp.lt.s32.totalorder %s33, 1
        %s524 = scalar_select %p523, %s33, 1
        %p525 = scmp.lt.s32.totalorder %s33, 1
        %s526 = scalar_select %p525, %s33, 1
        %s527 = ssub.s32 %s33, 1
        %p528 = scmp.gt.s32.totalorder %s527, 0
        %s529 = scalar_select %p528, %s527, 0
        %p531 = scmp.eq.s32.totalorder %s33, 0
        // Predicated region
        $region133: #{tpu_custom_call.1} parent=123 // pred_check
          %p532 = pneg %p531
        $region134: #{tpu_custom_call.1} parent=123 // pred_check_branch
          %534 = sbr.rel (%p532) target = $region136
        $region135: #{tpu_custom_call.1} parent=123 // pred_region
          %vm535 = vcmask 261120
          %536 = vst.msk [vmem:[#allocation4] sm:$0xff] %vm535, 0.0
          %537 = vst.msk [vmem:[#allocation4 + $0x8] sm:$0xff] %vm535, 0.0
          %538 = vst.msk [vmem:[#allocation4 + $0x10] sm:$0xff] %vm535, 0.0
          %539 = vst.msk [vmem:[#allocation4 + $0x18] sm:$0xff] %vm535, 0.0
          %vm540 = vcmask 7168
          %541 = vst.msk [vmem:[#allocation5] sm:$0xff] %vm540, 0.0
          %542 = vst.msk [vmem:[#allocation5 + $0x8] sm:$0xff] %vm540, 0.0
          %543 = vst.msk [vmem:[#allocation5 + $0x10] sm:$0xff] %vm540, 0.0
          %544 = vst.msk [vmem:[#allocation5 + $0x18] sm:$0xff] %vm540, 0.0
          %545 = vst.msk [vmem:[#allocation6] sm:$0xff] %vm540, 0.0
          %546 = vst.msk [vmem:[#allocation6 + $0x8] sm:$0xff] %vm540, 0.0
          %547 = vst.msk [vmem:[#allocation6 + $0x10] sm:$0xff] %vm540, 0.0
          %548 = vst.msk [vmem:[#allocation6 + $0x18] sm:$0xff] %vm540, 0.0
        $region136: #{tpu_custom_call.1} parent=123 // pred_fallthru
          _
        %v549 = vld [vmem:[%s472] sm:$0xff]
        %v550 = vld [vmem:[%s472 + $0x8] sm:$0xff]
        %v551 = vld [vmem:[%s472 + $0x10] sm:$0xff]
        %v552 = vld [vmem:[%s472 + $0x18] sm:$0xff]
        %v553 = vpack.c.bf16 %v550, %v549
        %v554 = vpack.c.bf16 %v552, %v551
        %v555 = vld [vmem:[%s479] sm:$0xff]
        %v556 = vld [vmem:[%s479 + $0x8] sm:$0xff]
        %v557 = vld [vmem:[%s479 + $0x10] sm:$0xff]
        %v558 = vld [vmem:[%s479 + $0x18] sm:$0xff]
        %v559 = vpack.c.bf16 %v556, %v555
        %v560 = vpack.c.bf16 %v558, %v557
        %v561 = vld [vmem:[%s2] sm:$0xff]
        %v562 = vld [vmem:[%s2 + $0x8] sm:$0xff]
        %v563 = vld [vmem:[%s2 + $0x10] sm:$0xff]
        %v564 = vld [vmem:[%s2 + $0x18] sm:$0xff]
        %v565 = vpack.c.bf16 %v562, %v561
        %v566 = vpack.c.bf16 %v564, %v563
        %vm567 = vcmask 261120
        %v569 = vsel %vm567, %v565, 0
        %v572 = vsel %vm567, %v566, 0
        %574 = vmatprep.subr.bf16.mxu0 0
        %575 = vmatpush1.bf16.msra.mxu0 0
        %576 = vmatprep.subr.bf16.mxu0 0
        %577 = vmatpush1.bf16.msra.mxu0 0
        %578 = vmatprep.subr.bf16.mxu0 0
        %579 = vmatpush1.bf16.msra.mxu0 0
        %580 = vmatprep.subr.bf16.mxu0 0
        %581 = vmatpush1.bf16.msra.mxu0 0
        %582 = vmatprep.subr.bf16.mxu0 0
        %583 = vmatpush1.bf16.msra.mxu0 0
        %584 = vmatprep.subr.bf16.mxu0 0
        %585 = vmatpush1.bf16.msra.mxu0 0
        %586 = vmatprep.subr.bf16.mxu0 0
        %587 = vmatpush1.bf16.msra.mxu0 %v554
        %588 = vmatprep.subr.bf16.mxu0 0
        %589 = vmatpush1.bf16.msra.mxu0 %v553
        %590 = vmatprep.subr.bf16.mxu0 0
        %591 = vmatpush2.bf16.msra.mxu0 0
        %592 = vmatprep.subr.bf16.mxu0 0
        %593 = vmatpush2.bf16.msra.mxu0 0
        %594 = vmatprep.subr.bf16.mxu0 0
        %595 = vmatpush2.bf16.msra.mxu0 0
        %596 = vmatprep.subr.bf16.mxu0 0
        %597 = vmatpush2.bf16.msra.mxu0 0
        %598 = vmatprep.subr.bf16.mxu0 0
        %599 = vmatpush2.bf16.msra.mxu0 0
        %600 = vmatprep.subr.bf16.mxu0 0
        %601 = vmatpush2.bf16.msra.mxu0 0
        %602 = vmatprep.subr.bf16.mxu0 0
        %603 = vmatpush2.bf16.msra.mxu0 0
        %604 = vmatprep.subr.bf16.mxu0 0
        %605 = vmatpush2.bf16.msra.mxu0 0
        %606 = vmatprep.mubr.bf16.mxu0 0
        %607 = vmatmul.mubr.bf16.gmra.mxu0 %v569
        %v608 = vpop.f32.mrf.mxu0
        %v609 = vadd.f32 0.0, %v608
        %v610 = vpop.f32.mrf.mxu0
        %v611 = vpop.f32.mrf.mxu0
        %v612 = vadd.f32 0.0, %v611
        %v613 = vpop.f32.mrf.mxu0
        %614 = vmatprep.mubr.bf16.mxu0 0
        %615 = vmatmul.mubr.bf16.gmra.mxu0 %v572
        %v616 = vpop.f32.mrf.mxu0
        %v617 = vadd.f32 0.0, %v616
        %v618 = vpop.f32.mrf.mxu0
        %v619 = vpop.f32.mrf.mxu0
        %v620 = vadd.f32 0.0, %v619
        %v621 = vpop.f32.mrf.mxu0
        %622 = vdwg.mxu0
        %v623 = vld [vmem:[%s3] sm:$0xff]
        %v624 = vld [vmem:[%s3 + $0x8] sm:$0xff]
        %v625 = vld [vmem:[%s3 + $0x10] sm:$0xff]
        %v626 = vld [vmem:[%s3 + $0x18] sm:$0xff]
        %v627 = vld [vmem:[%s3 + $0x20] sm:$0xff]
        %v628 = vld [vmem:[%s3 + $0x28] sm:$0xff]
        %v629 = vld [vmem:[%s3 + $0x30] sm:$0xff]
        %v630 = vld [vmem:[%s3 + $0x38] sm:$0xff]
        %v631 = vpack.c.bf16 %v624, %v623
        %v632 = vpack.c.bf16 %v626, %v625
        %v633 = vpack.c.bf16 %v628, %v627
        %v634 = vpack.c.bf16 %v630, %v629
        %v636 = vsel %vm567, %v631, 0
        %v639 = vsel %vm567, %v632, 0
        %v642 = vsel %vm567, %v633, 0
        %v645 = vsel %vm567, %v634, 0
        %647 = vmatprep.subr.bf16.mxu0 0
        %648 = vmatpush1.bf16.msra.mxu0 0
        %649 = vmatprep.subr.bf16.mxu0 0
        %650 = vmatpush1.bf16.msra.mxu0 0
        %651 = vmatprep.subr.bf16.mxu0 0
        %652 = vmatpush1.bf16.msra.mxu0 0
        %653 = vmatprep.subr.bf16.mxu0 0
        %654 = vmatpush1.bf16.msra.mxu0 0
        %655 = vmatprep.subr.bf16.mxu0 0
        %656 = vmatpush1.bf16.msra.mxu0 0
        %657 = vmatprep.subr.bf16.mxu0 0
        %658 = vmatpush1.bf16.msra.mxu0 0
        %659 = vmatprep.subr.bf16.mxu0 0
        %660 = vmatpush1.bf16.msra.mxu0 %v560
        %661 = vmatprep.subr.bf16.mxu0 0
        %662 = vmatpush1.bf16.msra.mxu0 %v559
        %663 = vmatprep.subr.bf16.mxu0 0
        %664 = vmatpush2.bf16.msra.mxu0 0
        %665 = vmatprep.subr.bf16.mxu0 0
        %666 = vmatpush2.bf16.msra.mxu0 0
        %667 = vmatprep.subr.bf16.mxu0 0
        %668 = vmatpush2.bf16.msra.mxu0 0
        %669 = vmatprep.subr.bf16.mxu0 0
        %670 = vmatpush2.bf16.msra.mxu0 0
        %671 = vmatprep.subr.bf16.mxu0 0
        %672 = vmatpush2.bf16.msra.mxu0 0
        %673 = vmatprep.subr.bf16.mxu0 0
        %674 = vmatpush2.bf16.msra.mxu0 0
        %675 = vmatprep.subr.bf16.mxu0 0
        %676 = vmatpush2.bf16.msra.mxu0 0
        %677 = vmatprep.subr.bf16.mxu0 0
        %678 = vmatpush2.bf16.msra.mxu0 0
        %679 = vmatprep.mubr.bf16.mxu0 0
        %680 = vmatmul.mubr.bf16.gmra.mxu0 %v636
        %v681 = vpop.f32.mrf.mxu0
        %v682 = vadd.f32 0.0, %v681
        %v683 = vpop.f32.mrf.mxu0
        %v684 = vpop.f32.mrf.mxu0
        %v685 = vadd.f32 0.0, %v684
        %v686 = vpop.f32.mrf.mxu0
        %687 = vmatprep.mubr.bf16.mxu0 0
        %688 = vmatmul.mubr.bf16.gmra.mxu0 %v639
        %v689 = vpop.f32.mrf.mxu0
        %v690 = vadd.f32 0.0, %v689
        %v691 = vpop.f32.mrf.mxu0
        %v692 = vpop.f32.mrf.mxu0
        %v693 = vadd.f32 0.0, %v692
        %v694 = vpop.f32.mrf.mxu0
        %695 = vmatprep.mubr.bf16.mxu0 0
        %696 = vmatmul.mubr.bf16.gmra.mxu0 %v642
        %v697 = vpop.f32.mrf.mxu0
        %v698 = vadd.f32 0.0, %v697
        %v699 = vpop.f32.mrf.mxu0
        %v700 = vpop.f32.mrf.mxu0
        %v701 = vadd.f32 0.0, %v700
        %v702 = vpop.f32.mrf.mxu0
        %703 = vmatprep.mubr.bf16.mxu0 0
        %704 = vmatmul.mubr.bf16.gmra.mxu0 %v645
        %v705 = vpop.f32.mrf.mxu0
        %v706 = vadd.f32 0.0, %v705
        %v707 = vpop.f32.mrf.mxu0
        %v708 = vpop.f32.mrf.mxu0
        %v709 = vadd.f32 0.0, %v708
        %v710 = vpop.f32.mrf.mxu0
        %711 = vdwg.mxu0
        %v712 = vld [vmem:[%s4] sm:$0xff]
        %v713 = vld [vmem:[%s4 + $0x8] sm:$0xff]
        %v714 = vld [vmem:[%s4 + $0x10] sm:$0xff]
        %v715 = vld [vmem:[%s4 + $0x18] sm:$0xff]
        %v716 = vld [vmem:[%s4 + $0x20] sm:$0xff]
        %v717 = vld [vmem:[%s4 + $0x28] sm:$0xff]
        %v718 = vld [vmem:[%s4 + $0x30] sm:$0xff]
        %v719 = vld [vmem:[%s4 + $0x38] sm:$0xff]
        %v720 = vld [vmem:[%s4 + $0x40] sm:$0xff]
        %v721 = vld [vmem:[%s4 + $0x48] sm:$0xff]
        %v722 = vld [vmem:[%s4 + $0x50] sm:$0xff]
        %v723 = vld [vmem:[%s4 + $0x58] sm:$0xff]
        %725 = vset.pattern.permute.xlu0 0
        %726 = vperm.xlu0 %725, %v712
        %v727 = vpop.permute.xlu0 %726
        %730 = vset.pattern.permute.xlu0 0
        %731 = vperm.xlu0 %730, %v713
        %v732 = vpop.permute.xlu0 %731
        %735 = vset.pattern.permute.xlu0 0
        %736 = vperm.xlu0 %735, %v714
        %v737 = vpop.permute.xlu0 %736
        %740 = vset.pattern.permute.xlu0 0
        %741 = vperm.xlu0 %740, %v715
        %v742 = vpop.permute.xlu0 %741
        %745 = vset.pattern.permute.xlu0 0
        %746 = vperm.xlu0 %745, %v716
        %v747 = vpop.permute.xlu0 %746
        %750 = vset.pattern.permute.xlu0 0
        %751 = vperm.xlu0 %750, %v717
        %v752 = vpop.permute.xlu0 %751
        %755 = vset.pattern.permute.xlu0 0
        %756 = vperm.xlu0 %755, %v718
        %v757 = vpop.permute.xlu0 %756
        %760 = vset.pattern.permute.xlu0 0
        %761 = vperm.xlu0 %760, %v719
        %v762 = vpop.permute.xlu0 %761
        %765 = vset.pattern.permute.xlu0 0
        %766 = vperm.xlu0 %765, %v720
        %v767 = vpop.permute.xlu0 %766
        %770 = vset.pattern.permute.xlu0 0
        %771 = vperm.xlu0 %770, %v721
        %v772 = vpop.permute.xlu0 %771
        %775 = vset.pattern.permute.xlu0 0
        %776 = vperm.xlu0 %775, %v722
        %v777 = vpop.permute.xlu0 %776
        %780 = vset.pattern.permute.xlu0 0
        %781 = vperm.xlu0 %780, %v723
        %v782 = vpop.permute.xlu0 %781
        %v784 = vadd.f32 %v609, %v727
        %v785 = vadd.f32 %v612, %v732
        %v786 = vadd.f32 %v617, %v737
        %v787 = vadd.f32 %v620, %v742
        %v788 = vadd.f32 %v682, %v747
        %v789 = vadd.f32 %v685, %v752
        %v790 = vadd.f32 %v690, %v757
        %v791 = vadd.f32 %v693, %v762
        %v792 = vadd.f32 %v698, %v767
        %v793 = vadd.f32 %v701, %v772
        %v794 = vadd.f32 %v706, %v777
        %v795 = vadd.f32 %v709, %v782
        %p796 = scmp.gt.s32.totalorder %s33, 0
        // Predicated region
        $region137: #{tpu_custom_call.1} parent=123 // pred_check
          %p797 = pneg %p796
        $region138: #{tpu_custom_call.1} parent=123 // pred_check_branch
          %799 = sbr.rel (%p797) target = $region140
        $region139: #{tpu_custom_call.1} parent=123 // pred_region
          %s800 = ssub.s32 %s33, 1
          %v801 = vld [vmem:[#allocation2] sm:$0xff]
          %v802 = vld [vmem:[#allocation2 + $0x8] sm:$0xff]
          %v803 = vld [vmem:[#allocation2 + $0x10] sm:$0xff]
          %v804 = vld [vmem:[#allocation2 + $0x18] sm:$0xff]
          %v805 = vld [vmem:[#allocation2 + $0x20] sm:$0xff]
          %v806 = vld [vmem:[#allocation2 + $0x28] sm:$0xff]
          %v807 = vld [vmem:[#allocation2 + $0x30] sm:$0xff]
          %v808 = vld [vmem:[#allocation2 + $0x38] sm:$0xff]
          %v809 = vld [vmem:[#allocation2 + $0x40] sm:$0xff]
          %v810 = vld [vmem:[#allocation2 + $0x48] sm:$0xff]
          %v811 = vld [vmem:[#allocation2 + $0x50] sm:$0xff]
          %v812 = vld [vmem:[#allocation2 + $0x58] sm:$0xff]
          %p813 = scmp.gt.s32.totalorder %s800, 0
          %v814 = vld [vmem:[#allocation3] sm:$0xff]
          %v815 = vld [vmem:[#allocation3 + $0x8] sm:$0xff]
          %v816 = vld [vmem:[#allocation3 + $0x10] sm:$0xff]
          %v817 = vld [vmem:[#allocation3 + $0x18] sm:$0xff]
          %v818 = vld [vmem:[#allocation3 + $0x20] sm:$0xff]
          %v819 = vld [vmem:[#allocation3 + $0x28] sm:$0xff]
          %v820 = vld [vmem:[#allocation3 + $0x30] sm:$0xff]
          %v821 = vld [vmem:[#allocation3 + $0x38] sm:$0xff]
          %v822 = vld [vmem:[#allocation3 + $0x40] sm:$0xff]
          %v823 = vld [vmem:[#allocation3 + $0x48] sm:$0xff]
          %v824 = vld [vmem:[#allocation3 + $0x50] sm:$0xff]
          %v825 = vld [vmem:[#allocation3 + $0x58] sm:$0xff]
          %s826 = scalar_select %p813, 1, 0
          %v827 = vstv %s826
          %vm828 = vcmp.eq.s32.totalorder %v827, 1
          %v829 = vsel %vm828, %v814, 0.0
          %v830 = vsel %vm828, %v815, 0.0
          %v831 = vsel %vm828, %v816, 0.0
          %v832 = vsel %vm828, %v817, 0.0
          %v833 = vsel %vm828, %v818, 0.0
          %v834 = vsel %vm828, %v819, 0.0
          %v835 = vsel %vm828, %v820, 0.0
          %v836 = vsel %vm828, %v821, 0.0
          %v837 = vsel %vm828, %v822, 0.0
          %v838 = vsel %vm828, %v823, 0.0
          %v839 = vsel %vm828, %v824, 0.0
          %v840 = vsel %vm828, %v825, 0.0
          %p841 = scmp.lt.s32.totalorder %s800, 1
          %s842 = scalar_select %p841, 1, 0
          %v843 = vstv %s842
          %vm844 = vcmp.eq.s32.totalorder %v843, 1
          %v845 = vsel %vm844, %v784, 0.0
          %v846 = vsel %vm844, %v785, 0.0
          %v847 = vsel %vm844, %v786, 0.0
          %v848 = vsel %vm844, %v787, 0.0
          %v849 = vsel %vm844, %v788, 0.0
          %v850 = vsel %vm844, %v789, 0.0
          %v851 = vsel %vm844, %v790, 0.0
          %v852 = vsel %vm844, %v791, 0.0
          %v853 = vsel %vm844, %v792, 0.0
          %v854 = vsel %vm844, %v793, 0.0
          %v855 = vsel %vm844, %v794, 0.0
          %v856 = vsel %vm844, %v795, 0.0
          %869 = vrot.lane.b32.xlu0 %v801, 16
          %v870 = vpop.permute.xlu0 %869
          %871 = vrot.lane.b32.xlu0 %v802, 16
          %v872 = vpop.permute.xlu0 %871
          %873 = vrot.lane.b32.xlu0 %v803, 16
          %v874 = vpop.permute.xlu0 %873
          %875 = vrot.lane.b32.xlu0 %v804, 16
          %v876 = vpop.permute.xlu0 %875
          %877 = vrot.lane.b32.xlu0 %v805, 16
          %v878 = vpop.permute.xlu0 %877
          %879 = vrot.lane.b32.xlu0 %v806, 16
          %v880 = vpop.permute.xlu0 %879
          %881 = vrot.lane.b32.xlu0 %v807, 16
          %v882 = vpop.permute.xlu0 %881
          %883 = vrot.lane.b32.xlu0 %v808, 16
          %v884 = vpop.permute.xlu0 %883
          %885 = vrot.lane.b32.xlu0 %v809, 16
          %v886 = vpop.permute.xlu0 %885
          %887 = vrot.lane.b32.xlu0 %v810, 16
          %v888 = vpop.permute.xlu0 %887
          %889 = vrot.lane.b32.xlu0 %v811, 16
          %v890 = vpop.permute.xlu0 %889
          %891 = vrot.lane.b32.xlu0 %v812, 16
          %v892 = vpop.permute.xlu0 %891
          %vm905 = vcmask 130048
          %v906 = vsel %vm905, %v829, %v870
          %v907 = vsel %vm905, %v830, %v872
          %v908 = vsel %vm905, %v831, %v874
          %v909 = vsel %vm905, %v832, %v876
          %v910 = vsel %vm905, %v833, %v878
          %v911 = vsel %vm905, %v834, %v880
          %v912 = vsel %vm905, %v835, %v882
          %v913 = vsel %vm905, %v836, %v884
          %v914 = vsel %vm905, %v837, %v886
          %v915 = vsel %vm905, %v838, %v888
          %v916 = vsel %vm905, %v839, %v890
          %v917 = vsel %vm905, %v840, %v892
          %918 = vrot.lane.b32.xlu0 %v801, 112
          %v919 = vpop.permute.xlu0 %918
          %920 = vrot.lane.b32.xlu0 %v802, 112
          %v921 = vpop.permute.xlu0 %920
          %922 = vrot.lane.b32.xlu0 %v803, 112
          %v923 = vpop.permute.xlu0 %922
          %924 = vrot.lane.b32.xlu0 %v804, 112
          %v925 = vpop.permute.xlu0 %924
          %926 = vrot.lane.b32.xlu0 %v805, 112
          %v927 = vpop.permute.xlu0 %926
          %928 = vrot.lane.b32.xlu0 %v806, 112
          %v929 = vpop.permute.xlu0 %928
          %930 = vrot.lane.b32.xlu0 %v807, 112
          %v931 = vpop.permute.xlu0 %930
          %932 = vrot.lane.b32.xlu0 %v808, 112
          %v933 = vpop.permute.xlu0 %932
          %934 = vrot.lane.b32.xlu0 %v809, 112
          %v935 = vpop.permute.xlu0 %934
          %936 = vrot.lane.b32.xlu0 %v810, 112
          %v937 = vpop.permute.xlu0 %936
          %938 = vrot.lane.b32.xlu0 %v811, 112
          %v939 = vpop.permute.xlu0 %938
          %940 = vrot.lane.b32.xlu0 %v812, 112
          %v941 = vpop.permute.xlu0 %940
          %966 = vrot.lane.b32.xlu0 %v845, 112
          %v967 = vpop.permute.xlu0 %966
          %968 = vrot.lane.b32.xlu0 %v846, 112
          %v969 = vpop.permute.xlu0 %968
          %970 = vrot.lane.b32.xlu0 %v847, 112
          %v971 = vpop.permute.xlu0 %970
          %972 = vrot.lane.b32.xlu0 %v848, 112
          %v973 = vpop.permute.xlu0 %972
          %974 = vrot.lane.b32.xlu0 %v849, 112
          %v975 = vpop.permute.xlu0 %974
          %976 = vrot.lane.b32.xlu0 %v850, 112
          %v977 = vpop.permute.xlu0 %976
          %978 = vrot.lane.b32.xlu0 %v851, 112
          %v979 = vpop.permute.xlu0 %978
          %980 = vrot.lane.b32.xlu0 %v852, 112
          %v981 = vpop.permute.xlu0 %980
          %982 = vrot.lane.b32.xlu0 %v853, 112
          %v983 = vpop.permute.xlu0 %982
          %984 = vrot.lane.b32.xlu0 %v854, 112
          %v985 = vpop.permute.xlu0 %984
          %986 = vrot.lane.b32.xlu0 %v855, 112
          %v987 = vpop.permute.xlu0 %986
          %988 = vrot.lane.b32.xlu0 %v856, 112
          %v989 = vpop.permute.xlu0 %988
          %vm1002 = vcmask 916480
          %v1003 = vsel %vm1002, %v919, %v967
          %v1004 = vsel %vm1002, %v921, %v969
          %v1005 = vsel %vm1002, %v923, %v971
          %v1006 = vsel %vm1002, %v925, %v973
          %v1007 = vsel %vm1002, %v927, %v975
          %v1008 = vsel %vm1002, %v929, %v977
          %v1009 = vsel %vm1002, %v931, %v979
          %v1010 = vsel %vm1002, %v933, %v981
          %v1011 = vsel %vm1002, %v935, %v983
          %v1012 = vsel %vm1002, %v937, %v985
          %v1013 = vsel %vm1002, %v939, %v987
          %v1014 = vsel %vm1002, %v941, %v989
          %v1015 = vlaneseq
          %v1016 = vand.u32 %v1015, 127
          %vm1017 = vcmp.lt.s32.totalorder %v1016, 0
          %v1018 = vsub.s32 0, %v1016
          %v1019 = vsel %vm1017, %v1018, %v1016
          %v1020 = vshrl.u32 %v1019, 4
          %v1021 = vand.u32 %v1019, 15
          %v1022 = vsub.s32 0, %v1021
          %v1023 = vsel %vm1017, %v1022, %v1021
          %vm1024 = vcmp.ne.s32.totalorder %v1023, 0
          %vm1025 = vcmp.lt.s32.totalorder %v1023, 0
          %vm1026 = vmand %vm1025, %vm1024
          %v1027 = vadd.s32 %v1023, 16
          %v1028 = vsel %vm1026, %v1027, %v1023
          %vm1029 = vcmp.ge.s32.totalorder %v1028, 1
          %vm1030 = vcmp.le.s32.totalorder %v1028, 14
          %v1031 = vld [vmem:[%s5] sm:$0xff]
          %v1032 = vld [vmem:[%s5 + $0x8] sm:$0xff]
          %v1033 = vld [vmem:[%s5 + $0x10] sm:$0xff]
          %v1034 = vld [vmem:[%s5 + $0x18] sm:$0xff]
          %v1035 = vld [vmem:[%s5 + $0x20] sm:$0xff]
          %v1036 = vld [vmem:[%s5 + $0x28] sm:$0xff]
          %v1037 = vld [vmem:[%s5 + $0x30] sm:$0xff]
          %v1038 = vld [vmem:[%s5 + $0x38] sm:$0xff]
          %v1039 = vld [vmem:[%s5 + $0x40] sm:$0xff]
          %v1040 = vld [vmem:[%s5 + $0x48] sm:$0xff]
          %v1041 = vld [vmem:[%s5 + $0x50] sm:$0xff]
          %v1042 = vld [vmem:[%s5 + $0x58] sm:$0xff]
          %1044 = vset.pattern.permute.xlu0 1
          %1045 = vperm.xlu0 %1044, %v1031
          %v1046 = vpop.permute.xlu0 %1045
          %1049 = vset.pattern.permute.xlu0 1
          %1050 = vperm.xlu0 %1049, %v1032
          %v1051 = vpop.permute.xlu0 %1050
          %1054 = vset.pattern.permute.xlu0 1
          %1055 = vperm.xlu0 %1054, %v1033
          %v1056 = vpop.permute.xlu0 %1055
          %1059 = vset.pattern.permute.xlu0 1
          %1060 = vperm.xlu0 %1059, %v1034
          %v1061 = vpop.permute.xlu0 %1060
          %1064 = vset.pattern.permute.xlu0 1
          %1065 = vperm.xlu0 %1064, %v1035
          %v1066 = vpop.permute.xlu0 %1065
          %1069 = vset.pattern.permute.xlu0 1
          %1070 = vperm.xlu0 %1069, %v1036
          %v1071 = vpop.permute.xlu0 %1070
          %1074 = vset.pattern.permute.xlu0 1
          %1075 = vperm.xlu0 %1074, %v1037
          %v1076 = vpop.permute.xlu0 %1075
          %1079 = vset.pattern.permute.xlu0 1
          %1080 = vperm.xlu0 %1079, %v1038
          %v1081 = vpop.permute.xlu0 %1080
          %1084 = vset.pattern.permute.xlu0 1
          %1085 = vperm.xlu0 %1084, %v1039
          %v1086 = vpop.permute.xlu0 %1085
          %1089 = vset.pattern.permute.xlu0 1
          %1090 = vperm.xlu0 %1089, %v1040
          %v1091 = vpop.permute.xlu0 %1090
          %1094 = vset.pattern.permute.xlu0 1
          %1095 = vperm.xlu0 %1094, %v1041
          %v1096 = vpop.permute.xlu0 %1095
          %1099 = vset.pattern.permute.xlu0 1
          %1100 = vperm.xlu0 %1099, %v1042
          %v1101 = vpop.permute.xlu0 %1100
          %v1103 = vmul.f32 %v906, %v1046
          %v1104 = vmul.f32 %v907, %v1051
          %v1105 = vmul.f32 %v908, %v1056
          %v1106 = vmul.f32 %v909, %v1061
          %v1107 = vmul.f32 %v910, %v1066
          %v1108 = vmul.f32 %v911, %v1071
          %v1109 = vmul.f32 %v912, %v1076
          %v1110 = vmul.f32 %v913, %v1081
          %v1111 = vmul.f32 %v914, %v1086
          %v1112 = vmul.f32 %v915, %v1091
          %v1113 = vmul.f32 %v916, %v1096
          %v1114 = vmul.f32 %v917, %v1101
          %v1115 = vadd.f32 %v1103, 0.0
          %v1116 = vadd.f32 %v1104, 0.0
          %v1117 = vadd.f32 %v1105, 0.0
          %v1118 = vadd.f32 %v1106, 0.0
          %v1119 = vadd.f32 %v1107, 0.0
          %v1120 = vadd.f32 %v1108, 0.0
          %v1121 = vadd.f32 %v1109, 0.0
          %v1122 = vadd.f32 %v1110, 0.0
          %v1123 = vadd.f32 %v1111, 0.0
          %v1124 = vadd.f32 %v1112, 0.0
          %v1125 = vadd.f32 %v1113, 0.0
          %v1126 = vadd.f32 %v1114, 0.0
          %1127 = vrot.lane.b32.xlu0 %v906, 1
          %v1128 = vpop.permute.xlu0 %1127
          %1129 = vrot.lane.b32.xlu0 %v907, 1
          %v1130 = vpop.permute.xlu0 %1129
          %1131 = vrot.lane.b32.xlu0 %v908, 1
          %v1132 = vpop.permute.xlu0 %1131
          %1133 = vrot.lane.b32.xlu0 %v909, 1
          %v1134 = vpop.permute.xlu0 %1133
          %1135 = vrot.lane.b32.xlu0 %v910, 1
          %v1136 = vpop.permute.xlu0 %1135
          %1137 = vrot.lane.b32.xlu0 %v911, 1
          %v1138 = vpop.permute.xlu0 %1137
          %1139 = vrot.lane.b32.xlu0 %v912, 1
          %v1140 = vpop.permute.xlu0 %1139
          %1141 = vrot.lane.b32.xlu0 %v913, 1
          %v1142 = vpop.permute.xlu0 %1141
          %1143 = vrot.lane.b32.xlu0 %v914, 1
          %v1144 = vpop.permute.xlu0 %1143
          %1145 = vrot.lane.b32.xlu0 %v915, 1
          %v1146 = vpop.permute.xlu0 %1145
          %1147 = vrot.lane.b32.xlu0 %v916, 1
          %v1148 = vpop.permute.xlu0 %1147
          %1149 = vrot.lane.b32.xlu0 %v917, 1
          %v1150 = vpop.permute.xlu0 %1149
          %v1151 = vsel %vm1029, 1, 0
          %vm1152 = vcmp.eq.s32.totalorder %v1151, 1
          %v1153 = vsel %vm1152, %v1128, 0.0
          %v1154 = vsel %vm1152, %v1130, 0.0
          %v1155 = vsel %vm1152, %v1132, 0.0
          %v1156 = vsel %vm1152, %v1134, 0.0
          %v1157 = vsel %vm1152, %v1136, 0.0
          %v1158 = vsel %vm1152, %v1138, 0.0
          %v1159 = vsel %vm1152, %v1140, 0.0
          %v1160 = vsel %vm1152, %v1142, 0.0
          %v1161 = vsel %vm1152, %v1144, 0.0
          %v1162 = vsel %vm1152, %v1146, 0.0
          %v1163 = vsel %vm1152, %v1148, 0.0
          %v1164 = vsel %vm1152, %v1150, 0.0
          %1165 = vset.pattern.permute.xlu0 0
          %1166 = vperm.xlu0 %1165, %v1031
          %v1167 = vpop.permute.xlu0 %1166
          %1169 = vset.pattern.permute.xlu0 0
          %1170 = vperm.xlu0 %1169, %v1032
          %v1171 = vpop.permute.xlu0 %1170
          %1173 = vset.pattern.permute.xlu0 0
          %1174 = vperm.xlu0 %1173, %v1033
          %v1175 = vpop.permute.xlu0 %1174
          %1177 = vset.pattern.permute.xlu0 0
          %1178 = vperm.xlu0 %1177, %v1034
          %v1179 = vpop.permute.xlu0 %1178
          %1181 = vset.pattern.permute.xlu0 0
          %1182 = vperm.xlu0 %1181, %v1035
          %v1183 = vpop.permute.xlu0 %1182
          %1185 = vset.pattern.permute.xlu0 0
          %1186 = vperm.xlu0 %1185, %v1036
          %v1187 = vpop.permute.xlu0 %1186
          %1189 = vset.pattern.permute.xlu0 0
          %1190 = vperm.xlu0 %1189, %v1037
          %v1191 = vpop.permute.xlu0 %1190
          %1193 = vset.pattern.permute.xlu0 0
          %1194 = vperm.xlu0 %1193, %v1038
          %v1195 = vpop.permute.xlu0 %1194
          %1197 = vset.pattern.permute.xlu0 0
          %1198 = vperm.xlu0 %1197, %v1039
          %v1199 = vpop.permute.xlu0 %1198
          %1201 = vset.pattern.permute.xlu0 0
          %1202 = vperm.xlu0 %1201, %v1040
          %v1203 = vpop.permute.xlu0 %1202
          %1205 = vset.pattern.permute.xlu0 0
          %1206 = vperm.xlu0 %1205, %v1041
          %v1207 = vpop.permute.xlu0 %1206
          %1209 = vset.pattern.permute.xlu0 0
          %1210 = vperm.xlu0 %1209, %v1042
          %v1211 = vpop.permute.xlu0 %1210
          %v1213 = vmul.f32 %v1153, %v1167
          %v1214 = vmul.f32 %v1154, %v1171
          %v1215 = vmul.f32 %v1155, %v1175
          %v1216 = vmul.f32 %v1156, %v1179
          %v1217 = vmul.f32 %v1157, %v1183
          %v1218 = vmul.f32 %v1158, %v1187
          %v1219 = vmul.f32 %v1159, %v1191
          %v1220 = vmul.f32 %v1160, %v1195
          %v1221 = vmul.f32 %v1161, %v1199
          %v1222 = vmul.f32 %v1162, %v1203
          %v1223 = vmul.f32 %v1163, %v1207
          %v1224 = vmul.f32 %v1164, %v1211
          %v1225 = vadd.f32 %v1115, %v1213
          %v1226 = vadd.f32 %v1116, %v1214
          %v1227 = vadd.f32 %v1117, %v1215
          %v1228 = vadd.f32 %v1118, %v1216
          %v1229 = vadd.f32 %v1119, %v1217
          %v1230 = vadd.f32 %v1120, %v1218
          %v1231 = vadd.f32 %v1121, %v1219
          %v1232 = vadd.f32 %v1122, %v1220
          %v1233 = vadd.f32 %v1123, %v1221
          %v1234 = vadd.f32 %v1124, %v1222
          %v1235 = vadd.f32 %v1125, %v1223
          %v1236 = vadd.f32 %v1126, %v1224
          %1237 = vrot.lane.b32.xlu0 %v906, 127
          %v1238 = vpop.permute.xlu0 %1237
          %1239 = vrot.lane.b32.xlu0 %v907, 127
          %v1240 = vpop.permute.xlu0 %1239
          %1241 = vrot.lane.b32.xlu0 %v908, 127
          %v1242 = vpop.permute.xlu0 %1241
          %1243 = vrot.lane.b32.xlu0 %v909, 127
          %v1244 = vpop.permute.xlu0 %1243
          %1245 = vrot.lane.b32.xlu0 %v910, 127
          %v1246 = vpop.permute.xlu0 %1245
          %1247 = vrot.lane.b32.xlu0 %v911, 127
          %v1248 = vpop.permute.xlu0 %1247
          %1249 = vrot.lane.b32.xlu0 %v912, 127
          %v1250 = vpop.permute.xlu0 %1249
          %1251 = vrot.lane.b32.xlu0 %v913, 127
          %v1252 = vpop.permute.xlu0 %1251
          %1253 = vrot.lane.b32.xlu0 %v914, 127
          %v1254 = vpop.permute.xlu0 %1253
          %1255 = vrot.lane.b32.xlu0 %v915, 127
          %v1256 = vpop.permute.xlu0 %1255
          %1257 = vrot.lane.b32.xlu0 %v916, 127
          %v1258 = vpop.permute.xlu0 %1257
          %1259 = vrot.lane.b32.xlu0 %v917, 127
          %v1260 = vpop.permute.xlu0 %1259
          %v1261 = vsel %vm1030, 1, 0
          %vm1262 = vcmp.eq.s32.totalorder %v1261, 1
          %v1263 = vsel %vm1262, %v1238, 0.0
          %v1264 = vsel %vm1262, %v1240, 0.0
          %v1265 = vsel %vm1262, %v1242, 0.0
          %v1266 = vsel %vm1262, %v1244, 0.0
          %v1267 = vsel %vm1262, %v1246, 0.0
          %v1268 = vsel %vm1262, %v1248, 0.0
          %v1269 = vsel %vm1262, %v1250, 0.0
          %v1270 = vsel %vm1262, %v1252, 0.0
          %v1271 = vsel %vm1262, %v1254, 0.0
          %v1272 = vsel %vm1262, %v1256, 0.0
          %v1273 = vsel %vm1262, %v1258, 0.0
          %v1274 = vsel %vm1262, %v1260, 0.0
          %1275 = vset.pattern.permute.xlu0 2
          %1276 = vperm.xlu0 %1275, %v1031
          %v1277 = vpop.permute.xlu0 %1276
          %1279 = vset.pattern.permute.xlu0 2
          %1280 = vperm.xlu0 %1279, %v1032
          %v1281 = vpop.permute.xlu0 %1280
          %1283 = vset.pattern.permute.xlu0 2
          %1284 = vperm.xlu0 %1283, %v1033
          %v1285 = vpop.permute.xlu0 %1284
          %1287 = vset.pattern.permute.xlu0 2
          %1288 = vperm.xlu0 %1287, %v1034
          %v1289 = vpop.permute.xlu0 %1288
          %1291 = vset.pattern.permute.xlu0 2
          %1292 = vperm.xlu0 %1291, %v1035
          %v1293 = vpop.permute.xlu0 %1292
          %1295 = vset.pattern.permute.xlu0 2
          %1296 = vperm.xlu0 %1295, %v1036
          %v1297 = vpop.permute.xlu0 %1296
          %1299 = vset.pattern.permute.xlu0 2
          %1300 = vperm.xlu0 %1299, %v1037
          %v1301 = vpop.permute.xlu0 %1300
          %1303 = vset.pattern.permute.xlu0 2
          %1304 = vperm.xlu0 %1303, %v1038
          %v1305 = vpop.permute.xlu0 %1304
          %1307 = vset.pattern.permute.xlu0 2
          %1308 = vperm.xlu0 %1307, %v1039
          %v1309 = vpop.permute.xlu0 %1308
          %1311 = vset.pattern.permute.xlu0 2
          %1312 = vperm.xlu0 %1311, %v1040
          %v1313 = vpop.permute.xlu0 %1312
          %1315 = vset.pattern.permute.xlu0 2
          %1316 = vperm.xlu0 %1315, %v1041
          %v1317 = vpop.permute.xlu0 %1316
          %1319 = vset.pattern.permute.xlu0 2
          %1320 = vperm.xlu0 %1319, %v1042
          %v1321 = vpop.permute.xlu0 %1320
          %v1323 = vmul.f32 %v1263, %v1277
          %v1324 = vmul.f32 %v1264, %v1281
          %v1325 = vmul.f32 %v1265, %v1285
          %v1326 = vmul.f32 %v1266, %v1289
          %v1327 = vmul.f32 %v1267, %v1293
          %v1328 = vmul.f32 %v1268, %v1297
          %v1329 = vmul.f32 %v1269, %v1301
          %v1330 = vmul.f32 %v1270, %v1305
          %v1331 = vmul.f32 %v1271, %v1309
          %v1332 = vmul.f32 %v1272, %v1313
          %v1333 = vmul.f32 %v1273, %v1317
          %v1334 = vmul.f32 %v1274, %v1321
          %v1335 = vadd.f32 %v1225, %v1323
          %v1336 = vadd.f32 %v1226, %v1324
          %v1337 = vadd.f32 %v1227, %v1325
          %v1338 = vadd.f32 %v1228, %v1326
          %v1339 = vadd.f32 %v1229, %v1327
          %v1340 = vadd.f32 %v1230, %v1328
          %v1341 = vadd.f32 %v1231, %v1329
          %v1342 = vadd.f32 %v1232, %v1330
          %v1343 = vadd.f32 %v1233, %v1331
          %v1344 = vadd.f32 %v1234, %v1332
          %v1345 = vadd.f32 %v1235, %v1333
          %v1346 = vadd.f32 %v1236, %v1334
          %1347 = vset.pattern.permute.xlu0 4
          %1348 = vperm.xlu0 %1347, %v1031
          %v1349 = vpop.permute.xlu0 %1348
          %1351 = vset.pattern.permute.xlu0 4
          %1352 = vperm.xlu0 %1351, %v1032
          %v1353 = vpop.permute.xlu0 %1352
          %1355 = vset.pattern.permute.xlu0 4
          %1356 = vperm.xlu0 %1355, %v1033
          %v1357 = vpop.permute.xlu0 %1356
          %1359 = vset.pattern.permute.xlu0 4
          %1360 = vperm.xlu0 %1359, %v1034
          %v1361 = vpop.permute.xlu0 %1360
          %1363 = vset.pattern.permute.xlu0 4
          %1364 = vperm.xlu0 %1363, %v1035
          %v1365 = vpop.permute.xlu0 %1364
          %1367 = vset.pattern.permute.xlu0 4
          %1368 = vperm.xlu0 %1367, %v1036
          %v1369 = vpop.permute.xlu0 %1368
          %1371 = vset.pattern.permute.xlu0 4
          %1372 = vperm.xlu0 %1371, %v1037
          %v1373 = vpop.permute.xlu0 %1372
          %1375 = vset.pattern.permute.xlu0 4
          %1376 = vperm.xlu0 %1375, %v1038
          %v1377 = vpop.permute.xlu0 %1376
          %1379 = vset.pattern.permute.xlu0 4
          %1380 = vperm.xlu0 %1379, %v1039
          %v1381 = vpop.permute.xlu0 %1380
          %1383 = vset.pattern.permute.xlu0 4
          %1384 = vperm.xlu0 %1383, %v1040
          %v1385 = vpop.permute.xlu0 %1384
          %1387 = vset.pattern.permute.xlu0 4
          %1388 = vperm.xlu0 %1387, %v1041
          %v1389 = vpop.permute.xlu0 %1388
          %1391 = vset.pattern.permute.xlu0 4
          %1392 = vperm.xlu0 %1391, %v1042
          %v1393 = vpop.permute.xlu0 %1392
          %v1395 = vmul.f32 %v801, %v1349
          %v1396 = vmul.f32 %v802, %v1353
          %v1397 = vmul.f32 %v803, %v1357
          %v1398 = vmul.f32 %v804, %v1361
          %v1399 = vmul.f32 %v805, %v1365
          %v1400 = vmul.f32 %v806, %v1369
          %v1401 = vmul.f32 %v807, %v1373
          %v1402 = vmul.f32 %v808, %v1377
          %v1403 = vmul.f32 %v809, %v1381
          %v1404 = vmul.f32 %v810, %v1385
          %v1405 = vmul.f32 %v811, %v1389
          %v1406 = vmul.f32 %v812, %v1393
          %v1407 = vadd.f32 %v1335, %v1395
          %v1408 = vadd.f32 %v1336, %v1396
          %v1409 = vadd.f32 %v1337, %v1397
          %v1410 = vadd.f32 %v1338, %v1398
          %v1411 = vadd.f32 %v1339, %v1399
          %v1412 = vadd.f32 %v1340, %v1400
          %v1413 = vadd.f32 %v1341, %v1401
          %v1414 = vadd.f32 %v1342, %v1402
          %v1415 = vadd.f32 %v1343, %v1403
          %v1416 = vadd.f32 %v1344, %v1404
          %v1417 = vadd.f32 %v1345, %v1405
          %v1418 = vadd.f32 %v1346, %v1406
          %1419 = vrot.lane.b32.xlu0 %v801, 1
          %v1420 = vpop.permute.xlu0 %1419
          %1421 = vrot.lane.b32.xlu0 %v802, 1
          %v1422 = vpop.permute.xlu0 %1421
          %1423 = vrot.lane.b32.xlu0 %v803, 1
          %v1424 = vpop.permute.xlu0 %1423
          %1425 = vrot.lane.b32.xlu0 %v804, 1
          %v1426 = vpop.permute.xlu0 %1425
          %1427 = vrot.lane.b32.xlu0 %v805, 1
          %v1428 = vpop.permute.xlu0 %1427
          %1429 = vrot.lane.b32.xlu0 %v806, 1
          %v1430 = vpop.permute.xlu0 %1429
          %1431 = vrot.lane.b32.xlu0 %v807, 1
          %v1432 = vpop.permute.xlu0 %1431
          %1433 = vrot.lane.b32.xlu0 %v808, 1
          %v1434 = vpop.permute.xlu0 %1433
          %1435 = vrot.lane.b32.xlu0 %v809, 1
          %v1436 = vpop.permute.xlu0 %1435
          %1437 = vrot.lane.b32.xlu0 %v810, 1
          %v1438 = vpop.permute.xlu0 %1437
          %1439 = vrot.lane.b32.xlu0 %v811, 1
          %v1440 = vpop.permute.xlu0 %1439
          %1441 = vrot.lane.b32.xlu0 %v812, 1
          %v1442 = vpop.permute.xlu0 %1441
          %v1443 = vsel %vm1152, %v1420, 0.0
          %v1444 = vsel %vm1152, %v1422, 0.0
          %v1445 = vsel %vm1152, %v1424, 0.0
          %v1446 = vsel %vm1152, %v1426, 0.0
          %v1447 = vsel %vm1152, %v1428, 0.0
          %v1448 = vsel %vm1152, %v1430, 0.0
          %v1449 = vsel %vm1152, %v1432, 0.0
          %v1450 = vsel %vm1152, %v1434, 0.0
          %v1451 = vsel %vm1152, %v1436, 0.0
          %v1452 = vsel %vm1152, %v1438, 0.0
          %v1453 = vsel %vm1152, %v1440, 0.0
          %v1454 = vsel %vm1152, %v1442, 0.0
          %1455 = vset.pattern.permute.xlu0 3
          %1456 = vperm.xlu0 %1455, %v1031
          %v1457 = vpop.permute.xlu0 %1456
          %1459 = vset.pattern.permute.xlu0 3
          %1460 = vperm.xlu0 %1459, %v1032
          %v1461 = vpop.permute.xlu0 %1460
          %1463 = vset.pattern.permute.xlu0 3
          %1464 = vperm.xlu0 %1463, %v1033
          %v1465 = vpop.permute.xlu0 %1464
          %1467 = vset.pattern.permute.xlu0 3
          %1468 = vperm.xlu0 %1467, %v1034
          %v1469 = vpop.permute.xlu0 %1468
          %1471 = vset.pattern.permute.xlu0 3
          %1472 = vperm.xlu0 %1471, %v1035
          %v1473 = vpop.permute.xlu0 %1472
          %1475 = vset.pattern.permute.xlu0 3
          %1476 = vperm.xlu0 %1475, %v1036
          %v1477 = vpop.permute.xlu0 %1476
          %1479 = vset.pattern.permute.xlu0 3
          %1480 = vperm.xlu0 %1479, %v1037
          %v1481 = vpop.permute.xlu0 %1480
          %1483 = vset.pattern.permute.xlu0 3
          %1484 = vperm.xlu0 %1483, %v1038
          %v1485 = vpop.permute.xlu0 %1484
          %1487 = vset.pattern.permute.xlu0 3
          %1488 = vperm.xlu0 %1487, %v1039
          %v1489 = vpop.permute.xlu0 %1488
          %1491 = vset.pattern.permute.xlu0 3
          %1492 = vperm.xlu0 %1491, %v1040
          %v1493 = vpop.permute.xlu0 %1492
          %1495 = vset.pattern.permute.xlu0 3
          %1496 = vperm.xlu0 %1495, %v1041
          %v1497 = vpop.permute.xlu0 %1496
          %1499 = vset.pattern.permute.xlu0 3
          %1500 = vperm.xlu0 %1499, %v1042
          %v1501 = vpop.permute.xlu0 %1500
          %v1503 = vmul.f32 %v1443, %v1457
          %v1504 = vmul.f32 %v1444, %v1461
          %v1505 = vmul.f32 %v1445, %v1465
          %v1506 = vmul.f32 %v1446, %v1469
          %v1507 = vmul.f32 %v1447, %v1473
          %v1508 = vmul.f32 %v1448, %v1477
          %v1509 = vmul.f32 %v1449, %v1481
          %v1510 = vmul.f32 %v1450, %v1485
          %v1511 = vmul.f32 %v1451, %v1489
          %v1512 = vmul.f32 %v1452, %v1493
          %v1513 = vmul.f32 %v1453, %v1497
          %v1514 = vmul.f32 %v1454, %v1501
          %v1515 = vadd.f32 %v1407, %v1503
          %v1516 = vadd.f32 %v1408, %v1504
          %v1517 = vadd.f32 %v1409, %v1505
          %v1518 = vadd.f32 %v1410, %v1506
          %v1519 = vadd.f32 %v1411, %v1507
          %v1520 = vadd.f32 %v1412, %v1508
          %v1521 = vadd.f32 %v1413, %v1509
          %v1522 = vadd.f32 %v1414, %v1510
          %v1523 = vadd.f32 %v1415, %v1511
          %v1524 = vadd.f32 %v1416, %v1512
          %v1525 = vadd.f32 %v1417, %v1513
          %v1526 = vadd.f32 %v1418, %v1514
          %1527 = vrot.lane.b32.xlu0 %v801, 127
          %v1528 = vpop.permute.xlu0 %1527
          %1529 = vrot.lane.b32.xlu0 %v802, 127
          %v1530 = vpop.permute.xlu0 %1529
          %1531 = vrot.lane.b32.xlu0 %v803, 127
          %v1532 = vpop.permute.xlu0 %1531
          %1533 = vrot.lane.b32.xlu0 %v804, 127
          %v1534 = vpop.permute.xlu0 %1533
          %1535 = vrot.lane.b32.xlu0 %v805, 127
          %v1536 = vpop.permute.xlu0 %1535
          %1537 = vrot.lane.b32.xlu0 %v806, 127
          %v1538 = vpop.permute.xlu0 %1537
          %1539 = vrot.lane.b32.xlu0 %v807, 127
          %v1540 = vpop.permute.xlu0 %1539
          %1541 = vrot.lane.b32.xlu0 %v808, 127
          %v1542 = vpop.permute.xlu0 %1541
          %1543 = vrot.lane.b32.xlu0 %v809, 127
          %v1544 = vpop.permute.xlu0 %1543
          %1545 = vrot.lane.b32.xlu0 %v810, 127
          %v1546 = vpop.permute.xlu0 %1545
          %1547 = vrot.lane.b32.xlu0 %v811, 127
          %v1548 = vpop.permute.xlu0 %1547
          %1549 = vrot.lane.b32.xlu0 %v812, 127
          %v1550 = vpop.permute.xlu0 %1549
          %v1551 = vsel %vm1262, %v1528, 0.0
          %v1552 = vsel %vm1262, %v1530, 0.0
          %v1553 = vsel %vm1262, %v1532, 0.0
          %v1554 = vsel %vm1262, %v1534, 0.0
          %v1555 = vsel %vm1262, %v1536, 0.0
          %v1556 = vsel %vm1262, %v1538, 0.0
          %v1557 = vsel %vm1262, %v1540, 0.0
          %v1558 = vsel %vm1262, %v1542, 0.0
          %v1559 = vsel %vm1262, %v1544, 0.0
          %v1560 = vsel %vm1262, %v1546, 0.0
          %v1561 = vsel %vm1262, %v1548, 0.0
          %v1562 = vsel %vm1262, %v1550, 0.0
          %1563 = vset.pattern.permute.xlu0 5
          %1564 = vperm.xlu0 %1563, %v1031
          %v1565 = vpop.permute.xlu0 %1564
          %1567 = vset.pattern.permute.xlu0 5
          %1568 = vperm.xlu0 %1567, %v1032
          %v1569 = vpop.permute.xlu0 %1568
          %1571 = vset.pattern.permute.xlu0 5
          %1572 = vperm.xlu0 %1571, %v1033
          %v1573 = vpop.permute.xlu0 %1572
          %1575 = vset.pattern.permute.xlu0 5
          %1576 = vperm.xlu0 %1575, %v1034
          %v1577 = vpop.permute.xlu0 %1576
          %1579 = vset.pattern.permute.xlu0 5
          %1580 = vperm.xlu0 %1579, %v1035
          %v1581 = vpop.permute.xlu0 %1580
          %1583 = vset.pattern.permute.xlu0 5
          %1584 = vperm.xlu0 %1583, %v1036
          %v1585 = vpop.permute.xlu0 %1584
          %1587 = vset.pattern.permute.xlu0 5
          %1588 = vperm.xlu0 %1587, %v1037
          %v1589 = vpop.permute.xlu0 %1588
          %1591 = vset.pattern.permute.xlu0 5
          %1592 = vperm.xlu0 %1591, %v1038
          %v1593 = vpop.permute.xlu0 %1592
          %1595 = vset.pattern.permute.xlu0 5
          %1596 = vperm.xlu0 %1595, %v1039
          %v1597 = vpop.permute.xlu0 %1596
          %1599 = vset.pattern.permute.xlu0 5
          %1600 = vperm.xlu0 %1599, %v1040
          %v1601 = vpop.permute.xlu0 %1600
          %1603 = vset.pattern.permute.xlu0 5
          %1604 = vperm.xlu0 %1603, %v1041
          %v1605 = vpop.permute.xlu0 %1604
          %1607 = vset.pattern.permute.xlu0 5
          %1608 = vperm.xlu0 %1607, %v1042
          %v1609 = vpop.permute.xlu0 %1608
          %v1611 = vmul.f32 %v1551, %v1565
          %v1612 = vmul.f32 %v1552, %v1569
          %v1613 = vmul.f32 %v1553, %v1573
          %v1614 = vmul.f32 %v1554, %v1577
          %v1615 = vmul.f32 %v1555, %v1581
          %v1616 = vmul.f32 %v1556, %v1585
          %v1617 = vmul.f32 %v1557, %v1589
          %v1618 = vmul.f32 %v1558, %v1593
          %v1619 = vmul.f32 %v1559, %v1597
          %v1620 = vmul.f32 %v1560, %v1601
          %v1621 = vmul.f32 %v1561, %v1605
          %v1622 = vmul.f32 %v1562, %v1609
          %v1623 = vadd.f32 %v1515, %v1611
          %v1624 = vadd.f32 %v1516, %v1612
          %v1625 = vadd.f32 %v1517, %v1613
          %v1626 = vadd.f32 %v1518, %v1614
          %v1627 = vadd.f32 %v1519, %v1615
          %v1628 = vadd.f32 %v1520, %v1616
          %v1629 = vadd.f32 %v1521, %v1617
          %v1630 = vadd.f32 %v1522, %v1618
          %v1631 = vadd.f32 %v1523, %v1619
          %v1632 = vadd.f32 %v1524, %v1620
          %v1633 = vadd.f32 %v1525, %v1621
          %v1634 = vadd.f32 %v1526, %v1622
          %1635 = vset.pattern.permute.xlu0 7
          %1636 = vperm.xlu0 %1635, %v1031
          %v1637 = vpop.permute.xlu0 %1636
          %1639 = vset.pattern.permute.xlu0 7
          %1640 = vperm.xlu0 %1639, %v1032
          %v1641 = vpop.permute.xlu0 %1640
          %1643 = vset.pattern.permute.xlu0 7
          %1644 = vperm.xlu0 %1643, %v1033
          %v1645 = vpop.permute.xlu0 %1644
          %1647 = vset.pattern.permute.xlu0 7
          %1648 = vperm.xlu0 %1647, %v1034
          %v1649 = vpop.permute.xlu0 %1648
          %1651 = vset.pattern.permute.xlu0 7
          %1652 = vperm.xlu0 %1651, %v1035
          %v1653 = vpop.permute.xlu0 %1652
          %1655 = vset.pattern.permute.xlu0 7
          %1656 = vperm.xlu0 %1655, %v1036
          %v1657 = vpop.permute.xlu0 %1656
          %1659 = vset.pattern.permute.xlu0 7
          %1660 = vperm.xlu0 %1659, %v1037
          %v1661 = vpop.permute.xlu0 %1660
          %1663 = vset.pattern.permute.xlu0 7
          %1664 = vperm.xlu0 %1663, %v1038
          %v1665 = vpop.permute.xlu0 %1664
          %1667 = vset.pattern.permute.xlu0 7
          %1668 = vperm.xlu0 %1667, %v1039
          %v1669 = vpop.permute.xlu0 %1668
          %1671 = vset.pattern.permute.xlu0 7
          %1672 = vperm.xlu0 %1671, %v1040
          %v1673 = vpop.permute.xlu0 %1672
          %1675 = vset.pattern.permute.xlu0 7
          %1676 = vperm.xlu0 %1675, %v1041
          %v1677 = vpop.permute.xlu0 %1676
          %1679 = vset.pattern.permute.xlu0 7
          %1680 = vperm.xlu0 %1679, %v1042
          %v1681 = vpop.permute.xlu0 %1680
          %v1683 = vmul.f32 %v1003, %v1637
          %v1684 = vmul.f32 %v1004, %v1641
          %v1685 = vmul.f32 %v1005, %v1645
          %v1686 = vmul.f32 %v1006, %v1649
          %v1687 = vmul.f32 %v1007, %v1653
          %v1688 = vmul.f32 %v1008, %v1657
          %v1689 = vmul.f32 %v1009, %v1661
          %v1690 = vmul.f32 %v1010, %v1665
          %v1691 = vmul.f32 %v1011, %v1669
          %v1692 = vmul.f32 %v1012, %v1673
          %v1693 = vmul.f32 %v1013, %v1677
          %v1694 = vmul.f32 %v1014, %v1681
          %v1695 = vadd.f32 %v1623, %v1683
          %v1696 = vadd.f32 %v1624, %v1684
          %v1697 = vadd.f32 %v1625, %v1685
          %v1698 = vadd.f32 %v1626, %v1686
          %v1699 = vadd.f32 %v1627, %v1687
          %v1700 = vadd.f32 %v1628, %v1688
          %v1701 = vadd.f32 %v1629, %v1689
          %v1702 = vadd.f32 %v1630, %v1690
          %v1703 = vadd.f32 %v1631, %v1691
          %v1704 = vadd.f32 %v1632, %v1692
          %v1705 = vadd.f32 %v1633, %v1693
          %v1706 = vadd.f32 %v1634, %v1694
          %1707 = vrot.lane.b32.xlu0 %v1003, 1
          %v1708 = vpop.permute.xlu0 %1707
          %1709 = vrot.lane.b32.xlu0 %v1004, 1
          %v1710 = vpop.permute.xlu0 %1709
          %1711 = vrot.lane.b32.xlu0 %v1005, 1
          %v1712 = vpop.permute.xlu0 %1711
          %1713 = vrot.lane.b32.xlu0 %v1006, 1
          %v1714 = vpop.permute.xlu0 %1713
          %1715 = vrot.lane.b32.xlu0 %v1007, 1
          %v1716 = vpop.permute.xlu0 %1715
          %1717 = vrot.lane.b32.xlu0 %v1008, 1
          %v1718 = vpop.permute.xlu0 %1717
          %1719 = vrot.lane.b32.xlu0 %v1009, 1
          %v1720 = vpop.permute.xlu0 %1719
          %1721 = vrot.lane.b32.xlu0 %v1010, 1
          %v1722 = vpop.permute.xlu0 %1721
          %1723 = vrot.lane.b32.xlu0 %v1011, 1
          %v1724 = vpop.permute.xlu0 %1723
          %1725 = vrot.lane.b32.xlu0 %v1012, 1
          %v1726 = vpop.permute.xlu0 %1725
          %1727 = vrot.lane.b32.xlu0 %v1013, 1
          %v1728 = vpop.permute.xlu0 %1727
          %1729 = vrot.lane.b32.xlu0 %v1014, 1
          %v1730 = vpop.permute.xlu0 %1729
          %v1731 = vsel %vm1152, %v1708, 0.0
          %v1732 = vsel %vm1152, %v1710, 0.0
          %v1733 = vsel %vm1152, %v1712, 0.0
          %v1734 = vsel %vm1152, %v1714, 0.0
          %v1735 = vsel %vm1152, %v1716, 0.0
          %v1736 = vsel %vm1152, %v1718, 0.0
          %v1737 = vsel %vm1152, %v1720, 0.0
          %v1738 = vsel %vm1152, %v1722, 0.0
          %v1739 = vsel %vm1152, %v1724, 0.0
          %v1740 = vsel %vm1152, %v1726, 0.0
          %v1741 = vsel %vm1152, %v1728, 0.0
          %v1742 = vsel %vm1152, %v1730, 0.0
          %1743 = vset.pattern.permute.xlu0 6
          %1744 = vperm.xlu0 %1743, %v1031
          %v1745 = vpop.permute.xlu0 %1744
          %1747 = vset.pattern.permute.xlu0 6
          %1748 = vperm.xlu0 %1747, %v1032
          %v1749 = vpop.permute.xlu0 %1748
          %1751 = vset.pattern.permute.xlu0 6
          %1752 = vperm.xlu0 %1751, %v1033
          %v1753 = vpop.permute.xlu0 %1752
          %1755 = vset.pattern.permute.xlu0 6
          %1756 = vperm.xlu0 %1755, %v1034
          %v1757 = vpop.permute.xlu0 %1756
          %1759 = vset.pattern.permute.xlu0 6
          %1760 = vperm.xlu0 %1759, %v1035
          %v1761 = vpop.permute.xlu0 %1760
          %1763 = vset.pattern.permute.xlu0 6
          %1764 = vperm.xlu0 %1763, %v1036
          %v1765 = vpop.permute.xlu0 %1764
          %1767 = vset.pattern.permute.xlu0 6
          %1768 = vperm.xlu0 %1767, %v1037
          %v1769 = vpop.permute.xlu0 %1768
          %1771 = vset.pattern.permute.xlu0 6
          %1772 = vperm.xlu0 %1771, %v1038
          %v1773 = vpop.permute.xlu0 %1772
          %1775 = vset.pattern.permute.xlu0 6
          %1776 = vperm.xlu0 %1775, %v1039
          %v1777 = vpop.permute.xlu0 %1776
          %1779 = vset.pattern.permute.xlu0 6
          %1780 = vperm.xlu0 %1779, %v1040
          %v1781 = vpop.permute.xlu0 %1780
          %1783 = vset.pattern.permute.xlu0 6
          %1784 = vperm.xlu0 %1783, %v1041
          %v1785 = vpop.permute.xlu0 %1784
          %1787 = vset.pattern.permute.xlu0 6
          %1788 = vperm.xlu0 %1787, %v1042
          %v1789 = vpop.permute.xlu0 %1788
          %v1791 = vmul.f32 %v1731, %v1745
          %v1792 = vmul.f32 %v1732, %v1749
          %v1793 = vmul.f32 %v1733, %v1753
          %v1794 = vmul.f32 %v1734, %v1757
          %v1795 = vmul.f32 %v1735, %v1761
          %v1796 = vmul.f32 %v1736, %v1765
          %v1797 = vmul.f32 %v1737, %v1769
          %v1798 = vmul.f32 %v1738, %v1773
          %v1799 = vmul.f32 %v1739, %v1777
          %v1800 = vmul.f32 %v1740, %v1781
          %v1801 = vmul.f32 %v1741, %v1785
          %v1802 = vmul.f32 %v1742, %v1789
          %v1803 = vadd.f32 %v1695, %v1791
          %v1804 = vadd.f32 %v1696, %v1792
          %v1805 = vadd.f32 %v1697, %v1793
          %v1806 = vadd.f32 %v1698, %v1794
          %v1807 = vadd.f32 %v1699, %v1795
          %v1808 = vadd.f32 %v1700, %v1796
          %v1809 = vadd.f32 %v1701, %v1797
          %v1810 = vadd.f32 %v1702, %v1798
          %v1811 = vadd.f32 %v1703, %v1799
          %v1812 = vadd.f32 %v1704, %v1800
          %v1813 = vadd.f32 %v1705, %v1801
          %v1814 = vadd.f32 %v1706, %v1802
          %1815 = vrot.lane.b32.xlu0 %v1003, 127
          %v1816 = vpop.permute.xlu0 %1815
          %1817 = vrot.lane.b32.xlu0 %v1004, 127
          %v1818 = vpop.permute.xlu0 %1817
          %1819 = vrot.lane.b32.xlu0 %v1005, 127
          %v1820 = vpop.permute.xlu0 %1819
          %1821 = vrot.lane.b32.xlu0 %v1006, 127
          %v1822 = vpop.permute.xlu0 %1821
          %1823 = vrot.lane.b32.xlu0 %v1007, 127
          %v1824 = vpop.permute.xlu0 %1823
          %1825 = vrot.lane.b32.xlu0 %v1008, 127
          %v1826 = vpop.permute.xlu0 %1825
          %1827 = vrot.lane.b32.xlu0 %v1009, 127
          %v1828 = vpop.permute.xlu0 %1827
          %1829 = vrot.lane.b32.xlu0 %v1010, 127
          %v1830 = vpop.permute.xlu0 %1829
          %1831 = vrot.lane.b32.xlu0 %v1011, 127
          %v1832 = vpop.permute.xlu0 %1831
          %1833 = vrot.lane.b32.xlu0 %v1012, 127
          %v1834 = vpop.permute.xlu0 %1833
          %1835 = vrot.lane.b32.xlu0 %v1013, 127
          %v1836 = vpop.permute.xlu0 %1835
          %1837 = vrot.lane.b32.xlu0 %v1014, 127
          %v1838 = vpop.permute.xlu0 %1837
          %v1839 = vsel %vm1262, %v1816, 0.0
          %v1840 = vsel %vm1262, %v1818, 0.0
          %v1841 = vsel %vm1262, %v1820, 0.0
          %v1842 = vsel %vm1262, %v1822, 0.0
          %v1843 = vsel %vm1262, %v1824, 0.0
          %v1844 = vsel %vm1262, %v1826, 0.0
          %v1845 = vsel %vm1262, %v1828, 0.0
          %v1846 = vsel %vm1262, %v1830, 0.0
          %v1847 = vsel %vm1262, %v1832, 0.0
          %v1848 = vsel %vm1262, %v1834, 0.0
          %v1849 = vsel %vm1262, %v1836, 0.0
          %v1850 = vsel %vm1262, %v1838, 0.0
          %1851 = vset.pattern.permute.xlu0 8
          %1852 = vperm.xlu0 %1851, %v1031
          %v1853 = vpop.permute.xlu0 %1852
          %1855 = vset.pattern.permute.xlu0 8
          %1856 = vperm.xlu0 %1855, %v1032
          %v1857 = vpop.permute.xlu0 %1856
          %1859 = vset.pattern.permute.xlu0 8
          %1860 = vperm.xlu0 %1859, %v1033
          %v1861 = vpop.permute.xlu0 %1860
          %1863 = vset.pattern.permute.xlu0 8
          %1864 = vperm.xlu0 %1863, %v1034
          %v1865 = vpop.permute.xlu0 %1864
          %1867 = vset.pattern.permute.xlu0 8
          %1868 = vperm.xlu0 %1867, %v1035
          %v1869 = vpop.permute.xlu0 %1868
          %1871 = vset.pattern.permute.xlu0 8
          %1872 = vperm.xlu0 %1871, %v1036
          %v1873 = vpop.permute.xlu0 %1872
          %1875 = vset.pattern.permute.xlu0 8
          %1876 = vperm.xlu0 %1875, %v1037
          %v1877 = vpop.permute.xlu0 %1876
          %1879 = vset.pattern.permute.xlu0 8
          %1880 = vperm.xlu0 %1879, %v1038
          %v1881 = vpop.permute.xlu0 %1880
          %1883 = vset.pattern.permute.xlu0 8
          %1884 = vperm.xlu0 %1883, %v1039
          %v1885 = vpop.permute.xlu0 %1884
          %1887 = vset.pattern.permute.xlu0 8
          %1888 = vperm.xlu0 %1887, %v1040
          %v1889 = vpop.permute.xlu0 %1888
          %1891 = vset.pattern.permute.xlu0 8
          %1892 = vperm.xlu0 %1891, %v1041
          %v1893 = vpop.permute.xlu0 %1892
          %1895 = vset.pattern.permute.xlu0 8
          %1896 = vperm.xlu0 %1895, %v1042
          %v1897 = vpop.permute.xlu0 %1896
          %v1899 = vmul.f32 %v1839, %v1853
          %v1900 = vmul.f32 %v1840, %v1857
          %v1901 = vmul.f32 %v1841, %v1861
          %v1902 = vmul.f32 %v1842, %v1865
          %v1903 = vmul.f32 %v1843, %v1869
          %v1904 = vmul.f32 %v1844, %v1873
          %v1905 = vmul.f32 %v1845, %v1877
          %v1906 = vmul.f32 %v1846, %v1881
          %v1907 = vmul.f32 %v1847, %v1885
          %v1908 = vmul.f32 %v1848, %v1889
          %v1909 = vmul.f32 %v1849, %v1893
          %v1910 = vmul.f32 %v1850, %v1897
          %v1911 = vadd.f32 %v1803, %v1899
          %v1912 = vadd.f32 %v1804, %v1900
          %v1913 = vadd.f32 %v1805, %v1901
          %v1914 = vadd.f32 %v1806, %v1902
          %v1915 = vadd.f32 %v1807, %v1903
          %v1916 = vadd.f32 %v1808, %v1904
          %v1917 = vadd.f32 %v1809, %v1905
          %v1918 = vadd.f32 %v1810, %v1906
          %v1919 = vadd.f32 %v1811, %v1907
          %v1920 = vadd.f32 %v1812, %v1908
          %v1921 = vadd.f32 %v1813, %v1909
          %v1922 = vadd.f32 %v1814, %v1910
          %v1923 = vld [vmem:[%s6] sm:$0xff]
          %v1924 = vld [vmem:[%s6 + $0x8] sm:$0xff]
          %v1925 = vld [vmem:[%s6 + $0x10] sm:$0xff]
          %v1926 = vld [vmem:[%s6 + $0x18] sm:$0xff]
          %v1927 = vld [vmem:[%s6 + $0x20] sm:$0xff]
          %v1928 = vld [vmem:[%s6 + $0x28] sm:$0xff]
          %v1929 = vld [vmem:[%s6 + $0x30] sm:$0xff]
          %v1930 = vld [vmem:[%s6 + $0x38] sm:$0xff]
          %v1931 = vld [vmem:[%s6 + $0x40] sm:$0xff]
          %v1932 = vld [vmem:[%s6 + $0x48] sm:$0xff]
          %v1933 = vld [vmem:[%s6 + $0x50] sm:$0xff]
          %v1934 = vld [vmem:[%s6 + $0x58] sm:$0xff]
          %1936 = vset.pattern.permute.xlu0 0
          %1937 = vperm.xlu0 %1936, %v1923
          %v1938 = vpop.permute.xlu0 %1937
          %1941 = vset.pattern.permute.xlu0 0
          %1942 = vperm.xlu0 %1941, %v1924
          %v1943 = vpop.permute.xlu0 %1942
          %1946 = vset.pattern.permute.xlu0 0
          %1947 = vperm.xlu0 %1946, %v1925
          %v1948 = vpop.permute.xlu0 %1947
          %1951 = vset.pattern.permute.xlu0 0
          %1952 = vperm.xlu0 %1951, %v1926
          %v1953 = vpop.permute.xlu0 %1952
          %1956 = vset.pattern.permute.xlu0 0
          %1957 = vperm.xlu0 %1956, %v1927
          %v1958 = vpop.permute.xlu0 %1957
          %1961 = vset.pattern.permute.xlu0 0
          %1962 = vperm.xlu0 %1961, %v1928
          %v1963 = vpop.permute.xlu0 %1962
          %1966 = vset.pattern.permute.xlu0 0
          %1967 = vperm.xlu0 %1966, %v1929
          %v1968 = vpop.permute.xlu0 %1967
          %1971 = vset.pattern.permute.xlu0 0
          %1972 = vperm.xlu0 %1971, %v1930
          %v1973 = vpop.permute.xlu0 %1972
          %1976 = vset.pattern.permute.xlu0 0
          %1977 = vperm.xlu0 %1976, %v1931
          %v1978 = vpop.permute.xlu0 %1977
          %1981 = vset.pattern.permute.xlu0 0
          %1982 = vperm.xlu0 %1981, %v1932
          %v1983 = vpop.permute.xlu0 %1982
          %1986 = vset.pattern.permute.xlu0 0
          %1987 = vperm.xlu0 %1986, %v1933
          %v1988 = vpop.permute.xlu0 %1987
          %1991 = vset.pattern.permute.xlu0 0
          %1992 = vperm.xlu0 %1991, %v1934
          %v1993 = vpop.permute.xlu0 %1992
          %v1995 = vadd.f32 %v1911, %v1938
          %v1996 = vadd.f32 %v1912, %v1943
          %v1997 = vadd.f32 %v1913, %v1948
          %v1998 = vadd.f32 %v1914, %v1953
          %v1999 = vadd.f32 %v1915, %v1958
          %v2000 = vadd.f32 %v1916, %v1963
          %v2001 = vadd.f32 %v1917, %v1968
          %v2002 = vadd.f32 %v1918, %v1973
          %v2003 = vadd.f32 %v1919, %v1978
          %v2004 = vadd.f32 %v1920, %v1983
          %v2005 = vadd.f32 %v1921, %v1988
          %v2006 = vadd.f32 %v1922, %v1993
          %v2007 = vpack.c.bf16 %v2004, %v2003
          %v2008 = vpack.c.bf16 %v2006, %v2005
          %v2011 = vunpack.c.l.b16 %v2007
          %v2012 = vunpack.c.h.b16 %v2007
          %v2013 = vunpack.c.l.b16 %v2008
          %v2014 = vunpack.c.h.b16 %v2008
          %v2015 = vpack.c.b16 %v2011, %v2011
          %v2016 = vpack.c.b16 %v2012, %v2012
          %v2017 = vpack.c.b16 %v2013, %v2013
          %v2018 = vpack.c.b16 %v2014, %v2014
          %2023 = vst [vmem:[%s515] sm:$0xf] %v2015
          %2024 = vst [vmem:[%s515 + $0x4] sm:$0xf] %v2016
          %2025 = vst [vmem:[%s515 + $0x8] sm:$0xf] %v2017
          %2026 = vst [vmem:[%s515 + $0xc] sm:$0xf] %v2018
          %v2027 = vld [vmem:[#allocation4] sm:$0xff]
          %v2028 = vld [vmem:[#allocation4 + $0x8] sm:$0xff]
          %v2029 = vld [vmem:[#allocation4 + $0x10] sm:$0xff]
          %v2030 = vld [vmem:[#allocation4 + $0x18] sm:$0xff]
          %v2031 = vpack.c.bf16 %v1996, %v1995
          %v2032 = vpack.c.bf16 %v1998, %v1997
          %v2033 = vpack.c.bf16 %v2000, %v1999
          %v2034 = vpack.c.bf16 %v2002, %v2001
          %2035 = vmatprep.subr.bf16.mxu0 0
          %2036 = vmatpush1.bf16.xpose.msra.mxu0 0
          %2037 = vmatprep.subr.bf16.mxu0 0
          %2038 = vmatpush1.bf16.xpose.msra.mxu0 0
          %2039 = vmatprep.subr.bf16.mxu0 0
          %2040 = vmatpush1.bf16.xpose.msra.mxu0 0
          %2041 = vmatprep.subr.bf16.mxu0 0
          %2042 = vmatpush1.bf16.xpose.msra.mxu0 0
          %2043 = vmatprep.subr.bf16.mxu0 0
          %2044 = vmatpush1.bf16.xpose.msra.mxu0 0
          %2045 = vmatprep.subr.bf16.mxu0 0
          %2046 = vmatpush1.bf16.xpose.msra.mxu0 0
          %2047 = vmatprep.subr.bf16.mxu0 0
          %2048 = vmatpush1.bf16.xpose.msra.mxu0 %v2034
          %2049 = vmatprep.subr.bf16.mxu0 0
          %2050 = vmatpush1.bf16.xpose.msra.mxu0 %v2033
          %2051 = vmatprep.subr.bf16.mxu0 0
          %2052 = vmatpush2.bf16.xpose.msra.mxu0 0
          %2053 = vmatprep.subr.bf16.mxu0 0
          %2054 = vmatpush2.bf16.xpose.msra.mxu0 0
          %2055 = vmatprep.subr.bf16.mxu0 0
          %2056 = vmatpush2.bf16.xpose.msra.mxu0 0
          %2057 = vmatprep.subr.bf16.mxu0 0
          %2058 = vmatpush2.bf16.xpose.msra.mxu0 0
          %2059 = vmatprep.subr.bf16.mxu0 0
          %2060 = vmatpush2.bf16.xpose.msra.mxu0 0
          %2061 = vmatprep.subr.bf16.mxu0 0
          %2062 = vmatpush2.bf16.xpose.msra.mxu0 0
          %2063 = vmatprep.subr.bf16.mxu0 0
          %2064 = vmatpush2.bf16.xpose.msra.mxu0 0
          %2065 = vmatprep.subr.bf16.mxu0 0
          %2066 = vmatpush2.bf16.xpose.msra.mxu0 0
          %2067 = vmatprep.mubr.bf16.mxu0 0
          %2068 = vmatmul.mubr.bf16.gmra.mxu0 %v2031
          %v2069 = vpop.f32.mrf.mxu0
          %v2070 = vadd.f32 0.0, %v2069
          %v2071 = vpop.f32.mrf.mxu0
          %v2072 = vpop.f32.mrf.mxu0
          %v2073 = vadd.f32 0.0, %v2072
          %v2074 = vpop.f32.mrf.mxu0
          %2075 = vmatprep.mubr.bf16.mxu0 0
          %2076 = vmatmul.mubr.bf16.gmra.mxu0 %v2032
          %v2077 = vpop.f32.mrf.mxu0
          %v2078 = vadd.f32 0.0, %v2077
          %v2079 = vpop.f32.mrf.mxu0
          %v2080 = vpop.f32.mrf.mxu0
          %v2081 = vadd.f32 0.0, %v2080
          %v2082 = vpop.f32.mrf.mxu0
          %2083 = vdwg.mxu0
          %v2084 = vadd.f32 %v2027, %v2070
          %v2085 = vadd.f32 %v2028, %v2073
          %v2086 = vadd.f32 %v2029, %v2078
          %v2087 = vadd.f32 %v2030, %v2081
          %2088 = vst.msk [vmem:[#allocation4] sm:$0xff] %vm567, %v2084
          %2089 = vst.msk [vmem:[#allocation4 + $0x8] sm:$0xff] %vm567, %v2085
          %2090 = vst.msk [vmem:[#allocation4 + $0x10] sm:$0xff] %vm567, %v2086
          %2091 = vst.msk [vmem:[#allocation4 + $0x18] sm:$0xff] %vm567, %v2087
          %v2092 = vld [vmem:[#allocation5] sm:$0xff]
          %v2093 = vld [vmem:[#allocation5 + $0x8] sm:$0xff]
          %v2094 = vld [vmem:[#allocation5 + $0x10] sm:$0xff]
          %v2095 = vld [vmem:[#allocation5 + $0x18] sm:$0xff]
          %v2096 = vmul.f32 %v1995, %v1995
          %v2097 = vmul.f32 %v1996, %v1996
          %v2098 = vmul.f32 %v1997, %v1997
          %v2099 = vmul.f32 %v1998, %v1998
          %2100 = vadd.xlane.f32.xlu0 %v2096
          %v2101 = vpop.xlane.xlu0 %2100
          %2102 = vadd.xlane.f32.xlu0 %v2097
          %v2103 = vpop.xlane.xlu0 %2102
          %2104 = vadd.xlane.f32.xlu0 %v2098
          %v2105 = vpop.xlane.xlu0 %2104
          %2106 = vadd.xlane.f32.xlu0 %v2099
          %v2107 = vpop.xlane.xlu0 %2106
          %v2108 = vadd.f32 %v2092, %v2101
          %v2109 = vadd.f32 %v2093, %v2103
          %v2110 = vadd.f32 %v2094, %v2105
          %v2111 = vadd.f32 %v2095, %v2107
          %vm2112 = vcmask 7168
          %2113 = vst.msk [vmem:[#allocation5] sm:$0xff] %vm2112, %v2108
          %2114 = vst.msk [vmem:[#allocation5 + $0x8] sm:$0xff] %vm2112, %v2109
          %2115 = vst.msk [vmem:[#allocation5 + $0x10] sm:$0xff] %vm2112, %v2110
          %2116 = vst.msk [vmem:[#allocation5 + $0x18] sm:$0xff] %vm2112, %v2111
          %v2117 = vld [vmem:[#allocation6] sm:$0xff]
          %v2118 = vld [vmem:[#allocation6 + $0x8] sm:$0xff]
          %v2119 = vld [vmem:[#allocation6 + $0x10] sm:$0xff]
          %v2120 = vld [vmem:[#allocation6 + $0x18] sm:$0xff]
          %v2121 = vmul.f32 %v1999, %v1999
          %v2122 = vmul.f32 %v2000, %v2000
          %v2123 = vmul.f32 %v2001, %v2001
          %v2124 = vmul.f32 %v2002, %v2002
          %2125 = vadd.xlane.f32.xlu0 %v2121
          %v2126 = vpop.xlane.xlu0 %2125
          %2127 = vadd.xlane.f32.xlu0 %v2122
          %v2128 = vpop.xlane.xlu0 %2127
          %2129 = vadd.xlane.f32.xlu0 %v2123
          %v2130 = vpop.xlane.xlu0 %2129
          %2131 = vadd.xlane.f32.xlu0 %v2124
          %v2132 = vpop.xlane.xlu0 %2131
          %v2133 = vadd.f32 %v2117, %v2126
          %v2134 = vadd.f32 %v2118, %v2128
          %v2135 = vadd.f32 %v2119, %v2130
          %v2136 = vadd.f32 %v2120, %v2132
          %2137 = vst.msk [vmem:[#allocation6] sm:$0xff] %vm2112, %v2133
          %2138 = vst.msk [vmem:[#allocation6 + $0x8] sm:$0xff] %vm2112, %v2134
          %2139 = vst.msk [vmem:[#allocation6 + $0x10] sm:$0xff] %vm2112, %v2135
          %2140 = vst.msk [vmem:[#allocation6 + $0x18] sm:$0xff] %vm2112, %v2136
        $region140: #{tpu_custom_call.1} parent=123 // pred_fallthru
          _
        %p2141 = scmp.eq.s32.totalorder %s33, 2
        // Predicated region
        $region141: #{tpu_custom_call.1} parent=123 // pred_check
          %p2142 = pneg %p2141
        $region142: #{tpu_custom_call.1} parent=123 // pred_check_branch
          %2144 = sbr.rel (%p2142) target = $region144
        $region143: #{tpu_custom_call.1} parent=123 // pred_region
          %v2145 = vld [vmem:[#allocation5] sm:$0xff]
          %v2146 = vld [vmem:[#allocation5 + $0x8] sm:$0xff]
          %v2147 = vld [vmem:[#allocation5 + $0x10] sm:$0xff]
          %v2148 = vld [vmem:[#allocation5 + $0x18] sm:$0xff]
          %v2149 = vmax.f32 %v2145, 1e-24
          %v2150 = vmax.f32 %v2146, 1e-24
          %v2151 = vmax.f32 %v2147, 1e-24
          %v2152 = vmax.f32 %v2148, 1e-24
          %v2153 = vrsqrt.pop %v2149
          %v2154 = vrsqrt.pop %v2150
          %v2155 = vrsqrt.pop %v2151
          %v2156 = vrsqrt.pop %v2152
          %v2157 = vld [vmem:[%s7] sm:$0xff]
          %v2158 = vld [vmem:[%s7 + $0x8] sm:$0xff]
          %v2159 = vld [vmem:[%s7 + $0x10] sm:$0xff]
          %v2160 = vld [vmem:[%s7 + $0x18] sm:$0xff]
          %v2161 = vmul.f32 %v2153, %v2157
          %v2162 = vmul.f32 %v2154, %v2158
          %v2163 = vmul.f32 %v2155, %v2159
          %v2164 = vmul.f32 %v2156, %v2160
          %v2165 = vld [vmem:[#allocation6] sm:$0xff]
          %v2166 = vld [vmem:[#allocation6 + $0x8] sm:$0xff]
          %v2167 = vld [vmem:[#allocation6 + $0x10] sm:$0xff]
          %v2168 = vld [vmem:[#allocation6 + $0x18] sm:$0xff]
          %v2169 = vmax.f32 %v2165, 1e-24
          %v2170 = vmax.f32 %v2166, 1e-24
          %v2171 = vmax.f32 %v2167, 1e-24
          %v2172 = vmax.f32 %v2168, 1e-24
          %v2173 = vrsqrt.pop %v2169
          %v2174 = vrsqrt.pop %v2170
          %v2175 = vrsqrt.pop %v2171
          %v2176 = vrsqrt.pop %v2172
          %v2177 = vlaneseq
          %v2178 = vshrl.u32 %v2177, 7
          %v2179 = vadd.s32 %v2178, 8
          %v2180 = vadd.s32 %v2178, 16
          %v2181 = vadd.s32 %v2178, 24
          %v2182 = vlaneseq
          %v2183 = vand.u32 %v2182, 127
          %vm2184 = vcmp.eq.s32.totalorder %v2178, %v2183
          %vm2185 = vcmp.eq.s32.totalorder %v2179, %v2183
          %vm2186 = vcmp.eq.s32.totalorder %v2180, %v2183
          %vm2187 = vcmp.eq.s32.totalorder %v2181, %v2183
          %2189 = vset.pattern.permute.xlu0 0
          %2190 = vperm.xlu0 %2189, %v2173
          %v2191 = vpop.permute.xlu0 %2190
          %2194 = vset.pattern.permute.xlu0 0
          %2195 = vperm.xlu0 %2194, %v2174
          %v2196 = vpop.permute.xlu0 %2195
          %2199 = vset.pattern.permute.xlu0 0
          %2200 = vperm.xlu0 %2199, %v2175
          %v2201 = vpop.permute.xlu0 %2200
          %2204 = vset.pattern.permute.xlu0 0
          %2205 = vperm.xlu0 %2204, %v2176
          %v2206 = vpop.permute.xlu0 %2205
          %v2208 = vsel %vm2184, %v2191, 0.0
          %v2209 = vsel %vm2185, %v2196, 0.0
          %v2210 = vsel %vm2186, %v2201, 0.0
          %v2211 = vsel %vm2187, %v2206, 0.0
          %v2212 = vld [vmem:[#allocation4] sm:$0xff]
          %v2213 = vld [vmem:[#allocation4 + $0x8] sm:$0xff]
          %v2214 = vld [vmem:[#allocation4 + $0x10] sm:$0xff]
          %v2215 = vld [vmem:[#allocation4 + $0x18] sm:$0xff]
          %2217 = vset.pattern.permute.xlu0 0
          %2218 = vperm.xlu0 %2217, %v2161
          %v2219 = vpop.permute.xlu0 %2218
          %2222 = vset.pattern.permute.xlu0 0
          %2223 = vperm.xlu0 %2222, %v2162
          %v2224 = vpop.permute.xlu0 %2223
          %2227 = vset.pattern.permute.xlu0 0
          %2228 = vperm.xlu0 %2227, %v2163
          %v2229 = vpop.permute.xlu0 %2228
          %2232 = vset.pattern.permute.xlu0 0
          %2233 = vperm.xlu0 %2232, %v2164
          %v2234 = vpop.permute.xlu0 %2233
          %v2236 = vmul.f32 %v2212, %v2219
          %v2237 = vmul.f32 %v2213, %v2224
          %v2238 = vmul.f32 %v2214, %v2229
          %v2239 = vmul.f32 %v2215, %v2234
          %v2241 = vsel %vm567, %v2236, 0
          %v2244 = vsel %vm567, %v2237, 0
          %v2247 = vsel %vm567, %v2238, 0
          %v2250 = vsel %vm567, %v2239, 0
          %2252 = vmatprep.subr.mxu0 0.0
          %2253 = vmatpush1.msra.mxu0 0.0
          %2254 = vmatprep.subr.mxu0 0.0
          %2255 = vmatpush1.msra.mxu0 0.0
          %2256 = vmatprep.subr.mxu0 0.0
          %2257 = vmatpush1.msra.mxu0 0.0
          %2258 = vmatprep.subr.mxu0 0.0
          %2259 = vmatpush1.msra.mxu0 0.0
          %2260 = vmatprep.subr.mxu0 0.0
          %2261 = vmatpush1.msra.mxu0 0.0
          %2262 = vmatprep.subr.mxu0 0.0
          %2263 = vmatpush1.msra.mxu0 0.0
          %2264 = vmatprep.subr.mxu0 0.0
          %2265 = vmatpush1.msra.mxu0 0.0
          %2266 = vmatprep.subr.mxu0 0.0
          %2267 = vmatpush1.msra.mxu0 0.0
          %2268 = vmatprep.subr.mxu0 0.0
          %2269 = vmatpush1.msra.mxu0 0.0
          %2270 = vmatprep.subr.mxu0 0.0
          %2271 = vmatpush1.msra.mxu0 0.0
          %2272 = vmatprep.subr.mxu0 0.0
          %2273 = vmatpush1.msra.mxu0 0.0
          %2274 = vmatprep.subr.mxu0 0.0
          %2275 = vmatpush1.msra.mxu0 0.0
          %2276 = vmatprep.subr.mxu0 0.0
          %2277 = vmatpush1.msra.mxu0 %v2211
          %2278 = vmatprep.subr.mxu0 0.0
          %2279 = vmatpush1.msra.mxu0 %v2210
          %2280 = vmatprep.subr.mxu0 0.0
          %2281 = vmatpush1.msra.mxu0 %v2209
          %2282 = vmatprep.subr.mxu0 0.0
          %2283 = vmatpush1.msra.mxu0 %v2208
          %2284 = vmatprep.subr.mxu0 0.0
          %2285 = vmatpush2.msra.mxu0 0.0
          %2286 = vmatprep.subr.mxu0 0.0
          %2287 = vmatpush2.msra.mxu0 0.0
          %2288 = vmatprep.subr.mxu0 0.0
          %2289 = vmatpush2.msra.mxu0 0.0
          %2290 = vmatprep.subr.mxu0 0.0
          %2291 = vmatpush2.msra.mxu0 0.0
          %2292 = vmatprep.subr.mxu0 0.0
          %2293 = vmatpush2.msra.mxu0 0.0
          %2294 = vmatprep.subr.mxu0 0.0
          %2295 = vmatpush2.msra.mxu0 0.0
          %2296 = vmatprep.subr.mxu0 0.0
          %2297 = vmatpush2.msra.mxu0 0.0
          %2298 = vmatprep.subr.mxu0 0.0
          %2299 = vmatpush2.msra.mxu0 0.0
          %2300 = vmatprep.subr.mxu0 0.0
          %2301 = vmatpush2.msra.mxu0 0.0
          %2302 = vmatprep.subr.mxu0 0.0
          %2303 = vmatpush2.msra.mxu0 0.0
          %2304 = vmatprep.subr.mxu0 0.0
          %2305 = vmatpush2.msra.mxu0 0.0
          %2306 = vmatprep.subr.mxu0 0.0
          %2307 = vmatpush2.msra.mxu0 0.0
          %2308 = vmatprep.subr.mxu0 0.0
          %2309 = vmatpush2.msra.mxu0 0.0
          %2310 = vmatprep.subr.mxu0 0.0
          %2311 = vmatpush2.msra.mxu0 0.0
          %2312 = vmatprep.subr.mxu0 0.0
          %2313 = vmatpush2.msra.mxu0 0.0
          %2314 = vmatprep.subr.mxu0 0.0
          %2315 = vmatpush2.msra.mxu0 0.0
          %2316 = vmatprep.mubr.f32.mxu0 0.0
          %2317 = vmatmul.mubr.f32.gmra.mxu0 %v2241
          %v2318 = vpop.f32.mrf.mxu0
          %v2319 = vadd.f32 0.0, %v2318
          %v2320 = vpop.f32.mrf.mxu0
          %2321 = vmatprep.mubr.f32.mxu0 0.0
          %2322 = vmatmul.mubr.f32.gmra.mxu0 %v2244
          %v2323 = vpop.f32.mrf.mxu0
          %v2324 = vadd.f32 0.0, %v2323
          %v2325 = vpop.f32.mrf.mxu0
          %2326 = vmatprep.mubr.f32.mxu0 0.0
          %2327 = vmatmul.mubr.f32.gmra.mxu0 %v2247
          %v2328 = vpop.f32.mrf.mxu0
          %v2329 = vadd.f32 0.0, %v2328
          %v2330 = vpop.f32.mrf.mxu0
          %2331 = vmatprep.mubr.f32.mxu0 0.0
          %2332 = vmatmul.mubr.f32.gmra.mxu0 %v2250
          %v2333 = vpop.f32.mrf.mxu0
          %v2334 = vadd.f32 0.0, %v2333
          %v2335 = vpop.f32.mrf.mxu0
          %2336 = vdwg.mxu0
          %v2337 = vld [vmem:[%s8] sm:$0xff]
          %v2338 = vld [vmem:[%s8 + $0x8] sm:$0xff]
          %v2339 = vld [vmem:[%s8 + $0x10] sm:$0xff]
          %v2340 = vld [vmem:[%s8 + $0x18] sm:$0xff]
          %v2341 = vpack.c.bf16 %v2338, %v2337
          %v2342 = vpack.c.bf16 %v2340, %v2339
          %vm2343 = vcmask 64512
          %v2344 = vsel %vm2343, %v2319, -inf
          %2345 = vmax.xlane.f32.xlu0 %v2344
          %v2346 = vpop.xlane.xlu0 %2345
          %v2347 = vsub.f32 %v2319, %v2346
          %v2348 = vmul.f32 %v2347, 1.442695
          %v2349 = vpow.pop %v2348
          %v2350 = vsel %vm2343, %v2349, 0.0
          %2351 = vadd.xlane.f32.xlu0 %v2350
          %v2352 = vpop.xlane.xlu0 %2351
          %v2353 = vrcp.pop %v2352
          %v2354 = vmul.f32 %v2349, %v2353
          %v2355 = vpack.c.bf16 %v2354, %v2354
          %v2357 = vsel %vm2343, %v2341, 0
          %v2360 = vsel %vm2343, %v2342, 0
          %vm2362 = vcmask 1043456
          %v2364 = vsel %vm2362, %v2355, 0
          %2366 = vmatprep.subr.bf16.mxu0 0
          %2367 = vmatpush1.bf16.msra.mxu0 0
          %2368 = vmatprep.subr.bf16.mxu0 0
          %2369 = vmatpush1.bf16.msra.mxu0 0
          %2370 = vmatprep.subr.bf16.mxu0 0
          %2371 = vmatpush1.bf16.msra.mxu0 0
          %2372 = vmatprep.subr.bf16.mxu0 0
          %2373 = vmatpush1.bf16.msra.mxu0 0
          %2374 = vmatprep.subr.bf16.mxu0 0
          %2375 = vmatpush1.bf16.msra.mxu0 0
          %2376 = vmatprep.subr.bf16.mxu0 0
          %2377 = vmatpush1.bf16.msra.mxu0 0
          %2378 = vmatprep.subr.bf16.mxu0 0
          %2379 = vmatpush1.bf16.msra.mxu0 0
          %2380 = vmatprep.subr.bf16.mxu0 0
          %2381 = vmatpush1.bf16.msra.mxu0 %v2364
          %2382 = vmatprep.subr.bf16.mxu0 0
          %2383 = vmatpush2.bf16.msra.mxu0 0
          %2384 = vmatprep.subr.bf16.mxu0 0
          %2385 = vmatpush2.bf16.msra.mxu0 0
          %2386 = vmatprep.subr.bf16.mxu0 0
          %2387 = vmatpush2.bf16.msra.mxu0 0
          %2388 = vmatprep.subr.bf16.mxu0 0
          %2389 = vmatpush2.bf16.msra.mxu0 0
          %2390 = vmatprep.subr.bf16.mxu0 0
          %2391 = vmatpush2.bf16.msra.mxu0 0
          %2392 = vmatprep.subr.bf16.mxu0 0
          %2393 = vmatpush2.bf16.msra.mxu0 0
          %2394 = vmatprep.subr.bf16.mxu0 0
          %2395 = vmatpush2.bf16.msra.mxu0 0
          %2396 = vmatprep.subr.bf16.mxu0 0
          %2397 = vmatpush2.bf16.msra.mxu0 0
          %2398 = vmatprep.mubr.bf16.mxu0 0
          %2399 = vmatmul.mubr.bf16.gmra.mxu0 %v2357
          %v2400 = vpop.f32.mrf.mxu0
          %v2401 = vadd.f32 0.0, %v2400
          %v2402 = vpop.f32.mrf.mxu0
          %v2403 = vpop.f32.mrf.mxu0
          %v2404 = vadd.f32 0.0, %v2403
          %v2405 = vpop.f32.mrf.mxu0
          %2406 = vmatprep.mubr.bf16.mxu0 0
          %2407 = vmatmul.mubr.bf16.gmra.mxu0 %v2360
          %v2408 = vpop.f32.mrf.mxu0
          %v2409 = vadd.f32 0.0, %v2408
          %v2410 = vpop.f32.mrf.mxu0
          %v2411 = vpop.f32.mrf.mxu0
          %v2412 = vadd.f32 0.0, %v2411
          %v2413 = vpop.f32.mrf.mxu0
          %2414 = vdwg.mxu0
          %vm2415 = vcmask 130112
          %v2416 = vsel %vm2415, %v2324, -inf
          %2417 = vmax.xlane.f32.xlu0 %v2416
          %v2418 = vpop.xlane.xlu0 %2417
          %v2419 = vsub.f32 %v2324, %v2418
          %v2420 = vmul.f32 %v2419, 1.442695
          %v2421 = vpow.pop %v2420
          %2423 = vrot.lane.b32.xlu0 %v2421, 120
          %v2424 = vpop.permute.xlu0 %2423
          %v2426 = vsel %vm2343, %v2424, 0.0
          %2427 = vadd.xlane.f32.xlu0 %v2426
          %v2428 = vpop.xlane.xlu0 %2427
          %v2429 = vrcp.pop %v2428
          %v2430 = vmul.f32 %v2421, %v2429
          %v2431 = vpack.c.bf16 %v2430, %v2430
          %2434 = vrot.lane.b32.xlu0 %v2341, 120
          %v2435 = vpop.permute.xlu0 %2434
          %2436 = vrot.lane.b32.xlu0 %v2342, 120
          %v2437 = vpop.permute.xlu0 %2436
          %2439 = vrot.lane.b32.xlu0 %v2431, 120
          %v2440 = vpop.permute.xlu0 %2439
          %v2442 = vsel %vm2343, %v2435, 0
          %v2445 = vsel %vm2343, %v2437, 0
          %v2448 = vsel %vm2362, %v2440, 0
          %2450 = vmatprep.subr.bf16.mxu0 0
          %2451 = vmatpush1.bf16.msra.mxu0 0
          %2452 = vmatprep.subr.bf16.mxu0 0
          %2453 = vmatpush1.bf16.msra.mxu0 0
          %2454 = vmatprep.subr.bf16.mxu0 0
          %2455 = vmatpush1.bf16.msra.mxu0 0
          %2456 = vmatprep.subr.bf16.mxu0 0
          %2457 = vmatpush1.bf16.msra.mxu0 0
          %2458 = vmatprep.subr.bf16.mxu0 0
          %2459 = vmatpush1.bf16.msra.mxu0 0
          %2460 = vmatprep.subr.bf16.mxu0 0
          %2461 = vmatpush1.bf16.msra.mxu0 0
          %2462 = vmatprep.subr.bf16.mxu0 0
          %2463 = vmatpush1.bf16.msra.mxu0 0
          %2464 = vmatprep.subr.bf16.mxu0 0
          %2465 = vmatpush1.bf16.msra.mxu0 %v2448
          %2466 = vmatprep.subr.bf16.mxu0 0
          %2467 = vmatpush2.bf16.msra.mxu0 0
          %2468 = vmatprep.subr.bf16.mxu0 0
          %2469 = vmatpush2.bf16.msra.mxu0 0
          %2470 = vmatprep.subr.bf16.mxu0 0
          %2471 = vmatpush2.bf16.msra.mxu0 0
          %2472 = vmatprep.subr.bf16.mxu0 0
          %2473 = vmatpush2.bf16.msra.mxu0 0
          %2474 = vmatprep.subr.bf16.mxu0 0
          %2475 = vmatpush2.bf16.msra.mxu0 0
          %2476 = vmatprep.subr.bf16.mxu0 0
          %2477 = vmatpush2.bf16.msra.mxu0 0
          %2478 = vmatprep.subr.bf16.mxu0 0
          %2479 = vmatpush2.bf16.msra.mxu0 0
          %2480 = vmatprep.subr.bf16.mxu0 0
          %2481 = vmatpush2.bf16.msra.mxu0 0
          %2482 = vmatprep.mubr.bf16.mxu0 0
          %2483 = vmatmul.mubr.bf16.gmra.mxu0 %v2442
          %v2484 = vpop.f32.mrf.mxu0
          %v2485 = vadd.f32 0.0, %v2484
          %v2486 = vpop.f32.mrf.mxu0
          %v2487 = vpop.f32.mrf.mxu0
          %v2488 = vadd.f32 0.0, %v2487
          %v2489 = vpop.f32.mrf.mxu0
          %2490 = vmatprep.mubr.bf16.mxu0 0
          %2491 = vmatmul.mubr.bf16.gmra.mxu0 %v2445
          %v2492 = vpop.f32.mrf.mxu0
          %v2493 = vadd.f32 0.0, %v2492
          %v2494 = vpop.f32.mrf.mxu0
          %v2495 = vpop.f32.mrf.mxu0
          %v2496 = vadd.f32 0.0, %v2495
          %v2497 = vpop.f32.mrf.mxu0
          %2498 = vdwg.mxu0
          %vm2499 = vcmask 195712
          %v2500 = vsel %vm2499, %v2329, -inf
          %2501 = vmax.xlane.f32.xlu0 %v2500
          %v2502 = vpop.xlane.xlu0 %2501
          %v2503 = vsub.f32 %v2329, %v2502
          %v2504 = vmul.f32 %v2503, 1.442695
          %v2505 = vpow.pop %v2504
          %2507 = vrot.lane.b32.xlu0 %v2505, 112
          %v2508 = vpop.permute.xlu0 %2507
          %v2510 = vsel %vm2343, %v2508, 0.0
          %2511 = vadd.xlane.f32.xlu0 %v2510
          %v2512 = vpop.xlane.xlu0 %2511
          %v2513 = vrcp.pop %v2512
          %v2514 = vmul.f32 %v2505, %v2513
          %v2515 = vpack.c.bf16 %v2514, %v2514
          %2516 = vrot.lane.b32.xlu0 %v2341, 112
          %v2517 = vpop.permute.xlu0 %2516
          %2518 = vrot.lane.b32.xlu0 %v2342, 112
          %v2519 = vpop.permute.xlu0 %2518
          %2521 = vrot.lane.b32.xlu0 %v2515, 112
          %v2522 = vpop.permute.xlu0 %2521
          %v2524 = vsel %vm2343, %v2517, 0
          %v2527 = vsel %vm2343, %v2519, 0
          %v2530 = vsel %vm2362, %v2522, 0
          %2532 = vmatprep.subr.bf16.mxu0 0
          %2533 = vmatpush1.bf16.msra.mxu0 0
          %2534 = vmatprep.subr.bf16.mxu0 0
          %2535 = vmatpush1.bf16.msra.mxu0 0
          %2536 = vmatprep.subr.bf16.mxu0 0
          %2537 = vmatpush1.bf16.msra.mxu0 0
          %2538 = vmatprep.subr.bf16.mxu0 0
          %2539 = vmatpush1.bf16.msra.mxu0 0
          %2540 = vmatprep.subr.bf16.mxu0 0
          %2541 = vmatpush1.bf16.msra.mxu0 0
          %2542 = vmatprep.subr.bf16.mxu0 0
          %2543 = vmatpush1.bf16.msra.mxu0 0
          %2544 = vmatprep.subr.bf16.mxu0 0
          %2545 = vmatpush1.bf16.msra.mxu0 0
          %2546 = vmatprep.subr.bf16.mxu0 0
          %2547 = vmatpush1.bf16.msra.mxu0 %v2530
          %2548 = vmatprep.subr.bf16.mxu0 0
          %2549 = vmatpush2.bf16.msra.mxu0 0
          %2550 = vmatprep.subr.bf16.mxu0 0
          %2551 = vmatpush2.bf16.msra.mxu0 0
          %2552 = vmatprep.subr.bf16.mxu0 0
          %2553 = vmatpush2.bf16.msra.mxu0 0
          %2554 = vmatprep.subr.bf16.mxu0 0
          %2555 = vmatpush2.bf16.msra.mxu0 0
          %2556 = vmatprep.subr.bf16.mxu0 0
          %2557 = vmatpush2.bf16.msra.mxu0 0
          %2558 = vmatprep.subr.bf16.mxu0 0
          %2559 = vmatpush2.bf16.msra.mxu0 0
          %2560 = vmatprep.subr.bf16.mxu0 0
          %2561 = vmatpush2.bf16.msra.mxu0 0
          %2562 = vmatprep.subr.bf16.mxu0 0
          %2563 = vmatpush2.bf16.msra.mxu0 0
          %2564 = vmatprep.mubr.bf16.mxu0 0
          %2565 = vmatmul.mubr.bf16.gmra.mxu0 %v2524
          %v2566 = vpop.f32.mrf.mxu0
          %v2567 = vadd.f32 0.0, %v2566
          %v2568 = vpop.f32.mrf.mxu0
          %v2569 = vpop.f32.mrf.mxu0
          %v2570 = vadd.f32 0.0, %v2569
          %v2571 = vpop.f32.mrf.mxu0
          %2572 = vmatprep.mubr.bf16.mxu0 0
          %2573 = vmatmul.mubr.bf16.gmra.mxu0 %v2527
          %v2574 = vpop.f32.mrf.mxu0
          %v2575 = vadd.f32 0.0, %v2574
          %v2576 = vpop.f32.mrf.mxu0
          %v2577 = vpop.f32.mrf.mxu0
          %v2578 = vadd.f32 0.0, %v2577
          %v2579 = vpop.f32.mrf.mxu0
          %2580 = vdwg.mxu0
          %vm2581 = vcmask 261312
          %v2582 = vsel %vm2581, %v2334, -inf
          %2583 = vmax.xlane.f32.xlu0 %v2582
          %v2584 = vpop.xlane.xlu0 %2583
          %v2585 = vsub.f32 %v2334, %v2584
          %v2586 = vmul.f32 %v2585, 1.442695
          %v2587 = vpow.pop %v2586
          %2589 = vrot.lane.b32.xlu0 %v2587, 104
          %v2590 = vpop.permute.xlu0 %2589
          %v2592 = vsel %vm2343, %v2590, 0.0
          %2593 = vadd.xlane.f32.xlu0 %v2592
          %v2594 = vpop.xlane.xlu0 %2593
          %v2595 = vrcp.pop %v2594
          %v2596 = vmul.f32 %v2587, %v2595
          %v2597 = vpack.c.bf16 %v2596, %v2596
          %2598 = vrot.lane.b32.xlu0 %v2341, 104
          %v2599 = vpop.permute.xlu0 %2598
          %2600 = vrot.lane.b32.xlu0 %v2342, 104
          %v2601 = vpop.permute.xlu0 %2600
          %2603 = vrot.lane.b32.xlu0 %v2597, 104
          %v2604 = vpop.permute.xlu0 %2603
          %v2606 = vsel %vm2343, %v2599, 0
          %v2609 = vsel %vm2343, %v2601, 0
          %v2612 = vsel %vm2362, %v2604, 0
          %2614 = vmatprep.subr.bf16.mxu0 0
          %2615 = vmatpush1.bf16.msra.mxu0 0
          %2616 = vmatprep.subr.bf16.mxu0 0
          %2617 = vmatpush1.bf16.msra.mxu0 0
          %2618 = vmatprep.subr.bf16.mxu0 0
          %2619 = vmatpush1.bf16.msra.mxu0 0
          %2620 = vmatprep.subr.bf16.mxu0 0
          %2621 = vmatpush1.bf16.msra.mxu0 0
          %2622 = vmatprep.subr.bf16.mxu0 0
          %2623 = vmatpush1.bf16.msra.mxu0 0
          %2624 = vmatprep.subr.bf16.mxu0 0
          %2625 = vmatpush1.bf16.msra.mxu0 0
          %2626 = vmatprep.subr.bf16.mxu0 0
          %2627 = vmatpush1.bf16.msra.mxu0 0
          %2628 = vmatprep.subr.bf16.mxu0 0
          %2629 = vmatpush1.bf16.msra.mxu0 %v2612
          %2630 = vmatprep.subr.bf16.mxu0 0
          %2631 = vmatpush2.bf16.msra.mxu0 0
          %2632 = vmatprep.subr.bf16.mxu0 0
          %2633 = vmatpush2.bf16.msra.mxu0 0
          %2634 = vmatprep.subr.bf16.mxu0 0
          %2635 = vmatpush2.bf16.msra.mxu0 0
          %2636 = vmatprep.subr.bf16.mxu0 0
          %2637 = vmatpush2.bf16.msra.mxu0 0
          %2638 = vmatprep.subr.bf16.mxu0 0
          %2639 = vmatpush2.bf16.msra.mxu0 0
          %2640 = vmatprep.subr.bf16.mxu0 0
          %2641 = vmatpush2.bf16.msra.mxu0 0
          %2642 = vmatprep.subr.bf16.mxu0 0
          %2643 = vmatpush2.bf16.msra.mxu0 0
          %2644 = vmatprep.subr.bf16.mxu0 0
          %2645 = vmatpush2.bf16.msra.mxu0 0
          %2646 = vmatprep.mubr.bf16.mxu0 0
          %2647 = vmatmul.mubr.bf16.gmra.mxu0 %v2606
          %v2648 = vpop.f32.mrf.mxu0
          %v2649 = vadd.f32 0.0, %v2648
          %v2650 = vpop.f32.mrf.mxu0
          %v2651 = vpop.f32.mrf.mxu0
          %v2652 = vadd.f32 0.0, %v2651
          %v2653 = vpop.f32.mrf.mxu0
          %2654 = vmatprep.mubr.bf16.mxu0 0
          %2655 = vmatmul.mubr.bf16.gmra.mxu0 %v2609
          %v2656 = vpop.f32.mrf.mxu0
          %v2657 = vadd.f32 0.0, %v2656
          %v2658 = vpop.f32.mrf.mxu0
          %v2659 = vpop.f32.mrf.mxu0
          %v2660 = vadd.f32 0.0, %v2659
          %v2661 = vpop.f32.mrf.mxu0
          %2662 = vdwg.mxu0
          %2667 = vrot.lane.b32.xlu0 %v2485, 8
          %v2668 = vpop.permute.xlu0 %2667
          %2669 = vrot.lane.b32.xlu0 %v2488, 8
          %v2670 = vpop.permute.xlu0 %2669
          %2671 = vrot.lane.b32.xlu0 %v2493, 8
          %v2672 = vpop.permute.xlu0 %2671
          %2673 = vrot.lane.b32.xlu0 %v2496, 8
          %v2674 = vpop.permute.xlu0 %2673
          %2683 = vrot.lane.b32.xlu0 %v2567, 16
          %v2684 = vpop.permute.xlu0 %2683
          %2685 = vrot.lane.b32.xlu0 %v2570, 16
          %v2686 = vpop.permute.xlu0 %2685
          %2687 = vrot.lane.b32.xlu0 %v2575, 16
          %v2688 = vpop.permute.xlu0 %2687
          %2689 = vrot.lane.b32.xlu0 %v2578, 16
          %v2690 = vpop.permute.xlu0 %2689
          %2699 = vrot.lane.b32.xlu0 %v2649, 24
          %v2700 = vpop.permute.xlu0 %2699
          %2701 = vrot.lane.b32.xlu0 %v2652, 24
          %v2702 = vpop.permute.xlu0 %2701
          %2703 = vrot.lane.b32.xlu0 %v2657, 24
          %v2704 = vpop.permute.xlu0 %2703
          %2705 = vrot.lane.b32.xlu0 %v2660, 24
          %v2706 = vpop.permute.xlu0 %2705
          %v2711 = vsel %vm2343, %v2401, %v2668
          %v2712 = vsel %vm2343, %v2404, %v2670
          %v2713 = vsel %vm2343, %v2409, %v2672
          %v2714 = vsel %vm2343, %v2412, %v2674
          %vm2715 = vcmask 130048
          %v2716 = vsel %vm2715, %v2711, %v2684
          %v2717 = vsel %vm2715, %v2712, %v2686
          %v2718 = vsel %vm2715, %v2713, %v2688
          %v2719 = vsel %vm2715, %v2714, %v2690
          %vm2720 = vcmask 195584
          %v2721 = vsel %vm2720, %v2716, %v2700
          %v2722 = vsel %vm2720, %v2717, %v2702
          %v2723 = vsel %vm2720, %v2718, %v2704
          %v2724 = vsel %vm2720, %v2719, %v2706
          %2725 = vst.msk [vmem:[%s522] sm:$0xff] %vm567, %v2721
          %2726 = vst.msk [vmem:[%s522 + $0x8] sm:$0xff] %vm567, %v2722
          %2727 = vst.msk [vmem:[%s522 + $0x10] sm:$0xff] %vm567, %v2723
          %2728 = vst.msk [vmem:[%s522 + $0x18] sm:$0xff] %vm567, %v2724
        $region144: #{tpu_custom_call.1} parent=123 // pred_fallthru
          _
        %v2729 = vld [vmem:[#allocation2] sm:$0xff]
        %v2730 = vld [vmem:[#allocation2 + $0x8] sm:$0xff]
        %v2731 = vld [vmem:[#allocation2 + $0x10] sm:$0xff]
        %v2732 = vld [vmem:[#allocation2 + $0x18] sm:$0xff]
        %v2733 = vld [vmem:[#allocation2 + $0x20] sm:$0xff]
        %v2734 = vld [vmem:[#allocation2 + $0x28] sm:$0xff]
        %v2735 = vld [vmem:[#allocation2 + $0x30] sm:$0xff]
        %v2736 = vld [vmem:[#allocation2 + $0x38] sm:$0xff]
        %v2737 = vld [vmem:[#allocation2 + $0x40] sm:$0xff]
        %v2738 = vld [vmem:[#allocation2 + $0x48] sm:$0xff]
        %v2739 = vld [vmem:[#allocation2 + $0x50] sm:$0xff]
        %v2740 = vld [vmem:[#allocation2 + $0x58] sm:$0xff]
        %2753 = vrot.lane.b32.xlu0 %v2729, 16
        %v2754 = vpop.permute.xlu0 %2753
        %2755 = vrot.lane.b32.xlu0 %v2730, 16
        %v2756 = vpop.permute.xlu0 %2755
        %2757 = vrot.lane.b32.xlu0 %v2731, 16
        %v2758 = vpop.permute.xlu0 %2757
        %2759 = vrot.lane.b32.xlu0 %v2732, 16
        %v2760 = vpop.permute.xlu0 %2759
        %2761 = vrot.lane.b32.xlu0 %v2733, 16
        %v2762 = vpop.permute.xlu0 %2761
        %2763 = vrot.lane.b32.xlu0 %v2734, 16
        %v2764 = vpop.permute.xlu0 %2763
        %2765 = vrot.lane.b32.xlu0 %v2735, 16
        %v2766 = vpop.permute.xlu0 %2765
        %2767 = vrot.lane.b32.xlu0 %v2736, 16
        %v2768 = vpop.permute.xlu0 %2767
        %2769 = vrot.lane.b32.xlu0 %v2737, 16
        %v2770 = vpop.permute.xlu0 %2769
        %2771 = vrot.lane.b32.xlu0 %v2738, 16
        %v2772 = vpop.permute.xlu0 %2771
        %2773 = vrot.lane.b32.xlu0 %v2739, 16
        %v2774 = vpop.permute.xlu0 %2773
        %2775 = vrot.lane.b32.xlu0 %v2740, 16
        %v2776 = vpop.permute.xlu0 %2775
        %vm2789 = vcmask 130048
        %2790 = vst.msk [vmem:[#allocation3] sm:$0xff] %vm2789, %v2754
        %2791 = vst.msk [vmem:[#allocation3 + $0x8] sm:$0xff] %vm2789, %v2756
        %2792 = vst.msk [vmem:[#allocation3 + $0x10] sm:$0xff] %vm2789, %v2758
        %2793 = vst.msk [vmem:[#allocation3 + $0x18] sm:$0xff] %vm2789, %v2760
        %2794 = vst.msk [vmem:[#allocation3 + $0x20] sm:$0xff] %vm2789, %v2762
        %2795 = vst.msk [vmem:[#allocation3 + $0x28] sm:$0xff] %vm2789, %v2764
        %2796 = vst.msk [vmem:[#allocation3 + $0x30] sm:$0xff] %vm2789, %v2766
        %2797 = vst.msk [vmem:[#allocation3 + $0x38] sm:$0xff] %vm2789, %v2768
        %2798 = vst.msk [vmem:[#allocation3 + $0x40] sm:$0xff] %vm2789, %v2770
        %2799 = vst.msk [vmem:[#allocation3 + $0x48] sm:$0xff] %vm2789, %v2772
        %2800 = vst.msk [vmem:[#allocation3 + $0x50] sm:$0xff] %vm2789, %v2774
        %2801 = vst.msk [vmem:[#allocation3 + $0x58] sm:$0xff] %vm2789, %v2776
        %2802 = vst [vmem:[#allocation2] sm:$0xff] %v784
        %2803 = vst [vmem:[#allocation2 + $0x8] sm:$0xff] %v785
        %2804 = vst [vmem:[#allocation2 + $0x10] sm:$0xff] %v786
        %2805 = vst [vmem:[#allocation2 + $0x18] sm:$0xff] %v787
        %2806 = vst [vmem:[#allocation2 + $0x20] sm:$0xff] %v788
        %2807 = vst [vmem:[#allocation2 + $0x28] sm:$0xff] %v789
        %2808 = vst [vmem:[#allocation2 + $0x30] sm:$0xff] %v790
        %2809 = vst [vmem:[#allocation2 + $0x38] sm:$0xff] %v791
        %2810 = vst [vmem:[#allocation2 + $0x40] sm:$0xff] %v792
        %2811 = vst [vmem:[#allocation2 + $0x48] sm:$0xff] %v793
        %2812 = vst [vmem:[#allocation2 + $0x50] sm:$0xff] %v794
        %2813 = vst [vmem:[#allocation2 + $0x58] sm:$0xff] %v795
        %s2814 = sand.u32 %s267, 1
        %s2815 = scalar_lea.sflag [#allocation10], %s2814
        %s2816 = sand.u32 %s267, 1
        %s2817 = smul.addr %s2816, 16
        %s2818 = scalar_lea.vmem [#allocation9], %s2817
        %s2819 = sand.u32 %s293, 1
        %s2820 = scalar_lea.sflag [#allocation12], %s2819
        %s2821 = sand.u32 %s293, 1
        %s2822 = smul.addr %s2821, 32
        %s2823 = scalar_lea.vmem [#allocation11], %s2822
        // Predicated region
        $region145: #{tpu_custom_call.1} parent=123 // pred_check
          %p2824 = pneg %p277
        $region146: #{tpu_custom_call.1} parent=123 // pred_check_branch
          %2826 = sbr.rel (%p2824) target = $region148
        $region147: #{tpu_custom_call.1} parent=123 // pred_region
          %s2827 = ssub.s32 %s33, 1
          %p2828 = scmp.gt.s32.totalorder %s2827, 0
          %s2829 = scalar_select %p2828, %s2827, 0
          %s2831 = ssub.s32 256, 256
          %2832 = vsyncadd %s2815, %s2831
          %s2833 = smul.addr %s32, 8
          %s2834 = sadd.s32 %s2829, %s2833
          %s2835 = smul.addr %s2834, 64
          %s2836 = scalar_lea.hbm %s9, %s2835
          %s2837 = sshll.u32 %s2818, 4
          %s2838 = int_to_ptr.vmem [resolvable:$true] %s2837
          %2843 = dma.vmem_to_hbm [thread:$0]  %s2838, 256, %s2836, %s2815, 64, 128, 4
        $region148: #{tpu_custom_call.1} parent=123 // pred_fallthru
          _
        // Predicated region
        $region149: #{tpu_custom_call.1} parent=123 // pred_check
          %p2844 = pneg %p303
        $region150: #{tpu_custom_call.1} parent=123 // pred_check_branch
          %2846 = sbr.rel (%p2844) target = $region152
        $region151: #{tpu_custom_call.1} parent=123 // pred_region
          %s2848 = ssub.s32 512, 512
          %2849 = vsyncadd %s2820, %s2848
          %s2850 = smul.addr %s32, 4
          %s2851 = smul.addr %s2850, 128
          %s2852 = scalar_lea.hbm %s10, %s2851
          %s2853 = sshll.u32 %s2823, 4
          %s2854 = int_to_ptr.vmem [resolvable:$true] %s2853
          %2859 = dma.vmem_to_hbm [thread:$0]  %s2854, 512, %s2852, %s2820, 128, 128, 8
        $region152: #{tpu_custom_call.1} parent=123 // pred_fallthru
          _
      $region124: #{tpu_custom_call.1} parent=5 // pred_fallthru
        _
      %p2860 = scmp.le.s32.totalorder 2, %s23
      // Predicated region
      $region153: #{tpu_custom_call.1} parent=5 // pred_check
        %p2861 = pneg %p2860
      $region154: #{tpu_custom_call.1} parent=5 // pred_check_branch
        %2863 = sbr.rel (%p2861) target = $region156
      $region155: #{tpu_custom_call.1} parent=5 // pred_region
        %s2864 = ssub.s32 %s23, 2
        // Predicated region
        $region157: #{tpu_custom_call.1} parent=155 // pred_check
          %p2865 = pneg %p283
        $region158: #{tpu_custom_call.1} parent=155 // pred_check_branch
          %2867 = sbr.rel (%p2865) target = $region160
        $region159: #{tpu_custom_call.1} parent=155 // pred_region
          %s2868 = sand.u32 %s268, 1
          %s2869 = scalar_lea.sflag [#allocation10], %s2868
          %s2870 = sand.u32 %s268, 1
          %s2871 = smul.addr %s2870, 16
          %s2872 = scalar_lea.vmem [#allocation9], %s2871
          %2873 = dma.done %s2869, 256
        $region160: #{tpu_custom_call.1} parent=155 // pred_fallthru
          _
        // Predicated region
        $region161: #{tpu_custom_call.1} parent=155 // pred_check
          %p2874 = pneg %p309
        $region162: #{tpu_custom_call.1} parent=155 // pred_check_branch
          %2876 = sbr.rel (%p2874) target = $region164
        $region163: #{tpu_custom_call.1} parent=155 // pred_region
          %s2877 = sand.u32 %s294, 1
          %s2878 = scalar_lea.sflag [#allocation12], %s2877
          %s2879 = sand.u32 %s294, 1
          %s2880 = smul.addr %s2879, 32
          %s2881 = scalar_lea.vmem [#allocation11], %s2880
          %2882 = dma.done %s2878, 512
        $region164: #{tpu_custom_call.1} parent=155 // pred_fallthru
          _
      $region156: #{tpu_custom_call.1} parent=5 // pred_fallthru
        _
    $region6: #{tpu_custom_call.1} parent=1 // loop_footer
      %s27 = sadd.s32 1, %s23
    $region7: #{tpu_custom_call.1} parent=1 // loop_footer_branch
      %22 = sbr.rel target = $region3
    $region8: #{tpu_custom_call.1} parent=1 // loop_exit
      _
    %2883 = vsyncpa [#allocation10], 1
    %s2884 = scalar_lea.sflag [#allocation10], 1
    %2885 = vsyncpa %s2884, 1
    %2886 = vsyncpa [#allocation12], 1
    %s2887 = scalar_lea.sflag [#allocation12], 1
    %2888 = vsyncpa %s2887, 1

</llo_original>
